<compile_context>
chip_gen: v7x
topology: tpu7x:2x2x1
jax: 0.10.0
libtpu: 0.0.40
codegen_flags: <defaults>
</compile_context>

<pallas_src>
import functools

import jax
import jax.numpy as jnp
from jax import lax
from jax.experimental import pallas as pl
from jax.experimental.pallas import tpu as pltpu

_EPS = 1e-5
_LANES = 128


# ------------------------------ small helpers ------------------------------ #

def _round_up(n, m):
    return ((n + m - 1) // m) * m


def _largest_divisor_leq(n, cap):
    for t in range(min(n, max(cap, 1)), 0, -1):
        if n % t == 0:
            return t
    return 1


def _pad_last(a, cp):
    pad = cp - a.shape[-1]
    if pad == 0:
        return a
    return jnp.pad(a, [(0, 0)] * (a.ndim - 1) + [(0, pad)])


def _ds(start, size, stride):
    # Strided dynamic slice for ref indexing (plain slice when stride == 1).
    return pl.ds(start, size) if stride == 1 else pl.ds(start, size, stride=stride)


def _bn_relu_masked(x, scale, shift, row0, valid_rows, valid_cols):
    """relu(x*scale + shift) on a spatially zero-padded tile.

    Local row i of `x` is global padded row `row0 + i`.  Positions outside the
    valid region (padded rows [1, valid_rows], padded cols [1, valid_cols]) are
    forced back to exactly 0 so the 3x3 conv sees proper zero padding.
    """
    act = jnp.maximum(x.astype(jnp.float32) * scale + shift, 0.0)
    idx_shape = (x.shape[0], x.shape[1], 1)
    r = lax.broadcasted_iota(jnp.int32, idx_shape, 0) + row0
    c = lax.broadcasted_iota(jnp.int32, idx_shape, 1)
    ok = (r >= 1) & (r <= valid_rows) & (c >= 1) & (c <= valid_cols)
    return jnp.where(ok, act, 0.0)


# ----------------------------- Pallas kernels ------------------------------ #

def _conv1_kernel(x_ref, scale_ref, shift_ref, w_ref, o_ref, act_ref, *,
                  stride, tile_h, H, W, Wo):
    """Fused BN1 + ReLU + 3x3/stride conv (9 shifted bf16 MXU matmuls)."""
    r_out0 = pl.program_id(1) * tile_h            # first output row of the tile
    r_in0 = r_out0 * stride                       # first padded input row used
    in_rows = (tile_h - 1) * stride + 3
    # BN+ReLU prologue on the halo'd rows, staged once in VMEM scratch.
    act_ref[...] = _bn_relu_masked(x_ref[pl.ds(r_in0, in_rows), :, :],
                                   scale_ref[...], shift_ref[...], r_in0, H, W)
    cp_out = o_ref.shape[-1]
    acc = jnp.zeros((tile_h * Wo, cp_out), jnp.float32)
    for kh in range(3):
        for kw in range(3):
            win = act_ref[_ds(kh, tile_h, stride), _ds(kw, Wo, stride), :]
            lhs = win.reshape(tile_h * Wo, -1).astype(jnp.bfloat16)
            acc = acc + jnp.dot(lhs, w_ref[kh * 3 + kw],
                                preferred_element_type=jnp.float32)
    o_ref[...] = acc.reshape(tile_h, Wo, cp_out).astype(o_ref.dtype)


def _conv2_kernel(h_ref, x_ref, scale2_ref, shift2_ref, scale1_ref, shift1_ref,
                  w2_ref, wsc_ref, o_ref, act_ref, *, stride, tile_h, Ho, Wo,
                  equal_in_out):
    """Fused BN2 + ReLU + 3x3/stride-1 conv + shortcut (identity or 1x1 conv)."""
    r0 = pl.program_id(1) * tile_h
    in_rows = tile_h + 2
    act_ref[...] = _bn_relu_masked(h_ref[pl.ds(r0, in_rows), :, :],
                                   scale2_ref[...], shift2_ref[...], r0, Ho, Wo)
    cp_out = o_ref.shape[-1]
    if equal_in_out:
        # Identity shortcut: the ORIGINAL (pre-BN) input at the same positions.
        xs = x_ref[pl.ds(r0, tile_h), :, :]
        acc = xs.reshape(tile_h * Wo, cp_out).astype(jnp.float32)
    else:
        # 1x1 strided conv of relu(bn1(x)), fused as one extra MXU matmul.
        xs = x_ref[_ds(r0 * stride, tile_h, stride), _ds(0, Wo, stride), :]
        a1 = jnp.maximum(xs * scale1_ref[...] + shift1_ref[...], 0.0)
        acc = jnp.dot(a1.reshape(tile_h * Wo, -1).astype(jnp.bfloat16),
                      wsc_ref[...], preferred_element_type=jnp.float32)
    for kh in range(3):
        for kw in range(3):
            win = act_ref[pl.ds(kh, tile_h), pl.ds(kw, Wo), :]
            lhs = win.reshape(tile_h * Wo, -1).astype(jnp.bfloat16)
            acc = acc + jnp.dot(lhs, w2_ref[kh * 3 + kw],
                                preferred_element_type=jnp.float32)
    o_ref[...] = acc.reshape(tile_h, Wo, cp_out).astype(o_ref.dtype)


# ----------------------------- pallas_call wrappers ------------------------- #

def _conv1_bn_relu_call(x_sp, scale1, shift1, w1, *, stride, H, W, Ho, Wo, tile_h):
    N, Hp, Wp, cp_in = x_sp.shape
    cp_out = w1.shape[-1]
    in_rows = (tile_h - 1) * stride + 3
    kernel = functools.partial(_conv1_kernel, stride=stride, tile_h=tile_h,
                               H=H, W=W, Wo=Wo)
    flops = 2 * N * Ho * Wo * 9 * cp_in * cp_out
    bytes_accessed = (x_sp.size * 4 + w1.size * 2 + N * Ho * Wo * cp_out * 2
                      + (scale1.size + shift1.size) * 4)
    return pl.pallas_call(
        kernel,
        out_shape=jax.ShapeDtypeStruct((N, Ho, Wo, cp_out), jnp.bfloat16),
        grid=(N, Ho // tile_h),
        in_specs=[
            pl.BlockSpec((None, Hp, Wp, cp_in), lambda b, r: (b, 0, 0, 0)),
            pl.BlockSpec((1, 1, cp_in), lambda b, r: (0, 0, 0)),
            pl.BlockSpec((1, 1, cp_in), lambda b, r: (0, 0, 0)),
            pl.BlockSpec((9, cp_in, cp_out), lambda b, r: (0, 0, 0)),
        ],
        out_specs=pl.BlockSpec((None, tile_h, Wo, cp_out),
                               lambda b, r: (b, r, 0, 0)),
        scratch_shapes=[pltpu.VMEM((in_rows, Wp, cp_in), jnp.float32)],
        compiler_params=pltpu.CompilerParams(
            dimension_semantics=("parallel", "parallel"),
            vmem_limit_bytes=32 * 1024 * 1024),
        cost_estimate=pl.CostEstimate(flops=flops, transcendentals=0,
                                      bytes_accessed=bytes_accessed),
    )(x_sp, scale1, shift1, w1)


def _conv2_bn_relu_shortcut_call(h_sp, x_p, scale2, shift2, scale1, shift1,
                                 w2, wsc, *, stride, Ho, Wo, tile_h,
                                 equal_in_out):
    N = h_sp.shape[0]
    cp_out = w2.shape[-1]
    H, W, cp_in = x_p.shape[1], x_p.shape[2], x_p.shape[3]
    in_rows = tile_h + 2
    kernel = functools.partial(_conv2_kernel, stride=stride, tile_h=tile_h,
                               Ho=Ho, Wo=Wo, equal_in_out=equal_in_out)
    flops = 2 * N * Ho * Wo * (9 * cp_out + cp_in) * cp_out
    bytes_accessed = (h_sp.size * 2 + x_p.size * 4 + w2.size * 2 + wsc.size * 2
                      + N * Ho * Wo * cp_out * 4)
    return pl.pallas_call(
        kernel,
        out_shape=jax.ShapeDtypeStruct((N, Ho, Wo, cp_out), jnp.float32),
        grid=(N, Ho // tile_h),
        in_specs=[
            pl.BlockSpec((None, Ho + 2, Wo + 2, cp_out), lambda b, r: (b, 0, 0, 0)),
            pl.BlockSpec((None, H, W, cp_in), lambda b, r: (b, 0, 0, 0)),
            pl.BlockSpec((1, 1, cp_out), lambda b, r: (0, 0, 0)),
            pl.BlockSpec((1, 1, cp_out), lambda b, r: (0, 0, 0)),
            pl.BlockSpec((1, 1, cp_in), lambda b, r: (0, 0, 0)),
            pl.BlockSpec((1, 1, cp_in), lambda b, r: (0, 0, 0)),
            pl.BlockSpec((9, cp_out, cp_out), lambda b, r: (0, 0, 0)),
            pl.BlockSpec((cp_in, cp_out), lambda b, r: (0, 0)),
        ],
        out_specs=pl.BlockSpec((None, tile_h, Wo, cp_out),
                               lambda b, r: (b, r, 0, 0)),
        scratch_shapes=[pltpu.VMEM((in_rows, Wo + 2, cp_out), jnp.float32)],
        compiler_params=pltpu.CompilerParams(
            dimension_semantics=("parallel", "parallel"),
            vmem_limit_bytes=32 * 1024 * 1024),
        cost_estimate=pl.CostEstimate(flops=flops, transcendentals=0,
                                      bytes_accessed=bytes_accessed),
    )(h_sp, x_p, scale2, shift2, scale1, shift1, w2, wsc)


# --------------------------- weight / param prep ---------------------------- #

def _prep_w3x3(w_oihw, cp_in, cp_out):
    # (Cout, Cin, 3, 3) -> (9, cp_in, cp_out) bf16, index [kh*3+kw, ci, co].
    co, ci = w_oihw.shape[0], w_oihw.shape[1]
    wm = jnp.transpose(w_oihw, (2, 3, 1, 0)).reshape(9, ci, co)
    wm = jnp.pad(wm, ((0, 0), (0, cp_in - ci), (0, cp_out - co)))
    return wm.astype(jnp.bfloat16)


def _prep_w1x1(w_oi11, cp_in, cp_out):
    co, ci = w_oi11.shape[0], w_oi11.shape[1]
    wm = w_oi11.reshape(co, ci).T
    wm = jnp.pad(wm, ((0, cp_in - ci), (0, cp_out - co)))
    return wm.astype(jnp.bfloat16)


# --------------------------------- Forward ---------------------------------- #

def basic_block_forward(x_nchw, params, *, stride, equal_in_out, drop_rate=0.0):
    """Forward of BasicBlock; input/output NCHW (PyTorch convention)."""
    # TODO(synk): F.dropout is training-time stochastic; only drop_rate == 0.0
    # (identity) is supported here.
    assert drop_rate == 0.0
    x = jnp.transpose(x_nchw, (0, 2, 3, 1)).astype(jnp.float32)      # -> NHWC
    N, H, W, Cin = x.shape
    Cout = params["conv1_w"].shape[0]
    if equal_in_out:
        assert stride == 1 and Cin == Cout, \
            "identity shortcut requires stride==1 and Cin==Cout"
    Ho = (H + 2 - 3) // stride + 1
    Wo = (W + 2 - 3) // stride + 1
    cp_in = _round_up(Cin, _LANES)
    cp_out = _round_up(Cout, _LANES)

    # Inference BN folded into per-channel scale/shift (padded channels -> 0).
    scale1 = params["bn1_gamma"] / jnp.sqrt(params["bn1_var"] + _EPS)
    shift1 = params["bn1_beta"] - params["bn1_mean"] * scale1
    scale2 = params["bn2_gamma"] / jnp.sqrt(params["bn2_var"] + _EPS)
    shift2 = params["bn2_beta"] - params["bn2_mean"] * scale2
    scale1p = _pad_last(scale1, cp_in).reshape(1, 1, cp_in).astype(jnp.float32)
    shift1p = _pad_last(shift1, cp_in).reshape(1, 1, cp_in).astype(jnp.float32)
    scale2p = _pad_last(scale2, cp_out).reshape(1, 1, cp_out).astype(jnp.float32)
    shift2p = _pad_last(shift2, cp_out).reshape(1, 1, cp_out).astype(jnp.float32)

    x_p = _pad_last(x, cp_in)                                   # (N,H,W,cp_in)
    x_sp = jnp.pad(x_p, ((0, 0), (1, 1), (1, 1), (0, 0)))       # conv zero pad
    w1 = _prep_w3x3(params["conv1_w"], cp_in, cp_out)
    w2 = _prep_w3x3(params["conv2_w"], cp_out, cp_out)
    if equal_in_out:
        wsc = jnp.zeros((cp_in, cp_out), jnp.bfloat16)          # unused dummy
    else:
        wsc = _prep_w1x1(params["convsc_w"], cp_in, cp_out)

    # Row-tile so the grid has several steps for pipelining (target ~4 spatial
    # steps here; for real WRN shapes this lands at 128-512 output px per step).
    tile_h = _largest_divisor_leq(Ho, max(1, Ho // 4))

    # conv1 fused with BN1+ReLU (bf16 intermediate halves HBM traffic).
    out1 = _conv1_bn_relu_call(x_sp, scale1p, shift1p, w1, stride=stride,
                               H=H, W=W, Ho=Ho, Wo=Wo, tile_h=tile_h)
    h_sp = jnp.pad(out1, ((0, 0), (1, 1), (1, 1), (0, 0)))

    # conv2 fused with BN2+ReLU and the shortcut / residual add.
    out = _conv2_bn_relu_shortcut_call(
        h_sp, x_p, scale2p, shift2p, scale1p, shift1p, w2, wsc,
        stride=stride, Ho=Ho, Wo=Wo, tile_h=tile_h, equal_in_out=equal_in_out)

    out = out[..., :Cout]                                       # strip channel pad
    return jnp.transpose(out, (0, 3, 1, 2))                     # -> NCHW


# ---------------------------- Pure-JAX reference ---------------------------- #

def basic_block_reference(x, params, *, stride, equal_in_out):
    def bn(v, g, b, m, var):
        g = g[None, :, None, None]; b = b[None, :, None, None]
        m = m[None, :, None, None]; var = var[None, :, None, None]
        return (v - m) / jnp.sqrt(var + _EPS) * g + b

    def conv(v, w, s, pad):
        return jax.lax.conv_general_dilated(
            v, w, (s, s), [(pad, pad), (pad, pad)],
            dimension_numbers=("NCHW", "OIHW", "NCHW"))

    a1 = jax.nn.relu(bn(x, params["bn1_gamma"], params["bn1_beta"],
                        params["bn1_mean"], params["bn1_var"]))
    sc = x if equal_in_out else conv(a1, params["convsc_w"], stride, 0)
    o = conv(a1, params["conv1_w"], stride, 1)
    o = jax.nn.relu(bn(o, params["bn2_gamma"], params["bn2_beta"],
                       params["bn2_mean"], params["bn2_var"]))
    o = conv(o, params["conv2_w"], 1, 1)
    return sc + o


# --------------------------------- Main ------------------------------------- #

def _make_params(key, cin, cout):
    ks = jax.random.split(key, 11)
    return {
        "bn1_gamma": jax.random.uniform(ks[0], (cin,), jnp.float32, 0.5, 1.5),
        "bn1_beta":  jax.random.normal(ks[1], (cin,), jnp.float32) * 0.1,
        "bn1_mean":  jax.random.normal(ks[2], (cin,), jnp.float32) * 0.1,
        "bn1_var":   jax.random.uniform(ks[3], (cin,), jnp.float32, 0.5, 1.5),
        "conv1_w":   jax.random.normal(ks[4], (cout, cin, 3, 3), jnp.float32) * 0.1,
        "bn2_gamma": jax.random.uniform(ks[5], (cout,), jnp.float32, 0.5, 1.5),
        "bn2_beta":  jax.random.normal(ks[6], (cout,), jnp.float32) * 0.1,
        "bn2_mean":  jax.random.normal(ks[7], (cout,), jnp.float32) * 0.1,
        "bn2_var":   jax.random.uniform(ks[8], (cout,), jnp.float32, 0.5, 1.5),
        "conv2_w":   jax.random.normal(ks[9], (cout, cout, 3, 3), jnp.float32) * 0.1,
        "convsc_w":  jax.random.normal(ks[10], (cout, cin, 1, 1), jnp.float32) * 0.1,
    }


def _run_case(key, *, n, cin, cout, h, w, stride):
    equal = (cin == cout)
    params = _make_params(key, cin, cout)
    x = jax.random.normal(jax.random.fold_in(key, 7), (n, cin, h, w), jnp.float32)

    fwd = jax.jit(functools.partial(basic_block_forward, stride=stride,
                                    equal_in_out=equal, drop_rate=0.0))
    out = jax.block_until_ready(fwd(x, params))
    ref = jax.block_until_ready(
        basic_block_reference(x, params, stride=stride, equal_in_out=equal))

    assert out.shape == ref.shape, (out.shape, ref.shape)
    max_err = float(jnp.max(jnp.abs(out - ref)))
    # bf16 MXU operands -> tolerance loosened vs an all-f32 reference.
    assert max_err < 5e-2, f"mismatch vs reference: {max_err}"


if __name__ == "__main__":
    key = jax.random.PRNGKey(0)
    # Case 1: in_planes != out_planes, stride=2  -> 1x1-conv shortcut branch.
    _run_case(jax.random.fold_in(key, 0), n=2, cin=4, cout=8, h=16, w=16, stride=2)
    # Case 2: in_planes == out_planes, stride=1  -> identity shortcut branch.
    _run_case(jax.random.fold_in(key, 1), n=2, cin=8, cout=8, h=16, w=16, stride=1)
    print("KERNEL_OK")
</pallas_src>

<mosaic_0001>
module attributes {stable_mosaic.version = 11 : i64} {
  func.func @_conv1_kernel(%arg0: i32, %arg1: i32, %arg2: memref<1x18x18x128xf32, #tpu.memory_space<vmem>>, %arg3: memref<1x1x128xf32, #tpu.memory_space<vmem>>, %arg4: memref<1x1x128xf32, #tpu.memory_space<vmem>>, %arg5: memref<9x128x128xbf16, #tpu.memory_space<vmem>>, %arg6: memref<1x2x8x128xbf16, #tpu.memory_space<vmem>>, %arg7: memref<5x18x128xf32, #tpu.memory_space<vmem>>) attributes {dimension_semantics = [#tpu.dimension_semantics<parallel>, #tpu.dimension_semantics<parallel>], iteration_bounds = array<i64: 2, 4>, scalar_prefetch = 0 : i64, scratch_operands = 1 : i64, tpu.core_type = #tpu.core_type<tc>, window_params = [{transform_indices = @transform_0, window_bounds = array<i64: 1, 18, 18, 128>}, {pipeline_mode = #tpu.pipeline_mode<synchronous>, transform_indices = @transform_1, window_bounds = array<i64: 1, 1, 128>}, {pipeline_mode = #tpu.pipeline_mode<synchronous>, transform_indices = @transform_2, window_bounds = array<i64: 1, 1, 128>}, {pipeline_mode = #tpu.pipeline_mode<synchronous>, transform_indices = @transform_3, window_bounds = array<i64: 9, 128, 128>}, {transform_indices = @transform_4, window_bounds = array<i64: 1, 2, 8, 128>}]} {
    %c2_i32 = arith.constant 2 : i32
    %0 = arith.muli %arg1, %c2_i32 : i32
    %c2_i32_0 = arith.constant 2 : i32
    %1 = arith.muli %0, %c2_i32_0 : i32
    %c0 = arith.constant 0 : index
    %2 = arith.index_cast %1 : i32 to index
    %c0_1 = arith.constant 0 : index
    %c0_2 = arith.constant 0 : index
    %3 = vector.load %arg2[%c0, %2, %c0_1, %c0_2] : memref<1x18x18x128xf32, #tpu.memory_space<vmem>>, vector<1x5x18x128xf32>
    %4 = vector.shape_cast %3 : vector<1x5x18x128xf32> to vector<5x18x128xf32>
    %c0_3 = arith.constant 0 : index
    %c0_4 = arith.constant 0 : index
    %c0_5 = arith.constant 0 : index
    %5 = vector.load %arg3[%c0_3, %c0_4, %c0_5] : memref<1x1x128xf32, #tpu.memory_space<vmem>>, vector<1x1x128xf32>
    %c0_6 = arith.constant 0 : index
    %c0_7 = arith.constant 0 : index
    %c0_8 = arith.constant 0 : index
    %6 = vector.load %arg4[%c0_6, %c0_7, %c0_8] : memref<1x1x128xf32, #tpu.memory_space<vmem>>, vector<1x1x128xf32>
    %7 = vector.broadcast %5 : vector<1x1x128xf32> to vector<5x18x128xf32>
    %8 = arith.mulf %4, %7 : vector<5x18x128xf32>
    %9 = vector.broadcast %6 : vector<1x1x128xf32> to vector<5x18x128xf32>
    %10 = arith.addf %8, %9 : vector<5x18x128xf32>
    %cst = arith.constant 0.000000e+00 : f32
    %11 = vector.broadcast %cst : f32 to vector<5x18x128xf32>
    %12 = arith.maximumf %10, %11 : vector<5x18x128xf32>
    %13 = tpu.iota {dimensions = array<i32: 0>} : vector<5x18x1xi32>
    %14 = vector.broadcast %1 : i32 to vector<5x18x1xi32>
    %15 = arith.addi %13, %14 : vector<5x18x1xi32>
    %16 = tpu.iota {dimensions = array<i32: 1>} : vector<5x18x1xi32>
    %c1_i32 = arith.constant 1 : i32
    %17 = vector.broadcast %c1_i32 : i32 to vector<5x18x1xi32>
    %18 = arith.cmpi sge, %15, %17 : vector<5x18x1xi32>
    %c16_i32 = arith.constant 16 : i32
    %19 = vector.broadcast %c16_i32 : i32 to vector<5x18x1xi32>
    %20 = arith.cmpi sle, %15, %19 : vector<5x18x1xi32>
    %21 = arith.andi %18, %20 : vector<5x18x1xi1>
    %c1_i32_9 = arith.constant 1 : i32
    %22 = vector.broadcast %c1_i32_9 : i32 to vector<5x18x1xi32>
    %23 = arith.cmpi sge, %16, %22 : vector<5x18x1xi32>
    %24 = arith.andi %21, %23 : vector<5x18x1xi1>
    %c16_i32_10 = arith.constant 16 : i32
    %25 = vector.broadcast %c16_i32_10 : i32 to vector<5x18x1xi32>
    %26 = arith.cmpi sle, %16, %25 : vector<5x18x1xi32>
    %27 = arith.andi %24, %26 : vector<5x18x1xi1>
    %cst_11 = arith.constant 0.000000e+00 : f32
    %28 = vector.shape_cast %27 : vector<5x18x1xi1> to vector<5x18x1xi1>
    %29 = vector.broadcast %28 : vector<5x18x1xi1> to vector<5x18x128xi1>
    %30 = vector.broadcast %cst_11 : f32 to vector<5x18x128xf32>
    %31 = arith.select %29, %12, %30 : vector<5x18x128xi1>, vector<5x18x128xf32>
    %c0_12 = arith.constant 0 : index
    %c0_13 = arith.constant 0 : index
    %c0_14 = arith.constant 0 : index
    %32 = vector.load %arg7[%c0_12, %c0_13, %c0_14] : memref<5x18x128xf32, #tpu.memory_space<vmem>>, vector<5x18x128xf32>
    tpu.vector_store %arg7[%c0_12, %c0_13, %c0_14], %31 {strides = array<i32>} : memref<5x18x128xf32, #tpu.memory_space<vmem>>, vector<5x18x128xf32>,
    %cst_15 = arith.constant 0.000000e+00 : f32
    %33 = vector.broadcast %cst_15 : f32 to vector<16x128xf32>
    %c0_16 = arith.constant 0 : index
    %c0_17 = arith.constant 0 : index
    %c0_18 = arith.constant 0 : index
    %34 = tpu.strided_load %arg7[%c0_16, %c0_17, %c0_18] {strides = array<i32: 2, 2, 1>} : memref<5x18x128xf32, #tpu.memory_space<vmem>>, vector<2x8x128xf32>
    %35 = vector.shape_cast %34 : vector<2x8x128xf32> to vector<16x128xf32>
    %36 = arith.truncf %35 : vector<16x128xf32> to vector<16x128xbf16>
    %c0_19 = arith.constant 0 : index
    %c0_20 = arith.constant 0 : index
    %c0_21 = arith.constant 0 : index
    %37 = vector.load %arg5[%c0_19, %c0_20, %c0_21] : memref<9x128x128xbf16, #tpu.memory_space<vmem>>, vector<1x128x128xbf16>
    %38 = vector.shape_cast %37 : vector<1x128x128xbf16> to vector<128x128xbf16>
    %cst_22 = arith.constant dense<0.000000e+00> : vector<16x128xf32>
    %39 = tpu.matmul %36, %38, %cst_22 {dimension_numbers = #tpu.dot_dimension_numbers<[1], [0], [0], [1], [0, 0, 1, 1], [], []>} : vector<16x128xbf16>, vector<128x128xbf16>, vector<16x128xf32> -> vector<16x128xf32>
    %40 = arith.addf %33, %39 : vector<16x128xf32>
    %c0_23 = arith.constant 0 : index
    %c1 = arith.constant 1 : index
    %c0_24 = arith.constant 0 : index
    %41 = tpu.strided_load %arg7[%c0_23, %c1, %c0_24] {strides = array<i32: 2, 2, 1>} : memref<5x18x128xf32, #tpu.memory_space<vmem>>, vector<2x8x128xf32>
    %42 = vector.shape_cast %41 : vector<2x8x128xf32> to vector<16x128xf32>
    %43 = arith.truncf %42 : vector<16x128xf32> to vector<16x128xbf16>
    %c1_25 = arith.constant 1 : index
    %c0_26 = arith.constant 0 : index
    %c0_27 = arith.constant 0 : index
    %44 = vector.load %arg5[%c1_25, %c0_26, %c0_27] : memref<9x128x128xbf16, #tpu.memory_space<vmem>>, vector<1x128x128xbf16>
    %45 = vector.shape_cast %44 : vector<1x128x128xbf16> to vector<128x128xbf16>
    %cst_28 = arith.constant dense<0.000000e+00> : vector<16x128xf32>
    %46 = tpu.matmul %43, %45, %cst_28 {dimension_numbers = #tpu.dot_dimension_numbers<[1], [0], [0], [1], [0, 0, 1, 1], [], []>} : vector<16x128xbf16>, vector<128x128xbf16>, vector<16x128xf32> -> vector<16x128xf32>
    %47 = arith.addf %40, %46 : vector<16x128xf32>
    %c0_29 = arith.constant 0 : index
    %c2 = arith.constant 2 : index
    %c0_30 = arith.constant 0 : index
    %48 = tpu.strided_load %arg7[%c0_29, %c2, %c0_30] {strides = array<i32: 2, 2, 1>} : memref<5x18x128xf32, #tpu.memory_space<vmem>>, vector<2x8x128xf32>
    %49 = vector.shape_cast %48 : vector<2x8x128xf32> to vector<16x128xf32>
    %50 = arith.truncf %49 : vector<16x128xf32> to vector<16x128xbf16>
    %c2_31 = arith.constant 2 : index
    %c0_32 = arith.constant 0 : index
    %c0_33 = arith.constant 0 : index
    %51 = vector.load %arg5[%c2_31, %c0_32, %c0_33] : memref<9x128x128xbf16, #tpu.memory_space<vmem>>, vector<1x128x128xbf16>
    %52 = vector.shape_cast %51 : vector<1x128x128xbf16> to vector<128x128xbf16>
    %cst_34 = arith.constant dense<0.000000e+00> : vector<16x128xf32>
    %53 = tpu.matmul %50, %52, %cst_34 {dimension_numbers = #tpu.dot_dimension_numbers<[1], [0], [0], [1], [0, 0, 1, 1], [], []>} : vector<16x128xbf16>, vector<128x128xbf16>, vector<16x128xf32> -> vector<16x128xf32>
    %54 = arith.addf %47, %53 : vector<16x128xf32>
    %c1_35 = arith.constant 1 : index
    %c0_36 = arith.constant 0 : index
    %c0_37 = arith.constant 0 : index
    %55 = tpu.strided_load %arg7[%c1_35, %c0_36, %c0_37] {strides = array<i32: 2, 2, 1>} : memref<5x18x128xf32, #tpu.memory_space<vmem>>, vector<2x8x128xf32>
    %56 = vector.shape_cast %55 : vector<2x8x128xf32> to vector<16x128xf32>
    %57 = arith.truncf %56 : vector<16x128xf32> to vector<16x128xbf16>
    %c3 = arith.constant 3 : index
    %c0_38 = arith.constant 0 : index
    %c0_39 = arith.constant 0 : index
    %58 = vector.load %arg5[%c3, %c0_38, %c0_39] : memref<9x128x128xbf16, #tpu.memory_space<vmem>>, vector<1x128x128xbf16>
    %59 = vector.shape_cast %58 : vector<1x128x128xbf16> to vector<128x128xbf16>
    %cst_40 = arith.constant dense<0.000000e+00> : vector<16x128xf32>
    %60 = tpu.matmul %57, %59, %cst_40 {dimension_numbers = #tpu.dot_dimension_numbers<[1], [0], [0], [1], [0, 0, 1, 1], [], []>} : vector<16x128xbf16>, vector<128x128xbf16>, vector<16x128xf32> -> vector<16x128xf32>
    %61 = arith.addf %54, %60 : vector<16x128xf32>
    %c1_41 = arith.constant 1 : index
    %c1_42 = arith.constant 1 : index
    %c0_43 = arith.constant 0 : index
    %62 = tpu.strided_load %arg7[%c1_41, %c1_42, %c0_43] {strides = array<i32: 2, 2, 1>} : memref<5x18x128xf32, #tpu.memory_space<vmem>>, vector<2x8x128xf32>
    %63 = vector.shape_cast %62 : vector<2x8x128xf32> to vector<16x128xf32>
    %64 = arith.truncf %63 : vector<16x128xf32> to vector<16x128xbf16>
    %c4 = arith.constant 4 : index
    %c0_44 = arith.constant 0 : index
    %c0_45 = arith.constant 0 : index
    %65 = vector.load %arg5[%c4, %c0_44, %c0_45] : memref<9x128x128xbf16, #tpu.memory_space<vmem>>, vector<1x128x128xbf16>
    %66 = vector.shape_cast %65 : vector<1x128x128xbf16> to vector<128x128xbf16>
    %cst_46 = arith.constant dense<0.000000e+00> : vector<16x128xf32>
    %67 = tpu.matmul %64, %66, %cst_46 {dimension_numbers = #tpu.dot_dimension_numbers<[1], [0], [0], [1], [0, 0, 1, 1], [], []>} : vector<16x128xbf16>, vector<128x128xbf16>, vector<16x128xf32> -> vector<16x128xf32>
    %68 = arith.addf %61, %67 : vector<16x128xf32>
    %c1_47 = arith.constant 1 : index
    %c2_48 = arith.constant 2 : index
    %c0_49 = arith.constant 0 : index
    %69 = tpu.strided_load %arg7[%c1_47, %c2_48, %c0_49] {strides = array<i32: 2, 2, 1>} : memref<5x18x128xf32, #tpu.memory_space<vmem>>, vector<2x8x128xf32>
    %70 = vector.shape_cast %69 : vector<2x8x128xf32> to vector<16x128xf32>
    %71 = arith.truncf %70 : vector<16x128xf32> to vector<16x128xbf16>
    %c5 = arith.constant 5 : index
    %c0_50 = arith.constant 0 : index
    %c0_51 = arith.constant 0 : index
    %72 = vector.load %arg5[%c5, %c0_50, %c0_51] : memref<9x128x128xbf16, #tpu.memory_space<vmem>>, vector<1x128x128xbf16>
    %73 = vector.shape_cast %72 : vector<1x128x128xbf16> to vector<128x128xbf16>
    %cst_52 = arith.constant dense<0.000000e+00> : vector<16x128xf32>
    %74 = tpu.matmul %71, %73, %cst_52 {dimension_numbers = #tpu.dot_dimension_numbers<[1], [0], [0], [1], [0, 0, 1, 1], [], []>} : vector<16x128xbf16>, vector<128x128xbf16>, vector<16x128xf32> -> vector<16x128xf32>
    %75 = arith.addf %68, %74 : vector<16x128xf32>
    %c2_53 = arith.constant 2 : index
    %c0_54 = arith.constant 0 : index
    %c0_55 = arith.constant 0 : index
    %76 = tpu.strided_load %arg7[%c2_53, %c0_54, %c0_55] {strides = array<i32: 2, 2, 1>} : memref<5x18x128xf32, #tpu.memory_space<vmem>>, vector<2x8x128xf32>
    %77 = vector.shape_cast %76 : vector<2x8x128xf32> to vector<16x128xf32>
    %78 = arith.truncf %77 : vector<16x128xf32> to vector<16x128xbf16>
    %c6 = arith.constant 6 : index
    %c0_56 = arith.constant 0 : index
    %c0_57 = arith.constant 0 : index
    %79 = vector.load %arg5[%c6, %c0_56, %c0_57] : memref<9x128x128xbf16, #tpu.memory_space<vmem>>, vector<1x128x128xbf16>
    %80 = vector.shape_cast %79 : vector<1x128x128xbf16> to vector<128x128xbf16>
    %cst_58 = arith.constant dense<0.000000e+00> : vector<16x128xf32>
    %81 = tpu.matmul %78, %80, %cst_58 {dimension_numbers = #tpu.dot_dimension_numbers<[1], [0], [0], [1], [0, 0, 1, 1], [], []>} : vector<16x128xbf16>, vector<128x128xbf16>, vector<16x128xf32> -> vector<16x128xf32>
    %82 = arith.addf %75, %81 : vector<16x128xf32>
    %c2_59 = arith.constant 2 : index
    %c1_60 = arith.constant 1 : index
    %c0_61 = arith.constant 0 : index
    %83 = tpu.strided_load %arg7[%c2_59, %c1_60, %c0_61] {strides = array<i32: 2, 2, 1>} : memref<5x18x128xf32, #tpu.memory_space<vmem>>, vector<2x8x128xf32>
    %84 = vector.shape_cast %83 : vector<2x8x128xf32> to vector<16x128xf32>
    %85 = arith.truncf %84 : vector<16x128xf32> to vector<16x128xbf16>
    %c7 = arith.constant 7 : index
    %c0_62 = arith.constant 0 : index
    %c0_63 = arith.constant 0 : index
    %86 = vector.load %arg5[%c7, %c0_62, %c0_63] : memref<9x128x128xbf16, #tpu.memory_space<vmem>>, vector<1x128x128xbf16>
    %87 = vector.shape_cast %86 : vector<1x128x128xbf16> to vector<128x128xbf16>
    %cst_64 = arith.constant dense<0.000000e+00> : vector<16x128xf32>
    %88 = tpu.matmul %85, %87, %cst_64 {dimension_numbers = #tpu.dot_dimension_numbers<[1], [0], [0], [1], [0, 0, 1, 1], [], []>} : vector<16x128xbf16>, vector<128x128xbf16>, vector<16x128xf32> -> vector<16x128xf32>
    %89 = arith.addf %82, %88 : vector<16x128xf32>
    %c2_65 = arith.constant 2 : index
    %c2_66 = arith.constant 2 : index
    %c0_67 = arith.constant 0 : index
    %90 = tpu.strided_load %arg7[%c2_65, %c2_66, %c0_67] {strides = array<i32: 2, 2, 1>} : memref<5x18x128xf32, #tpu.memory_space<vmem>>, vector<2x8x128xf32>
    %91 = vector.shape_cast %90 : vector<2x8x128xf32> to vector<16x128xf32>
    %92 = arith.truncf %91 : vector<16x128xf32> to vector<16x128xbf16>
    %c8 = arith.constant 8 : index
    %c0_68 = arith.constant 0 : index
    %c0_69 = arith.constant 0 : index
    %93 = vector.load %arg5[%c8, %c0_68, %c0_69] : memref<9x128x128xbf16, #tpu.memory_space<vmem>>, vector<1x128x128xbf16>
    %94 = vector.shape_cast %93 : vector<1x128x128xbf16> to vector<128x128xbf16>
    %cst_70 = arith.constant dense<0.000000e+00> : vector<16x128xf32>
    %95 = tpu.matmul %92, %94, %cst_70 {dimension_numbers = #tpu.dot_dimension_numbers<[1], [0], [0], [1], [0, 0, 1, 1], [], []>} : vector<16x128xbf16>, vector<128x128xbf16>, vector<16x128xf32> -> vector<16x128xf32>
    %96 = arith.addf %89, %95 : vector<16x128xf32>
    %97 = vector.shape_cast %96 : vector<16x128xf32> to vector<2x8x128xf32>
    %98 = arith.truncf %97 : vector<2x8x128xf32> to vector<2x8x128xbf16>
    %c0_71 = arith.constant 0 : index
    %c0_72 = arith.constant 0 : index
    %c0_73 = arith.constant 0 : index
    %c0_74 = arith.constant 0 : index
    %99 = vector.load %arg6[%c0_71, %c0_72, %c0_73, %c0_74] : memref<1x2x8x128xbf16, #tpu.memory_space<vmem>>, vector<1x2x8x128xbf16>
    %100 = vector.shape_cast %99 : vector<1x2x8x128xbf16> to vector<2x8x128xbf16>
    %101 = vector.shape_cast %98 : vector<2x8x128xbf16> to vector<1x2x8x128xbf16>
    tpu.vector_store %arg6[%c0_71, %c0_72, %c0_73, %c0_74], %101 {strides = array<i32>} : memref<1x2x8x128xbf16, #tpu.memory_space<vmem>>, vector<1x2x8x128xbf16>,
    return
  }
  func.func @transform_0(%arg0: i32, %arg1: i32) -> (i32, i32, i32, i32) {
    %c0_i32 = arith.constant 0 : i32
    %c0_i32_0 = arith.constant 0 : i32
    %c0_i32_1 = arith.constant 0 : i32
    %c0_i32_2 = arith.constant 0 : i32
    return %arg0, %c0_i32, %c0_i32_0, %c0_i32_1 : i32, i32, i32, i32
  }
  func.func @transform_1(%arg0: i32, %arg1: i32) -> (i32, i32, i32) {
    %c0_i32 = arith.constant 0 : i32
    %c0_i32_0 = arith.constant 0 : i32
    %c0_i32_1 = arith.constant 0 : i32
    %c0_i32_2 = arith.constant 0 : i32
    return %c0_i32, %c0_i32_0, %c0_i32_1 : i32, i32, i32
  }
  func.func @transform_2(%arg0: i32, %arg1: i32) -> (i32, i32, i32) {
    %c0_i32 = arith.constant 0 : i32
    %c0_i32_0 = arith.constant 0 : i32
    %c0_i32_1 = arith.constant 0 : i32
    %c0_i32_2 = arith.constant 0 : i32
    return %c0_i32, %c0_i32_0, %c0_i32_1 : i32, i32, i32
  }
  func.func @transform_3(%arg0: i32, %arg1: i32) -> (i32, i32, i32) {
    %c0_i32 = arith.constant 0 : i32
    %c0_i32_0 = arith.constant 0 : i32
    %c0_i32_1 = arith.constant 0 : i32
    %c0_i32_2 = arith.constant 0 : i32
    return %c0_i32, %c0_i32_0, %c0_i32_1 : i32, i32, i32
  }
  func.func @transform_4(%arg0: i32, %arg1: i32) -> (i32, i32, i32, i32) {
    %c0_i32 = arith.constant 0 : i32
    %c0_i32_0 = arith.constant 0 : i32
    %c0_i32_1 = arith.constant 0 : i32
    return %arg0, %arg1, %c0_i32, %c0_i32_0 : i32, i32, i32, i32
  }
}

module attributes {stable_mosaic.version = 11 : i64} {
  func.func @_conv2_kernel(%arg0: i32, %arg1: i32, %arg2: memref<1x10x10x128xbf16, #tpu.memory_space<vmem>>, %arg3: memref<1x16x16x128xf32, #tpu.memory_space<vmem>>, %arg4: memref<1x1x128xf32, #tpu.memory_space<vmem>>, %arg5: memref<1x1x128xf32, #tpu.memory_space<vmem>>, %arg6: memref<1x1x128xf32, #tpu.memory_space<vmem>>, %arg7: memref<1x1x128xf32, #tpu.memory_space<vmem>>, %arg8: memref<9x128x128xbf16, #tpu.memory_space<vmem>>, %arg9: memref<128x128xbf16, #tpu.memory_space<vmem>>, %arg10: memref<1x2x8x128xf32, #tpu.memory_space<vmem>>, %arg11: memref<4x10x128xf32, #tpu.memory_space<vmem>>) attributes {dimension_semantics = [#tpu.dimension_semantics<parallel>, #tpu.dimension_semantics<parallel>], iteration_bounds = array<i64: 2, 4>, scalar_prefetch = 0 : i64, scratch_operands = 1 : i64, tpu.core_type = #tpu.core_type<tc>, window_params = [{transform_indices = @transform_0, window_bounds = array<i64: 1, 10, 10, 128>}, {transform_indices = @transform_1, window_bounds = array<i64: 1, 16, 16, 128>}, {pipeline_mode = #tpu.pipeline_mode<synchronous>, transform_indices = @transform_2, window_bounds = array<i64: 1, 1, 128>}, {pipeline_mode = #tpu.pipeline_mode<synchronous>, transform_indices = @transform_3, window_bounds = array<i64: 1, 1, 128>}, {pipeline_mode = #tpu.pipeline_mode<synchronous>, transform_indices = @transform_4, window_bounds = array<i64: 1, 1, 128>}, {pipeline_mode = #tpu.pipeline_mode<synchronous>, transform_indices = @transform_5, window_bounds = array<i64: 1, 1, 128>}, {pipeline_mode = #tpu.pipeline_mode<synchronous>, transform_indices = @transform_6, window_bounds = array<i64: 9, 128, 128>}, {pipeline_mode = #tpu.pipeline_mode<synchronous>, transform_indices = @transform_7, window_bounds = array<i64: 128, 128>}, {transform_indices = @transform_8, window_bounds = array<i64: 1, 2, 8, 128>}]} {
    %c2_i32 = arith.constant 2 : i32
    %0 = arith.muli %arg1, %c2_i32 : i32
    %c0 = arith.constant 0 : index
    %1 = arith.index_cast %0 : i32 to index
    %c0_0 = arith.constant 0 : index
    %c0_1 = arith.constant 0 : index
    %2 = vector.load %arg2[%c0, %1, %c0_0, %c0_1] : memref<1x10x10x128xbf16, #tpu.memory_space<vmem>>, vector<1x4x10x128xbf16>
    %3 = vector.shape_cast %2 : vector<1x4x10x128xbf16> to vector<4x10x128xbf16>
    %c0_2 = arith.constant 0 : index
    %c0_3 = arith.constant 0 : index
    %c0_4 = arith.constant 0 : index
    %4 = vector.load %arg4[%c0_2, %c0_3, %c0_4] : memref<1x1x128xf32, #tpu.memory_space<vmem>>, vector<1x1x128xf32>
    %c0_5 = arith.constant 0 : index
    %c0_6 = arith.constant 0 : index
    %c0_7 = arith.constant 0 : index
    %5 = vector.load %arg5[%c0_5, %c0_6, %c0_7] : memref<1x1x128xf32, #tpu.memory_space<vmem>>, vector<1x1x128xf32>
    %6 = arith.extf %3 : vector<4x10x128xbf16> to vector<4x10x128xf32>
    %7 = vector.broadcast %4 : vector<1x1x128xf32> to vector<4x10x128xf32>
    %8 = arith.mulf %6, %7 : vector<4x10x128xf32>
    %9 = vector.broadcast %5 : vector<1x1x128xf32> to vector<4x10x128xf32>
    %10 = arith.addf %8, %9 : vector<4x10x128xf32>
    %cst = arith.constant 0.000000e+00 : f32
    %11 = vector.broadcast %cst : f32 to vector<4x10x128xf32>
    %12 = arith.maximumf %10, %11 : vector<4x10x128xf32>
    %13 = tpu.iota {dimensions = array<i32: 0>} : vector<4x10x1xi32>
    %14 = vector.broadcast %0 : i32 to vector<4x10x1xi32>
    %15 = arith.addi %13, %14 : vector<4x10x1xi32>
    %16 = tpu.iota {dimensions = array<i32: 1>} : vector<4x10x1xi32>
    %c1_i32 = arith.constant 1 : i32
    %17 = vector.broadcast %c1_i32 : i32 to vector<4x10x1xi32>
    %18 = arith.cmpi sge, %15, %17 : vector<4x10x1xi32>
    %c8_i32 = arith.constant 8 : i32
    %19 = vector.broadcast %c8_i32 : i32 to vector<4x10x1xi32>
    %20 = arith.cmpi sle, %15, %19 : vector<4x10x1xi32>
    %21 = arith.andi %18, %20 : vector<4x10x1xi1>
    %c1_i32_8 = arith.constant 1 : i32
    %22 = vector.broadcast %c1_i32_8 : i32 to vector<4x10x1xi32>
    %23 = arith.cmpi sge, %16, %22 : vector<4x10x1xi32>
    %24 = arith.andi %21, %23 : vector<4x10x1xi1>
    %c8_i32_9 = arith.constant 8 : i32
    %25 = vector.broadcast %c8_i32_9 : i32 to vector<4x10x1xi32>
    %26 = arith.cmpi sle, %16, %25 : vector<4x10x1xi32>
    %27 = arith.andi %24, %26 : vector<4x10x1xi1>
    %cst_10 = arith.constant 0.000000e+00 : f32
    %28 = vector.shape_cast %27 : vector<4x10x1xi1> to vector<4x10x1xi1>
    %29 = vector.broadcast %28 : vector<4x10x1xi1> to vector<4x10x128xi1>
    %30 = vector.broadcast %cst_10 : f32 to vector<4x10x128xf32>
    %31 = arith.select %29, %12, %30 : vector<4x10x128xi1>, vector<4x10x128xf32>
    %c0_11 = arith.constant 0 : index
    %c0_12 = arith.constant 0 : index
    %c0_13 = arith.constant 0 : index
    %32 = vector.load %arg11[%c0_11, %c0_12, %c0_13] : memref<4x10x128xf32, #tpu.memory_space<vmem>>, vector<4x10x128xf32>
    tpu.vector_store %arg11[%c0_11, %c0_12, %c0_13], %31 {strides = array<i32>} : memref<4x10x128xf32, #tpu.memory_space<vmem>>, vector<4x10x128xf32>,
    %c2_i32_14 = arith.constant 2 : i32
    %33 = arith.muli %0, %c2_i32_14 : i32
    %c0_15 = arith.constant 0 : index
    %34 = arith.index_cast %33 : i32 to index
    %c0_16 = arith.constant 0 : index
    %c0_17 = arith.constant 0 : index
    %35 = tpu.strided_load %arg3[%c0_15, %34, %c0_16, %c0_17] {strides = array<i32: 1, 2, 2, 1>} : memref<1x16x16x128xf32, #tpu.memory_space<vmem>>, vector<1x2x8x128xf32>
    %36 = vector.shape_cast %35 : vector<1x2x8x128xf32> to vector<2x8x128xf32>
    %c0_18 = arith.constant 0 : index
    %c0_19 = arith.constant 0 : index
    %c0_20 = arith.constant 0 : index
    %37 = vector.load %arg6[%c0_18, %c0_19, %c0_20] : memref<1x1x128xf32, #tpu.memory_space<vmem>>, vector<1x1x128xf32>
    %38 = vector.broadcast %37 : vector<1x1x128xf32> to vector<2x8x128xf32>
    %39 = arith.mulf %36, %38 : vector<2x8x128xf32>
    %c0_21 = arith.constant 0 : index
    %c0_22 = arith.constant 0 : index
    %c0_23 = arith.constant 0 : index
    %40 = vector.load %arg7[%c0_21, %c0_22, %c0_23] : memref<1x1x128xf32, #tpu.memory_space<vmem>>, vector<1x1x128xf32>
    %41 = vector.broadcast %40 : vector<1x1x128xf32> to vector<2x8x128xf32>
    %42 = arith.addf %39, %41 : vector<2x8x128xf32>
    %cst_24 = arith.constant 0.000000e+00 : f32
    %43 = vector.broadcast %cst_24 : f32 to vector<2x8x128xf32>
    %44 = arith.maximumf %42, %43 : vector<2x8x128xf32>
    %45 = vector.shape_cast %44 : vector<2x8x128xf32> to vector<16x128xf32>
    %46 = arith.truncf %45 : vector<16x128xf32> to vector<16x128xbf16>
    %c0_25 = arith.constant 0 : index
    %c0_26 = arith.constant 0 : index
    %47 = vector.load %arg9[%c0_25, %c0_26] : memref<128x128xbf16, #tpu.memory_space<vmem>>, vector<128x128xbf16>
    %cst_27 = arith.constant dense<0.000000e+00> : vector<16x128xf32>
    %48 = tpu.matmul %46, %47, %cst_27 {dimension_numbers = #tpu.dot_dimension_numbers<[1], [0], [0], [1], [0, 0, 1, 1], [], []>} : vector<16x128xbf16>, vector<128x128xbf16>, vector<16x128xf32> -> vector<16x128xf32>
    %c0_28 = arith.constant 0 : index
    %c0_29 = arith.constant 0 : index
    %c0_30 = arith.constant 0 : index
    %49 = vector.load %arg11[%c0_28, %c0_29, %c0_30] : memref<4x10x128xf32, #tpu.memory_space<vmem>>, vector<2x8x128xf32>
    %50 = vector.shape_cast %49 : vector<2x8x128xf32> to vector<16x128xf32>
    %51 = arith.truncf %50 : vector<16x128xf32> to vector<16x128xbf16>
    %c0_31 = arith.constant 0 : index
    %c0_32 = arith.constant 0 : index
    %c0_33 = arith.constant 0 : index
    %52 = vector.load %arg8[%c0_31, %c0_32, %c0_33] : memref<9x128x128xbf16, #tpu.memory_space<vmem>>, vector<1x128x128xbf16>
    %53 = vector.shape_cast %52 : vector<1x128x128xbf16> to vector<128x128xbf16>
    %cst_34 = arith.constant dense<0.000000e+00> : vector<16x128xf32>
    %54 = tpu.matmul %51, %53, %cst_34 {dimension_numbers = #tpu.dot_dimension_numbers<[1], [0], [0], [1], [0, 0, 1, 1], [], []>} : vector<16x128xbf16>, vector<128x128xbf16>, vector<16x128xf32> -> vector<16x128xf32>
    %55 = arith.addf %48, %54 : vector<16x128xf32>
    %c0_35 = arith.constant 0 : index
    %c1 = arith.constant 1 : index
    %c0_36 = arith.constant 0 : index
    %56 = vector.load %arg11[%c0_35, %c1, %c0_36] : memref<4x10x128xf32, #tpu.memory_space<vmem>>, vector<2x8x128xf32>
    %57 = vector.shape_cast %56 : vector<2x8x128xf32> to vector<16x128xf32>
    %58 = arith.truncf %57 : vector<16x128xf32> to vector<16x128xbf16>
    %c1_37 = arith.constant 1 : index
    %c0_38 = arith.constant 0 : index
    %c0_39 = arith.constant 0 : index
    %59 = vector.load %arg8[%c1_37, %c0_38, %c0_39] : memref<9x128x128xbf16, #tpu.memory_space<vmem>>, vector<1x128x128xbf16>
    %60 = vector.shape_cast %59 : vector<1x128x128xbf16> to vector<128x128xbf16>
    %cst_40 = arith.constant dense<0.000000e+00> : vector<16x128xf32>
    %61 = tpu.matmul %58, %60, %cst_40 {dimension_numbers = #tpu.dot_dimension_numbers<[1], [0], [0], [1], [0, 0, 1, 1], [], []>} : vector<16x128xbf16>, vector<128x128xbf16>, vector<16x128xf32> -> vector<16x128xf32>
    %62 = arith.addf %55, %61 : vector<16x128xf32>
    %c0_41 = arith.constant 0 : index
    %c2 = arith.constant 2 : index
    %c0_42 = arith.constant 0 : index
    %63 = vector.load %arg11[%c0_41, %c2, %c0_42] : memref<4x10x128xf32, #tpu.memory_space<vmem>>, vector<2x8x128xf32>
    %64 = vector.shape_cast %63 : vector<2x8x128xf32> to vector<16x128xf32>
    %65 = arith.truncf %64 : vector<16x128xf32> to vector<16x128xbf16>
    %c2_43 = arith.constant 2 : index
    %c0_44 = arith.constant 0 : index
    %c0_45 = arith.constant 0 : index
    %66 = vector.load %arg8[%c2_43, %c0_44, %c0_45] : memref<9x128x128xbf16, #tpu.memory_space<vmem>>, vector<1x128x128xbf16>
    %67 = vector.shape_cast %66 : vector<1x128x128xbf16> to vector<128x128xbf16>
    %cst_46 = arith.constant dense<0.000000e+00> : vector<16x128xf32>
    %68 = tpu.matmul %65, %67, %cst_46 {dimension_numbers = #tpu.dot_dimension_numbers<[1], [0], [0], [1], [0, 0, 1, 1], [], []>} : vector<16x128xbf16>, vector<128x128xbf16>, vector<16x128xf32> -> vector<16x128xf32>
    %69 = arith.addf %62, %68 : vector<16x128xf32>
    %c1_47 = arith.constant 1 : index
    %c0_48 = arith.constant 0 : index
    %c0_49 = arith.constant 0 : index
    %70 = vector.load %arg11[%c1_47, %c0_48, %c0_49] : memref<4x10x128xf32, #tpu.memory_space<vmem>>, vector<2x8x128xf32>
    %71 = vector.shape_cast %70 : vector<2x8x128xf32> to vector<16x128xf32>
    %72 = arith.truncf %71 : vector<16x128xf32> to vector<16x128xbf16>
    %c3 = arith.constant 3 : index
    %c0_50 = arith.constant 0 : index
    %c0_51 = arith.constant 0 : index
    %73 = vector.load %arg8[%c3, %c0_50, %c0_51] : memref<9x128x128xbf16, #tpu.memory_space<vmem>>, vector<1x128x128xbf16>
    %74 = vector.shape_cast %73 : vector<1x128x128xbf16> to vector<128x128xbf16>
    %cst_52 = arith.constant dense<0.000000e+00> : vector<16x128xf32>
    %75 = tpu.matmul %72, %74, %cst_52 {dimension_numbers = #tpu.dot_dimension_numbers<[1], [0], [0], [1], [0, 0, 1, 1], [], []>} : vector<16x128xbf16>, vector<128x128xbf16>, vector<16x128xf32> -> vector<16x128xf32>
    %76 = arith.addf %69, %75 : vector<16x128xf32>
    %c1_53 = arith.constant 1 : index
    %c1_54 = arith.constant 1 : index
    %c0_55 = arith.constant 0 : index
    %77 = vector.load %arg11[%c1_53, %c1_54, %c0_55] : memref<4x10x128xf32, #tpu.memory_space<vmem>>, vector<2x8x128xf32>
    %78 = vector.shape_cast %77 : vector<2x8x128xf32> to vector<16x128xf32>
    %79 = arith.truncf %78 : vector<16x128xf32> to vector<16x128xbf16>
    %c4 = arith.constant 4 : index
    %c0_56 = arith.constant 0 : index
    %c0_57 = arith.constant 0 : index
    %80 = vector.load %arg8[%c4, %c0_56, %c0_57] : memref<9x128x128xbf16, #tpu.memory_space<vmem>>, vector<1x128x128xbf16>
    %81 = vector.shape_cast %80 : vector<1x128x128xbf16> to vector<128x128xbf16>
    %cst_58 = arith.constant dense<0.000000e+00> : vector<16x128xf32>
    %82 = tpu.matmul %79, %81, %cst_58 {dimension_numbers = #tpu.dot_dimension_numbers<[1], [0], [0], [1], [0, 0, 1, 1], [], []>} : vector<16x128xbf16>, vector<128x128xbf16>, vector<16x128xf32> -> vector<16x128xf32>
    %83 = arith.addf %76, %82 : vector<16x128xf32>
    %c1_59 = arith.constant 1 : index
    %c2_60 = arith.constant 2 : index
    %c0_61 = arith.constant 0 : index
    %84 = vector.load %arg11[%c1_59, %c2_60, %c0_61] : memref<4x10x128xf32, #tpu.memory_space<vmem>>, vector<2x8x128xf32>
    %85 = vector.shape_cast %84 : vector<2x8x128xf32> to vector<16x128xf32>
    %86 = arith.truncf %85 : vector<16x128xf32> to vector<16x128xbf16>
    %c5 = arith.constant 5 : index
    %c0_62 = arith.constant 0 : index
    %c0_63 = arith.constant 0 : index
    %87 = vector.load %arg8[%c5, %c0_62, %c0_63] : memref<9x128x128xbf16, #tpu.memory_space<vmem>>, vector<1x128x128xbf16>
    %88 = vector.shape_cast %87 : vector<1x128x128xbf16> to vector<128x128xbf16>
    %cst_64 = arith.constant dense<0.000000e+00> : vector<16x128xf32>
    %89 = tpu.matmul %86, %88, %cst_64 {dimension_numbers = #tpu.dot_dimension_numbers<[1], [0], [0], [1], [0, 0, 1, 1], [], []>} : vector<16x128xbf16>, vector<128x128xbf16>, vector<16x128xf32> -> vector<16x128xf32>
    %90 = arith.addf %83, %89 : vector<16x128xf32>
    %c2_65 = arith.constant 2 : index
    %c0_66 = arith.constant 0 : index
    %c0_67 = arith.constant 0 : index
    %91 = vector.load %arg11[%c2_65, %c0_66, %c0_67] : memref<4x10x128xf32, #tpu.memory_space<vmem>>, vector<2x8x128xf32>
    %92 = vector.shape_cast %91 : vector<2x8x128xf32> to vector<16x128xf32>
    %93 = arith.truncf %92 : vector<16x128xf32> to vector<16x128xbf16>
    %c6 = arith.constant 6 : index
    %c0_68 = arith.constant 0 : index
    %c0_69 = arith.constant 0 : index
    %94 = vector.load %arg8[%c6, %c0_68, %c0_69] : memref<9x128x128xbf16, #tpu.memory_space<vmem>>, vector<1x128x128xbf16>
    %95 = vector.shape_cast %94 : vector<1x128x128xbf16> to vector<128x128xbf16>
    %cst_70 = arith.constant dense<0.000000e+00> : vector<16x128xf32>
    %96 = tpu.matmul %93, %95, %cst_70 {dimension_numbers = #tpu.dot_dimension_numbers<[1], [0], [0], [1], [0, 0, 1, 1], [], []>} : vector<16x128xbf16>, vector<128x128xbf16>, vector<16x128xf32> -> vector<16x128xf32>
    %97 = arith.addf %90, %96 : vector<16x128xf32>
    %c2_71 = arith.constant 2 : index
    %c1_72 = arith.constant 1 : index
    %c0_73 = arith.constant 0 : index
    %98 = vector.load %arg11[%c2_71, %c1_72, %c0_73] : memref<4x10x128xf32, #tpu.memory_space<vmem>>, vector<2x8x128xf32>
    %99 = vector.shape_cast %98 : vector<2x8x128xf32> to vector<16x128xf32>
    %100 = arith.truncf %99 : vector<16x128xf32> to vector<16x128xbf16>
    %c7 = arith.constant 7 : index
    %c0_74 = arith.constant 0 : index
    %c0_75 = arith.constant 0 : index
    %101 = vector.load %arg8[%c7, %c0_74, %c0_75] : memref<9x128x128xbf16, #tpu.memory_space<vmem>>, vector<1x128x128xbf16>
    %102 = vector.shape_cast %101 : vector<1x128x128xbf16> to vector<128x128xbf16>
    %cst_76 = arith.constant dense<0.000000e+00> : vector<16x128xf32>
    %103 = tpu.matmul %100, %102, %cst_76 {dimension_numbers = #tpu.dot_dimension_numbers<[1], [0], [0], [1], [0, 0, 1, 1], [], []>} : vector<16x128xbf16>, vector<128x128xbf16>, vector<16x128xf32> -> vector<16x128xf32>
    %104 = arith.addf %97, %103 : vector<16x128xf32>
    %c2_77 = arith.constant 2 : index
    %c2_78 = arith.constant 2 : index
    %c0_79 = arith.constant 0 : index
    %105 = vector.load %arg11[%c2_77, %c2_78, %c0_79] : memref<4x10x128xf32, #tpu.memory_space<vmem>>, vector<2x8x128xf32>
    %106 = vector.shape_cast %105 : vector<2x8x128xf32> to vector<16x128xf32>
    %107 = arith.truncf %106 : vector<16x128xf32> to vector<16x128xbf16>
    %c8 = arith.constant 8 : index
    %c0_80 = arith.constant 0 : index
    %c0_81 = arith.constant 0 : index
    %108 = vector.load %arg8[%c8, %c0_80, %c0_81] : memref<9x128x128xbf16, #tpu.memory_space<vmem>>, vector<1x128x128xbf16>
    %109 = vector.shape_cast %108 : vector<1x128x128xbf16> to vector<128x128xbf16>
    %cst_82 = arith.constant dense<0.000000e+00> : vector<16x128xf32>
    %110 = tpu.matmul %107, %109, %cst_82 {dimension_numbers = #tpu.dot_dimension_numbers<[1], [0], [0], [1], [0, 0, 1, 1], [], []>} : vector<16x128xbf16>, vector<128x128xbf16>, vector<16x128xf32> -> vector<16x128xf32>
    %111 = arith.addf %104, %110 : vector<16x128xf32>
    %112 = vector.shape_cast %111 : vector<16x128xf32> to vector<2x8x128xf32>
    %c0_83 = arith.constant 0 : index
    %c0_84 = arith.constant 0 : index
    %c0_85 = arith.constant 0 : index
    %c0_86 = arith.constant 0 : index
    %113 = vector.load %arg10[%c0_83, %c0_84, %c0_85, %c0_86] : memref<1x2x8x128xf32, #tpu.memory_space<vmem>>, vector<1x2x8x128xf32>
    %114 = vector.shape_cast %113 : vector<1x2x8x128xf32> to vector<2x8x128xf32>
    %115 = vector.shape_cast %112 : vector<2x8x128xf32> to vector<1x2x8x128xf32>
    tpu.vector_store %arg10[%c0_83, %c0_84, %c0_85, %c0_86], %115 {strides = array<i32>} : memref<1x2x8x128xf32, #tpu.memory_space<vmem>>, vector<1x2x8x128xf32>,
    return
  }
  func.func @transform_0(%arg0: i32, %arg1: i32) -> (i32, i32, i32, i32) {
    %c0_i32 = arith.constant 0 : i32
    %c0_i32_0 = arith.constant 0 : i32
    %c0_i32_1 = arith.constant 0 : i32
    %c0_i32_2 = arith.constant 0 : i32
    return %arg0, %c0_i32, %c0_i32_0, %c0_i32_1 : i32, i32, i32, i32
  }
  func.func @transform_1(%arg0: i32, %arg1: i32) -> (i32, i32, i32, i32) {
    %c0_i32 = arith.constant 0 : i32
    %c0_i32_0 = arith.constant 0 : i32
    %c0_i32_1 = arith.constant 0 : i32
    %c0_i32_2 = arith.constant 0 : i32
    return %arg0, %c0_i32, %c0_i32_0, %c0_i32_1 : i32, i32, i32, i32
  }
  func.func @transform_2(%arg0: i32, %arg1: i32) -> (i32, i32, i32) {
    %c0_i32 = arith.constant 0 : i32
    %c0_i32_0 = arith.constant 0 : i32
    %c0_i32_1 = arith.constant 0 : i32
    %c0_i32_2 = arith.constant 0 : i32
    return %c0_i32, %c0_i32_0, %c0_i32_1 : i32, i32, i32
  }
  func.func @transform_3(%arg0: i32, %arg1: i32) -> (i32, i32, i32) {
    %c0_i32 = arith.constant 0 : i32
    %c0_i32_0 = arith.constant 0 : i32
    %c0_i32_1 = arith.constant 0 : i32
    %c0_i32_2 = arith.constant 0 : i32
    return %c0_i32, %c0_i32_0, %c0_i32_1 : i32, i32, i32
  }
  func.func @transform_4(%arg0: i32, %arg1: i32) -> (i32, i32, i32) {
    %c0_i32 = arith.constant 0 : i32
    %c0_i32_0 = arith.constant 0 : i32
    %c0_i32_1 = arith.constant 0 : i32
    %c0_i32_2 = arith.constant 0 : i32
    return %c0_i32, %c0_i32_0, %c0_i32_1 : i32, i32, i32
  }
  func.func @transform_5(%arg0: i32, %arg1: i32) -> (i32, i32, i32) {
    %c0_i32 = arith.constant 0 : i32
    %c0_i32_0 = arith.constant 0 : i32
    %c0_i32_1 = arith.constant 0 : i32
    %c0_i32_2 = arith.constant 0 : i32
    return %c0_i32, %c0_i32_0, %c0_i32_1 : i32, i32, i32
  }
  func.func @transform_6(%arg0: i32, %arg1: i32) -> (i32, i32, i32) {
    %c0_i32 = arith.constant 0 : i32
    %c0_i32_0 = arith.constant 0 : i32
    %c0_i32_1 = arith.constant 0 : i32
    %c0_i32_2 = arith.constant 0 : i32
    return %c0_i32, %c0_i32_0, %c0_i32_1 : i32, i32, i32
  }
  func.func @transform_7(%arg0: i32, %arg1: i32) -> (i32, i32) {
    %c0_i32 = arith.constant 0 : i32
    %c0_i32_0 = arith.constant 0 : i32
    %c0_i32_1 = arith.constant 0 : i32
    return %c0_i32, %c0_i32_0 : i32, i32
  }
  func.func @transform_8(%arg0: i32, %arg1: i32) -> (i32, i32, i32, i32) {
    %c0_i32 = arith.constant 0 : i32
    %c0_i32_0 = arith.constant 0 : i32
    %c0_i32_1 = arith.constant 0 : i32
    return %arg0, %arg1, %c0_i32, %c0_i32_0 : i32, i32, i32, i32
  }
}

</mosaic_0001>

<llo_original>
// kernel: basic_block_forward.2
$region0: #{basic_block_forward.2}
  #allocation0 [shape = 'u32[]', space=smem, size = 0x4, offset = 0x4, fixed_abs, tag = 'smem constant byte address 0x4 - core index']
  #allocation1 [shape = 'u32[144,128]{1,0:T(1,128)}', space=vmem, size = 0x12000, scoped, tag = 'internal scratch']
  #allocation2 [shape = 'f32[5,18,128]{2,1,0:T(8,128)}', space=vmem, size = 0xf000, scoped, tag = 'scratch operand']
  %s0 = inlined_call_operand.vmem [shape: f32[2,18,18,128], index: 0, kind: input, shape index: {}]
  %s1 = inlined_call_operand.vmem [shape: f32[1,1,128], index: 1, kind: input, shape index: {}]
  %s2 = inlined_call_operand.vmem [shape: f32[1,1,128], index: 2, kind: input, shape index: {}]
  %s3 = inlined_call_operand.vmem [shape: bf16[9,128,128], index: 3, kind: input, shape index: {}]
  %s4 = inlined_call_operand.vmem [shape: bf16[2,8,8,128], index: 4, kind: output, shape index: {}]
  %s5 = sld [smem:[#allocation0]]
  $region49: #{basic_block_forward.2} parent=0
    _
  %s7 = ssub.s32 1, %s5
  %s8 = scalar_select 0, %s7, %s5
  loop: start=0, step=1, limit=10
  $region2: #{basic_block_forward.2} parent=0 // loop_pre_header
    _
  $region3: #{basic_block_forward.2} parent=0 // loop_header
    %s10 = sphi 0, %s14
    %p11 = scmp.ge.s32.totalorder %s10, 10
    %s17 = sphi 0, %s29
    %s18 = sphi 0, %s25
    %s19 = sphi 0, %s17
    %s20 = sphi 0, %s18
    %s21 = sphi 0, %s19
    %s22 = sphi 0, %s20
    %s32 = sphi 0, %s34
    %s35 = sphi 0, %s32
    %s36 = sphi 0, %s35
    %s52 = sphi 0, %s36
    %s56 = sphi 0, %s56
    %s58 = sphi 0, %s56
    %s59 = sphi 0, %s58
    %s73 = sphi 0, %s59
    %s77 = sphi 0, %s77
    %s79 = sphi 0, %s77
    %s80 = sphi 0, %s79
    %s94 = sphi 0, %s80
    %s98 = sphi 0, %s98
    %s100 = sphi 0, %s98
    %s101 = sphi 0, %s100
    %s115 = sphi 0, %s101
    %s123 = sphi 0, %s125
    %s126 = sphi 0, %s123
    %s127 = sphi 0, %s126
    %s143 = sphi 0, %s127
  $region4: #{basic_block_forward.2} parent=0 // loop_header_branch
    %13 = sbr.rel (%p11) target = $region8
  $region5: #{basic_block_forward.2} parent=0 // loop_body
    %s15 = ssub.s32 %s10, 1
    %s16 = ssub.s32 %s10, 2
    %s23 = sadd.s32 1, %s18
    %p24 = scmp.ge.s32.totalorder %s23, 4
    %s25 = scalar_select %p24, 0, %s23
    %s26 = sadd.s32 1, %s17
    %s27 = scalar_select %p24, %s26, %s17
    %p28 = scmp.ge.s32.totalorder %s27, 2
    %s29 = scalar_select %p28, 0, %s27
    %s30 = ssub.s32 %s17, %s29
    %p31 = scmp.eq.s32.totalorder %s30, 0
    %s33 = sadd.s32 %s32, 1
    %s34 = scalar_select %p31, %s32, %s33
    %p37 = pneg %p31
    %p38 = scmp.eq.s32.totalorder %s10, 7
    %p39 = por %p37, %p38
    %p40 = scmp.ne.s32.totalorder %s32, %s35
    %p41 = scmp.eq.s32.totalorder %s10, 0
    %p42 = por %p40, %p41
    %p43 = scmp.ne.s32.totalorder %s32, %s35
    %p44 = scmp.eq.s32.totalorder %s15, 7
    %p45 = por %p43, %p44
    %p46 = scmp.ne.s32.totalorder %s35, %s36
    %p47 = scmp.eq.s32.totalorder %s15, 0
    %p48 = por %p46, %p47
    %p49 = scmp.ne.s32.totalorder %s35, %s36
    %p50 = scmp.eq.s32.totalorder %s16, 7
    %p51 = por %p49, %p50
    %p53 = scmp.ne.s32.totalorder %s36, %s52
    %p54 = scmp.eq.s32.totalorder %s16, 0
    %p55 = por %p53, %p54
    %s57 = sadd.s32 %s56, 1
    %p60 = scmp.eq.s32.totalorder %s10, 7
    %p61 = scmp.ne.s32.totalorder %s56, %s58
    %p62 = scmp.eq.s32.totalorder %s10, 0
    %p63 = por %p61, %p62
    %p64 = scmp.ne.s32.totalorder %s56, %s58
    %p65 = scmp.eq.s32.totalorder %s15, 7
    %p66 = por %p64, %p65
    %p67 = scmp.ne.s32.totalorder %s58, %s59
    %p68 = scmp.eq.s32.totalorder %s15, 0
    %p69 = por %p67, %p68
    %p70 = scmp.ne.s32.totalorder %s58, %s59
    %p71 = scmp.eq.s32.totalorder %s16, 7
    %p72 = por %p70, %p71
    %p74 = scmp.ne.s32.totalorder %s59, %s73
    %p75 = scmp.eq.s32.totalorder %s16, 0
    %p76 = por %p74, %p75
    %s78 = sadd.s32 %s77, 1
    %p81 = scmp.eq.s32.totalorder %s10, 7
    %p82 = scmp.ne.s32.totalorder %s77, %s79
    %p83 = scmp.eq.s32.totalorder %s10, 0
    %p84 = por %p82, %p83
    %p85 = scmp.ne.s32.totalorder %s77, %s79
    %p86 = scmp.eq.s32.totalorder %s15, 7
    %p87 = por %p85, %p86
    %p88 = scmp.ne.s32.totalorder %s79, %s80
    %p89 = scmp.eq.s32.totalorder %s15, 0
    %p90 = por %p88, %p89
    %p91 = scmp.ne.s32.totalorder %s79, %s80
    %p92 = scmp.eq.s32.totalorder %s16, 7
    %p93 = por %p91, %p92
    %p95 = scmp.ne.s32.totalorder %s80, %s94
    %p96 = scmp.eq.s32.totalorder %s16, 0
    %p97 = por %p95, %p96
    %s99 = sadd.s32 %s98, 1
    %p102 = scmp.eq.s32.totalorder %s10, 7
    %p103 = scmp.ne.s32.totalorder %s98, %s100
    %p104 = scmp.eq.s32.totalorder %s10, 0
    %p105 = por %p103, %p104
    %p106 = scmp.ne.s32.totalorder %s98, %s100
    %p107 = scmp.eq.s32.totalorder %s15, 7
    %p108 = por %p106, %p107
    %p109 = scmp.ne.s32.totalorder %s100, %s101
    %p110 = scmp.eq.s32.totalorder %s15, 0
    %p111 = por %p109, %p110
    %p112 = scmp.ne.s32.totalorder %s100, %s101
    %p113 = scmp.eq.s32.totalorder %s16, 7
    %p114 = por %p112, %p113
    %p116 = scmp.ne.s32.totalorder %s101, %s115
    %p117 = scmp.eq.s32.totalorder %s16, 0
    %p118 = por %p116, %p117
    %s119 = ssub.s32 %s17, %s29
    %s120 = ssub.s32 %s18, %s25
    %s121 = sor.u32 %s119, %s120
    %p122 = scmp.eq.s32.totalorder %s121, 0
    %s124 = sadd.s32 %s123, 1
    %s125 = scalar_select %p122, %s123, %s124
    %p128 = pneg %p122
    %p129 = scmp.eq.s32.totalorder %s10, 7
    %p130 = por %p128, %p129
    %p131 = scmp.ne.s32.totalorder %s123, %s126
    %p132 = scmp.eq.s32.totalorder %s10, 0
    %p133 = por %p131, %p132
    %p134 = scmp.ne.s32.totalorder %s123, %s126
    %p135 = scmp.eq.s32.totalorder %s15, 7
    %p136 = por %p134, %p135
    %p137 = scmp.ne.s32.totalorder %s126, %s127
    %p138 = scmp.eq.s32.totalorder %s15, 0
    %p139 = por %p137, %p138
    %p140 = scmp.ne.s32.totalorder %s126, %s127
    %p141 = scmp.eq.s32.totalorder %s16, 7
    %p142 = por %p140, %p141
    %p144 = scmp.ne.s32.totalorder %s127, %s143
    %p145 = scmp.eq.s32.totalorder %s16, 0
    %p146 = por %p144, %p145
    %p147 = scmp.le.s32.totalorder 1, %s10
    %p148 = scmp.lt.s32.totalorder %s10, 9
    %p149 = pnand %p147, %p148
    %p150 = pneg %p149
    // Predicated region
    $region9: #{basic_block_forward.2} parent=5 // pred_check
      _
    $region10: #{basic_block_forward.2} parent=5 // pred_check_branch
      %152 = sbr.rel (%p149) target = $region12
    $region11: #{basic_block_forward.2} parent=5 // pred_region
      %s153 = ssub.s32 %s10, 1
      // Predicated region
      $region13: #{basic_block_forward.2} parent=11 // pred_check
        %p154 = pneg %p69
      $region14: #{basic_block_forward.2} parent=11 // pred_check_branch
        %156 = sbr.rel (%p154) target = $region16
      $region15: #{basic_block_forward.2} parent=11 // pred_region
        _
      $region16: #{basic_block_forward.2} parent=11 // pred_fallthru
        _
      // Predicated region
      $region17: #{basic_block_forward.2} parent=11 // pred_check
        %p157 = pneg %p90
      $region18: #{basic_block_forward.2} parent=11 // pred_check_branch
        %159 = sbr.rel (%p157) target = $region20
      $region19: #{basic_block_forward.2} parent=11 // pred_region
        _
      $region20: #{basic_block_forward.2} parent=11 // pred_fallthru
        _
      // Predicated region
      $region21: #{basic_block_forward.2} parent=11 // pred_check
        %p160 = pneg %p111
      $region22: #{basic_block_forward.2} parent=11 // pred_check_branch
        %162 = sbr.rel (%p160) target = $region24
      $region23: #{basic_block_forward.2} parent=11 // pred_region
        _
      $region24: #{basic_block_forward.2} parent=11 // pred_fallthru
        _
    $region12: #{basic_block_forward.2} parent=5 // pred_fallthru
      _
    %p163 = scmp.lt.s32.totalorder %s10, 8
    // Predicated region
    $region25: #{basic_block_forward.2} parent=5 // pred_check
      %p164 = pneg %p163
    $region26: #{basic_block_forward.2} parent=5 // pred_check_branch
      %166 = sbr.rel (%p164) target = $region28
    $region27: #{basic_block_forward.2} parent=5 // pred_region
      // Predicated region
      $region29: #{basic_block_forward.2} parent=27 // pred_check
        %p167 = pneg %p42
      $region30: #{basic_block_forward.2} parent=27 // pred_check_branch
        %169 = sbr.rel (%p167) target = $region32
      $region31: #{basic_block_forward.2} parent=27 // pred_region
        %p170 = scmp.lt.s32.totalorder %s17, 1
        %s171 = scalar_select %p170, %s17, 1
        %s172 = smul.addr %s171, 54
        %s173 = smul.addr %s172, 8
        %s174 = scalar_lea.vmem %s0, %s173
      $region32: #{basic_block_forward.2} parent=27 // pred_fallthru
        _
    $region28: #{basic_block_forward.2} parent=5 // pred_fallthru
      _
    %p175 = scmp.le.s32.totalorder 1, %s10
    %p176 = scmp.lt.s32.totalorder %s10, 9
    %p177 = pnand %p175, %p176
    %p178 = pneg %p177
    // Predicated region
    $region33: #{basic_block_forward.2} parent=5 // pred_check
      _
    $region34: #{basic_block_forward.2} parent=5 // pred_check_branch
      %180 = sbr.rel (%p177) target = $region36
    $region35: #{basic_block_forward.2} parent=5 // pred_region
      %s181 = ssub.s32 %s10, 1
      %p182 = scmp.lt.s32.totalorder %s19, 1
      %s183 = scalar_select %p182, %s19, 1
      %s184 = smul.addr %s183, 54
      %s185 = smul.addr %s184, 8
      %s186 = scalar_lea.vmem %s0, %s185
      %p187 = pneg %p48
      %p188 = pneg %p45
      %p189 = pneg %p69
      %p190 = pneg %p66
      %p191 = pneg %p90
      %p192 = pneg %p87
      %p193 = pneg %p111
      %p194 = pneg %p108
      %p195 = pneg %p139
      %p196 = pneg %p136
      %s197 = smul.u32 2, %s20
      %p198 = scmp.lt.s32.totalorder %s19, 1
      %s199 = scalar_select %p198, %s19, 1
      %p200 = scmp.lt.s32.totalorder %s197, 7
      %s201 = scalar_select %p200, %s197, 7
      %s202 = smul.addr %s199, 8
      %s203 = sadd.s32 %s201, %s202
      %s204 = smul.addr %s203, 4
      %s205 = scalar_lea.vmem %s4, %s204
      %p206 = scmp.lt.s32.totalorder %s19, 1
      %s207 = scalar_select %p206, %s19, 1
      %s208 = smul.addr %s207, 54
      %s209 = smul.addr %s208, 8
      %s210 = scalar_lea.vmem %s0, %s209
      %s211 = smul.u32 2, %s20
      %p212 = scmp.lt.s32.totalorder %s19, 1
      %s213 = scalar_select %p212, %s19, 1
      %p214 = scmp.lt.s32.totalorder %s211, 7
      %s215 = scalar_select %p214, %s211, 7
      %s216 = smul.addr %s213, 8
      %s217 = sadd.s32 %s215, %s216
      %s218 = smul.addr %s217, 4
      %s219 = scalar_lea.vmem %s4, %s218
      %s220 = smul.u32 2, %s20
      %s222 = smul.u32 %s20, 4
      %s223 = smul.u32 %s222, 24
      %s224 = scalar_lea.vmem %s210, %s223
      %v225 = vld [vmem:[%s224] sm:$0xff]
      %v226 = vld [vmem:[%s224 + $0x8] sm:$0xff]
      %v227 = vld [vmem:[%s224 + $0x10] sm:$0x3]
      %v228 = vld [vmem:[%s224 + $0x18] sm:$0xff]
      %v229 = vld [vmem:[%s224 + $0x20] sm:$0xff]
      %v230 = vld [vmem:[%s224 + $0x28] sm:$0x3]
      %v231 = vld [vmem:[%s224 + $0x30] sm:$0xff]
      %v232 = vld [vmem:[%s224 + $0x38] sm:$0xff]
      %v233 = vld [vmem:[%s224 + $0x40] sm:$0x3]
      %v234 = vld [vmem:[%s224 + $0x48] sm:$0xff]
      %v235 = vld [vmem:[%s224 + $0x50] sm:$0xff]
      %v236 = vld [vmem:[%s224 + $0x58] sm:$0x3]
      %v237 = vld [vmem:[%s224 + $0x60] sm:$0xff]
      %v238 = vld [vmem:[%s224 + $0x68] sm:$0xff]
      %v239 = vld [vmem:[%s224 + $0x70] sm:$0x3]
      %v240 = vld [vmem:[%s1] sm:$0x1]
      %v241 = vld [vmem:[%s2] sm:$0x1]
      %v243 = vlaneseq
      %v244 = vshrl.u32 %v243, 7
      %v245 = vsub.s32 0, %v244
      %v246 = vrot.slane %v240, %v245
      %v248 = vmul.f32 %v225, %v246
      %v249 = vmul.f32 %v226, %v246
      %v250 = vmul.f32 %v227, %v246
      %v251 = vmul.f32 %v228, %v246
      %v252 = vmul.f32 %v229, %v246
      %v253 = vmul.f32 %v230, %v246
      %v254 = vmul.f32 %v231, %v246
      %v255 = vmul.f32 %v232, %v246
      %v256 = vmul.f32 %v233, %v246
      %v257 = vmul.f32 %v234, %v246
      %v258 = vmul.f32 %v235, %v246
      %v259 = vmul.f32 %v236, %v246
      %v260 = vmul.f32 %v237, %v246
      %v261 = vmul.f32 %v238, %v246
      %v262 = vmul.f32 %v239, %v246
      %v264 = vlaneseq
      %v265 = vshrl.u32 %v264, 7
      %v266 = vsub.s32 0, %v265
      %v267 = vrot.slane %v241, %v266
      %v269 = vadd.f32 %v248, %v267
      %v270 = vadd.f32 %v249, %v267
      %v271 = vadd.f32 %v250, %v267
      %v272 = vadd.f32 %v251, %v267
      %v273 = vadd.f32 %v252, %v267
      %v274 = vadd.f32 %v253, %v267
      %v275 = vadd.f32 %v254, %v267
      %v276 = vadd.f32 %v255, %v267
      %v277 = vadd.f32 %v256, %v267
      %v278 = vadd.f32 %v257, %v267
      %v279 = vadd.f32 %v258, %v267
      %v280 = vadd.f32 %v259, %v267
      %v281 = vadd.f32 %v260, %v267
      %v282 = vadd.f32 %v261, %v267
      %v283 = vadd.f32 %v262, %v267
      %v284 = vmax.f32 %v269, 0.0
      %v285 = vmax.f32 %v270, 0.0
      %v286 = vmax.f32 %v271, 0.0
      %v287 = vmax.f32 %v272, 0.0
      %v288 = vmax.f32 %v273, 0.0
      %v289 = vmax.f32 %v274, 0.0
      %v290 = vmax.f32 %v275, 0.0
      %v291 = vmax.f32 %v276, 0.0
      %v292 = vmax.f32 %v277, 0.0
      %v293 = vmax.f32 %v278, 0.0
      %v294 = vmax.f32 %v279, 0.0
      %v295 = vmax.f32 %v280, 0.0
      %v296 = vmax.f32 %v281, 0.0
      %v297 = vmax.f32 %v282, 0.0
      %v298 = vmax.f32 %v283, 0.0
      %v299 = vstv %s222
      %v300 = vadd.s32 %v299, 1
      %v301 = vadd.s32 %v299, 2
      %v302 = vadd.s32 %v299, 3
      %v303 = vadd.s32 %v299, 4
      %v304 = vlaneseq
      %v305 = vshrl.u32 %v304, 7
      %v306 = vadd.s32 %v305, 8
      %v307 = vadd.s32 %v305, 16
      %vm308 = vcmp.ge.s32.totalorder %v299, 1
      %vm309 = vcmp.ge.s32.totalorder %v300, 1
      %vm310 = vcmp.ge.s32.totalorder %v301, 1
      %vm311 = vcmp.ge.s32.totalorder %v302, 1
      %vm312 = vcmp.ge.s32.totalorder %v303, 1
      %vm313 = vcmp.le.s32.totalorder %v299, 16
      %vm314 = vcmp.le.s32.totalorder %v300, 16
      %vm315 = vcmp.le.s32.totalorder %v301, 16
      %vm316 = vcmp.le.s32.totalorder %v302, 16
      %vm317 = vcmp.le.s32.totalorder %v303, 16
      %vm318 = vmand %vm308, %vm313
      %vm319 = vmand %vm309, %vm314
      %vm320 = vmand %vm310, %vm315
      %vm321 = vmand %vm311, %vm316
      %vm322 = vmand %vm312, %vm317
      %vm323 = vcmp.ge.s32.totalorder %v305, 1
      %vm324 = vcmp.ge.s32.totalorder %v306, 1
      %vm325 = vcmp.ge.s32.totalorder %v307, 1
      %vm326 = vmand %vm318, %vm323
      %vm327 = vmand %vm318, %vm324
      %vm328 = vmand %vm318, %vm325
      %vm329 = vmand %vm319, %vm323
      %vm330 = vmand %vm319, %vm324
      %vm331 = vmand %vm319, %vm325
      %vm332 = vmand %vm320, %vm323
      %vm333 = vmand %vm320, %vm324
      %vm334 = vmand %vm320, %vm325
      %vm335 = vmand %vm321, %vm323
      %vm336 = vmand %vm321, %vm324
      %vm337 = vmand %vm321, %vm325
      %vm338 = vmand %vm322, %vm323
      %vm339 = vmand %vm322, %vm324
      %vm340 = vmand %vm322, %vm325
      %vm341 = vcmp.le.s32.totalorder %v305, 16
      %vm342 = vcmp.le.s32.totalorder %v306, 16
      %vm343 = vcmp.le.s32.totalorder %v307, 16
      %vm344 = vmand %vm326, %vm341
      %vm345 = vmand %vm327, %vm342
      %vm346 = vmand %vm328, %vm343
      %vm347 = vmand %vm329, %vm341
      %vm348 = vmand %vm330, %vm342
      %vm349 = vmand %vm331, %vm343
      %vm350 = vmand %vm332, %vm341
      %vm351 = vmand %vm333, %vm342
      %vm352 = vmand %vm334, %vm343
      %vm353 = vmand %vm335, %vm341
      %vm354 = vmand %vm336, %vm342
      %vm355 = vmand %vm337, %vm343
      %vm356 = vmand %vm338, %vm341
      %vm357 = vmand %vm339, %vm342
      %vm358 = vmand %vm340, %vm343
      %v359 = vsel %vm344, 1, 0
      %v360 = vsel %vm345, 1, 0
      %v361 = vsel %vm346, 1, 0
      %v362 = vsel %vm347, 1, 0
      %v363 = vsel %vm348, 1, 0
      %v364 = vsel %vm349, 1, 0
      %v365 = vsel %vm350, 1, 0
      %v366 = vsel %vm351, 1, 0
      %v367 = vsel %vm352, 1, 0
      %v368 = vsel %vm353, 1, 0
      %v369 = vsel %vm354, 1, 0
      %v370 = vsel %vm355, 1, 0
      %v371 = vsel %vm356, 1, 0
      %v372 = vsel %vm357, 1, 0
      %v373 = vsel %vm358, 1, 0
      %vm374 = vcmp.eq.s32.totalorder %v359, 1
      %vm375 = vcmp.eq.s32.totalorder %v360, 1
      %vm376 = vcmp.eq.s32.totalorder %v361, 1
      %vm377 = vcmp.eq.s32.totalorder %v362, 1
      %vm378 = vcmp.eq.s32.totalorder %v363, 1
      %vm379 = vcmp.eq.s32.totalorder %v364, 1
      %vm380 = vcmp.eq.s32.totalorder %v365, 1
      %vm381 = vcmp.eq.s32.totalorder %v366, 1
      %vm382 = vcmp.eq.s32.totalorder %v367, 1
      %vm383 = vcmp.eq.s32.totalorder %v368, 1
      %vm384 = vcmp.eq.s32.totalorder %v369, 1
      %vm385 = vcmp.eq.s32.totalorder %v370, 1
      %vm386 = vcmp.eq.s32.totalorder %v371, 1
      %vm387 = vcmp.eq.s32.totalorder %v372, 1
      %vm388 = vcmp.eq.s32.totalorder %v373, 1
      %v389 = vsel %vm374, %v284, 0.0
      %v390 = vsel %vm375, %v285, 0.0
      %v391 = vsel %vm376, %v286, 0.0
      %v392 = vsel %vm377, %v287, 0.0
      %v393 = vsel %vm378, %v288, 0.0
      %v394 = vsel %vm379, %v289, 0.0
      %v395 = vsel %vm380, %v290, 0.0
      %v396 = vsel %vm381, %v291, 0.0
      %v397 = vsel %vm382, %v292, 0.0
      %v398 = vsel %vm383, %v293, 0.0
      %v399 = vsel %vm384, %v294, 0.0
      %v400 = vsel %vm385, %v295, 0.0
      %v401 = vsel %vm386, %v296, 0.0
      %v402 = vsel %vm387, %v297, 0.0
      %v403 = vsel %vm388, %v298, 0.0
      %404 = vst [vmem:[#allocation2] sm:$0xff] %v389
      %405 = vst [vmem:[#allocation2 + $0x8] sm:$0xff] %v390
      %406 = vst [vmem:[#allocation2 + $0x10] sm:$0x3] %v391
      %407 = vst [vmem:[#allocation2 + $0x18] sm:$0xff] %v392
      %408 = vst [vmem:[#allocation2 + $0x20] sm:$0xff] %v393
      %409 = vst [vmem:[#allocation2 + $0x28] sm:$0x3] %v394
      %410 = vst [vmem:[#allocation2 + $0x30] sm:$0xff] %v395
      %411 = vst [vmem:[#allocation2 + $0x38] sm:$0xff] %v396
      %412 = vst [vmem:[#allocation2 + $0x40] sm:$0x3] %v397
      %413 = vst [vmem:[#allocation2 + $0x48] sm:$0xff] %v398
      %414 = vst [vmem:[#allocation2 + $0x50] sm:$0xff] %v399
      %415 = vst [vmem:[#allocation2 + $0x58] sm:$0x3] %v400
      %416 = vst [vmem:[#allocation2 + $0x60] sm:$0xff] %v401
      %417 = vst [vmem:[#allocation2 + $0x68] sm:$0xff] %v402
      %418 = vst [vmem:[#allocation2 + $0x70] sm:$0x3] %v403
      %v419 = vld [vmem:[#allocation2] ss:$2 sm:$0xff]
      %s420 = scalar_lea.vmem [#allocation2], 48
      %v421 = vld [vmem:[%s420] ss:$2 sm:$0xff]
      %v422 = vpack.c.bf16 %v421, %v419
      %v423 = vld [vmem:[%s3] sm:$0xf]
      %v424 = vld [vmem:[%s3 + $0x4] sm:$0xf]
      %v425 = vld [vmem:[%s3 + $0x8] sm:$0xf]
      %v426 = vld [vmem:[%s3 + $0xc] sm:$0xf]
      %v427 = vld [vmem:[%s3 + $0x10] sm:$0xf]
      %v428 = vld [vmem:[%s3 + $0x14] sm:$0xf]
      %v429 = vld [vmem:[%s3 + $0x18] sm:$0xf]
      %v430 = vld [vmem:[%s3 + $0x1c] sm:$0xf]
      %v431 = vld [vmem:[%s3 + $0x20] sm:$0xf]
      %v432 = vld [vmem:[%s3 + $0x24] sm:$0xf]
      %v433 = vld [vmem:[%s3 + $0x28] sm:$0xf]
      %v434 = vld [vmem:[%s3 + $0x2c] sm:$0xf]
      %v435 = vld [vmem:[%s3 + $0x30] sm:$0xf]
      %v436 = vld [vmem:[%s3 + $0x34] sm:$0xf]
      %v437 = vld [vmem:[%s3 + $0x38] sm:$0xf]
      %v438 = vld [vmem:[%s3 + $0x3c] sm:$0xf]
      %s439 = scalar_lea.vmem [#allocation2], 1
      %v440 = vld [vmem:[%s439] ss:$2 sm:$0xff]
      %s441 = scalar_lea.vmem [#allocation2], 49
      %v442 = vld [vmem:[%s441] ss:$2 sm:$0xff]
      %v443 = vpack.c.bf16 %v442, %v440
      %s444 = scalar_lea.vmem %s3, 64
      %v445 = vld [vmem:[%s444] sm:$0xf]
      %v446 = vld [vmem:[%s444 + $0x4] sm:$0xf]
      %v447 = vld [vmem:[%s444 + $0x8] sm:$0xf]
      %v448 = vld [vmem:[%s444 + $0xc] sm:$0xf]
      %v449 = vld [vmem:[%s444 + $0x10] sm:$0xf]
      %v450 = vld [vmem:[%s444 + $0x14] sm:$0xf]
      %v451 = vld [vmem:[%s444 + $0x18] sm:$0xf]
      %v452 = vld [vmem:[%s444 + $0x1c] sm:$0xf]
      %v453 = vld [vmem:[%s444 + $0x20] sm:$0xf]
      %v454 = vld [vmem:[%s444 + $0x24] sm:$0xf]
      %v455 = vld [vmem:[%s444 + $0x28] sm:$0xf]
      %v456 = vld [vmem:[%s444 + $0x2c] sm:$0xf]
      %v457 = vld [vmem:[%s444 + $0x30] sm:$0xf]
      %v458 = vld [vmem:[%s444 + $0x34] sm:$0xf]
      %v459 = vld [vmem:[%s444 + $0x38] sm:$0xf]
      %v460 = vld [vmem:[%s444 + $0x3c] sm:$0xf]
      %v477 = vunpack.c.l.b16 %v445
      %v478 = vunpack.c.l.b16 %v446
      %v479 = vunpack.c.l.b16 %v447
      %v480 = vunpack.c.l.b16 %v448
      %v481 = vunpack.c.l.b16 %v449
      %v482 = vunpack.c.l.b16 %v450
      %v483 = vunpack.c.l.b16 %v451
      %v484 = vunpack.c.l.b16 %v452
      %v485 = vunpack.c.l.b16 %v453
      %v486 = vunpack.c.l.b16 %v454
      %v487 = vunpack.c.l.b16 %v455
      %v488 = vunpack.c.l.b16 %v456
      %v489 = vunpack.c.l.b16 %v457
      %v490 = vunpack.c.l.b16 %v458
      %v491 = vunpack.c.l.b16 %v459
      %v492 = vunpack.c.l.b16 %v460
      %v493 = vpack.c.b16 %v478, %v477
      %v494 = vpack.c.b16 %v480, %v479
      %v495 = vpack.c.b16 %v482, %v481
      %v496 = vpack.c.b16 %v484, %v483
      %v497 = vpack.c.b16 %v486, %v485
      %v498 = vpack.c.b16 %v488, %v487
      %v499 = vpack.c.b16 %v490, %v489
      %v500 = vpack.c.b16 %v492, %v491
      %509 = vmatprep.subr.bf16.mxu0 0
      %510 = vmatpush1.bf16.msra.mxu0 %v493
      %511 = vmatprep.subr.bf16.mxu0 0
      %512 = vmatpush1.bf16.msra.mxu0 %v494
      %513 = vmatprep.subr.bf16.mxu0 0
      %514 = vmatpush1.bf16.msra.mxu0 %v495
      %515 = vmatprep.subr.bf16.mxu0 0
      %516 = vmatpush1.bf16.msra.mxu0 %v496
      %517 = vmatprep.subr.bf16.mxu0 0
      %518 = vmatpush1.bf16.msra.mxu0 %v497
      %519 = vmatprep.subr.bf16.mxu0 0
      %520 = vmatpush1.bf16.msra.mxu0 %v498
      %521 = vmatprep.subr.bf16.mxu0 0
      %522 = vmatpush1.bf16.msra.mxu0 %v499
      %523 = vmatprep.subr.bf16.mxu0 0
      %524 = vmatpush1.bf16.msra.mxu0 %v500
      %525 = vmatprep.subr.bf16.mxu0 0
      %526 = vmatpush1.bf16.msra.mxu0 0
      %527 = vmatprep.subr.bf16.mxu0 0
      %528 = vmatpush1.bf16.msra.mxu0 0
      %529 = vmatprep.subr.bf16.mxu0 0
      %530 = vmatpush1.bf16.msra.mxu0 0
      %531 = vmatprep.subr.bf16.mxu0 0
      %532 = vmatpush1.bf16.msra.mxu0 0
      %533 = vmatprep.subr.bf16.mxu0 0
      %534 = vmatpush1.bf16.msra.mxu0 0
      %535 = vmatprep.subr.bf16.mxu0 0
      %536 = vmatpush1.bf16.msra.mxu0 0
      %537 = vmatprep.subr.bf16.mxu0 0
      %538 = vmatpush1.bf16.msra.mxu0 0
      %539 = vmatprep.subr.bf16.mxu0 0
      %540 = vmatpush1.bf16.msra.mxu0 0
      %541 = vmatprep.mubr.bf16.mxu0 0
      %542 = vmatmul.mubr.bf16.gmra.mrb[0].mxu0 %v443
      %v543 = vpop.f32.mrb[0].mxu0
      %v544 = vadd.f32 0.0, %v543
      %v545 = vpop.f32.mrb[0].mxu0
      %v546 = vpop.f32.mrb[0].mxu0
      %v547 = vadd.f32 0.0, %v546
      %v548 = vpop.f32.mrb[0].mxu0
      %549 = vdwg.mxu0
      %v566 = vunpack.c.l.b16 %v423
      %v567 = vunpack.c.l.b16 %v424
      %v568 = vunpack.c.l.b16 %v425
      %v569 = vunpack.c.l.b16 %v426
      %v570 = vunpack.c.l.b16 %v427
      %v571 = vunpack.c.l.b16 %v428
      %v572 = vunpack.c.l.b16 %v429
      %v573 = vunpack.c.l.b16 %v430
      %v574 = vunpack.c.l.b16 %v431
      %v575 = vunpack.c.l.b16 %v432
      %v576 = vunpack.c.l.b16 %v433
      %v577 = vunpack.c.l.b16 %v434
      %v578 = vunpack.c.l.b16 %v435
      %v579 = vunpack.c.l.b16 %v436
      %v580 = vunpack.c.l.b16 %v437
      %v581 = vunpack.c.l.b16 %v438
      %v582 = vpack.c.b16 %v567, %v566
      %v583 = vpack.c.b16 %v569, %v568
      %v584 = vpack.c.b16 %v571, %v570
      %v585 = vpack.c.b16 %v573, %v572
      %v586 = vpack.c.b16 %v575, %v574
      %v587 = vpack.c.b16 %v577, %v576
      %v588 = vpack.c.b16 %v579, %v578
      %v589 = vpack.c.b16 %v581, %v580
      %598 = vmatprep.subr.bf16.mxu0 0
      %599 = vmatpush1.bf16.msra.mxu0 %v582
      %600 = vmatprep.subr.bf16.mxu0 0
      %601 = vmatpush1.bf16.msra.mxu0 %v583
      %602 = vmatprep.subr.bf16.mxu0 0
      %603 = vmatpush1.bf16.msra.mxu0 %v584
      %604 = vmatprep.subr.bf16.mxu0 0
      %605 = vmatpush1.bf16.msra.mxu0 %v585
      %606 = vmatprep.subr.bf16.mxu0 0
      %607 = vmatpush1.bf16.msra.mxu0 %v586
      %608 = vmatprep.subr.bf16.mxu0 0
      %609 = vmatpush1.bf16.msra.mxu0 %v587
      %610 = vmatprep.subr.bf16.mxu0 0
      %611 = vmatpush1.bf16.msra.mxu0 %v588
      %612 = vmatprep.subr.bf16.mxu0 0
      %613 = vmatpush1.bf16.msra.mxu0 %v589
      %614 = vmatprep.subr.bf16.mxu0 0
      %615 = vmatpush1.bf16.msra.mxu0 0
      %616 = vmatprep.subr.bf16.mxu0 0
      %617 = vmatpush1.bf16.msra.mxu0 0
      %618 = vmatprep.subr.bf16.mxu0 0
      %619 = vmatpush1.bf16.msra.mxu0 0
      %620 = vmatprep.subr.bf16.mxu0 0
      %621 = vmatpush1.bf16.msra.mxu0 0
      %622 = vmatprep.subr.bf16.mxu0 0
      %623 = vmatpush1.bf16.msra.mxu0 0
      %624 = vmatprep.subr.bf16.mxu0 0
      %625 = vmatpush1.bf16.msra.mxu0 0
      %626 = vmatprep.subr.bf16.mxu0 0
      %627 = vmatpush1.bf16.msra.mxu0 0
      %628 = vmatprep.subr.bf16.mxu0 0
      %629 = vmatpush1.bf16.msra.mxu0 0
      %630 = vmatprep.mubr.bf16.mxu0 0
      %631 = vmatmul.mubr.bf16.gmra.mrb[0].mxu0 %v422
      %v632 = vpop.f32.mrb[0].mxu0
      %v633 = vadd.f32 %v544, %v632
      %v634 = vpop.f32.mrb[0].mxu0
      %v635 = vpop.f32.mrb[0].mxu0
      %v636 = vadd.f32 %v547, %v635
      %v637 = vpop.f32.mrb[0].mxu0
      %638 = vdwg.mxu0
      %s639 = scalar_lea.vmem [#allocation2], 2
      %v640 = vld [vmem:[%s639] ss:$2 sm:$0xff]
      %s641 = scalar_lea.vmem [#allocation2], 50
      %v642 = vld [vmem:[%s641] ss:$2 sm:$0xff]
      %v643 = vpack.c.bf16 %v642, %v640
      %s644 = scalar_lea.vmem %s3, 128
      %v645 = vld [vmem:[%s644] sm:$0xf]
      %v646 = vld [vmem:[%s644 + $0x4] sm:$0xf]
      %v647 = vld [vmem:[%s644 + $0x8] sm:$0xf]
      %v648 = vld [vmem:[%s644 + $0xc] sm:$0xf]
      %v649 = vld [vmem:[%s644 + $0x10] sm:$0xf]
      %v650 = vld [vmem:[%s644 + $0x14] sm:$0xf]
      %v651 = vld [vmem:[%s644 + $0x18] sm:$0xf]
      %v652 = vld [vmem:[%s644 + $0x1c] sm:$0xf]
      %v653 = vld [vmem:[%s644 + $0x20] sm:$0xf]
      %v654 = vld [vmem:[%s644 + $0x24] sm:$0xf]
      %v655 = vld [vmem:[%s644 + $0x28] sm:$0xf]
      %v656 = vld [vmem:[%s644 + $0x2c] sm:$0xf]
      %v657 = vld [vmem:[%s644 + $0x30] sm:$0xf]
      %v658 = vld [vmem:[%s644 + $0x34] sm:$0xf]
      %v659 = vld [vmem:[%s644 + $0x38] sm:$0xf]
      %v660 = vld [vmem:[%s644 + $0x3c] sm:$0xf]
      %v677 = vunpack.c.l.b16 %v645
      %v678 = vunpack.c.l.b16 %v646
      %v679 = vunpack.c.l.b16 %v647
      %v680 = vunpack.c.l.b16 %v648
      %v681 = vunpack.c.l.b16 %v649
      %v682 = vunpack.c.l.b16 %v650
      %v683 = vunpack.c.l.b16 %v651
      %v684 = vunpack.c.l.b16 %v652
      %v685 = vunpack.c.l.b16 %v653
      %v686 = vunpack.c.l.b16 %v654
      %v687 = vunpack.c.l.b16 %v655
      %v688 = vunpack.c.l.b16 %v656
      %v689 = vunpack.c.l.b16 %v657
      %v690 = vunpack.c.l.b16 %v658
      %v691 = vunpack.c.l.b16 %v659
      %v692 = vunpack.c.l.b16 %v660
      %v693 = vpack.c.b16 %v678, %v677
      %v694 = vpack.c.b16 %v680, %v679
      %v695 = vpack.c.b16 %v682, %v681
      %v696 = vpack.c.b16 %v684, %v683
      %v697 = vpack.c.b16 %v686, %v685
      %v698 = vpack.c.b16 %v688, %v687
      %v699 = vpack.c.b16 %v690, %v689
      %v700 = vpack.c.b16 %v692, %v691
      %709 = vmatprep.subr.bf16.mxu0 0
      %710 = vmatpush1.bf16.msra.mxu0 %v693
      %711 = vmatprep.subr.bf16.mxu0 0
      %712 = vmatpush1.bf16.msra.mxu0 %v694
      %713 = vmatprep.subr.bf16.mxu0 0
      %714 = vmatpush1.bf16.msra.mxu0 %v695
      %715 = vmatprep.subr.bf16.mxu0 0
      %716 = vmatpush1.bf16.msra.mxu0 %v696
      %717 = vmatprep.subr.bf16.mxu0 0
      %718 = vmatpush1.bf16.msra.mxu0 %v697
      %719 = vmatprep.subr.bf16.mxu0 0
      %720 = vmatpush1.bf16.msra.mxu0 %v698
      %721 = vmatprep.subr.bf16.mxu0 0
      %722 = vmatpush1.bf16.msra.mxu0 %v699
      %723 = vmatprep.subr.bf16.mxu0 0
      %724 = vmatpush1.bf16.msra.mxu0 %v700
      %725 = vmatprep.subr.bf16.mxu0 0
      %726 = vmatpush1.bf16.msra.mxu0 0
      %727 = vmatprep.subr.bf16.mxu0 0
      %728 = vmatpush1.bf16.msra.mxu0 0
      %729 = vmatprep.subr.bf16.mxu0 0
      %730 = vmatpush1.bf16.msra.mxu0 0
      %731 = vmatprep.subr.bf16.mxu0 0
      %732 = vmatpush1.bf16.msra.mxu0 0
      %733 = vmatprep.subr.bf16.mxu0 0
      %734 = vmatpush1.bf16.msra.mxu0 0
      %735 = vmatprep.subr.bf16.mxu0 0
      %736 = vmatpush1.bf16.msra.mxu0 0
      %737 = vmatprep.subr.bf16.mxu0 0
      %738 = vmatpush1.bf16.msra.mxu0 0
      %739 = vmatprep.subr.bf16.mxu0 0
      %740 = vmatpush1.bf16.msra.mxu0 0
      %741 = vmatprep.mubr.bf16.mxu0 0
      %742 = vmatmul.mubr.bf16.gmra.mrb[0].mxu0 %v643
      %v743 = vpop.f32.mrb[0].mxu0
      %v744 = vadd.f32 0.0, %v743
      %v745 = vpop.f32.mrb[0].mxu0
      %v746 = vpop.f32.mrb[0].mxu0
      %v747 = vadd.f32 0.0, %v746
      %v748 = vpop.f32.mrb[0].mxu0
      %749 = vdwg.mxu0
      %v750 = vadd.f32 %v633, %v744
      %v751 = vadd.f32 %v636, %v747
      %s752 = scalar_lea.vmem [#allocation2], 24
      %v753 = vld [vmem:[%s752] ss:$2 sm:$0xff]
      %s754 = scalar_lea.vmem %s752, 48 [#allocation2]
      %v755 = vld [vmem:[%s754] ss:$2 sm:$0xff]
      %v756 = vpack.c.bf16 %v755, %v753
      %s757 = scalar_lea.vmem %s3, 192
      %v758 = vld [vmem:[%s757] sm:$0xf]
      %v759 = vld [vmem:[%s757 + $0x4] sm:$0xf]
      %v760 = vld [vmem:[%s757 + $0x8] sm:$0xf]
      %v761 = vld [vmem:[%s757 + $0xc] sm:$0xf]
      %v762 = vld [vmem:[%s757 + $0x10] sm:$0xf]
      %v763 = vld [vmem:[%s757 + $0x14] sm:$0xf]
      %v764 = vld [vmem:[%s757 + $0x18] sm:$0xf]
      %v765 = vld [vmem:[%s757 + $0x1c] sm:$0xf]
      %v766 = vld [vmem:[%s757 + $0x20] sm:$0xf]
      %v767 = vld [vmem:[%s757 + $0x24] sm:$0xf]
      %v768 = vld [vmem:[%s757 + $0x28] sm:$0xf]
      %v769 = vld [vmem:[%s757 + $0x2c] sm:$0xf]
      %v770 = vld [vmem:[%s757 + $0x30] sm:$0xf]
      %v771 = vld [vmem:[%s757 + $0x34] sm:$0xf]
      %v772 = vld [vmem:[%s757 + $0x38] sm:$0xf]
      %v773 = vld [vmem:[%s757 + $0x3c] sm:$0xf]
      %v790 = vunpack.c.l.b16 %v758
      %v791 = vunpack.c.l.b16 %v759
      %v792 = vunpack.c.l.b16 %v760
      %v793 = vunpack.c.l.b16 %v761
      %v794 = vunpack.c.l.b16 %v762
      %v795 = vunpack.c.l.b16 %v763
      %v796 = vunpack.c.l.b16 %v764
      %v797 = vunpack.c.l.b16 %v765
      %v798 = vunpack.c.l.b16 %v766
      %v799 = vunpack.c.l.b16 %v767
      %v800 = vunpack.c.l.b16 %v768
      %v801 = vunpack.c.l.b16 %v769
      %v802 = vunpack.c.l.b16 %v770
      %v803 = vunpack.c.l.b16 %v771
      %v804 = vunpack.c.l.b16 %v772
      %v805 = vunpack.c.l.b16 %v773
      %v806 = vpack.c.b16 %v791, %v790
      %v807 = vpack.c.b16 %v793, %v792
      %v808 = vpack.c.b16 %v795, %v794
      %v809 = vpack.c.b16 %v797, %v796
      %v810 = vpack.c.b16 %v799, %v798
      %v811 = vpack.c.b16 %v801, %v800
      %v812 = vpack.c.b16 %v803, %v802
      %v813 = vpack.c.b16 %v805, %v804
      %822 = vmatprep.subr.bf16.mxu0 0
      %823 = vmatpush1.bf16.msra.mxu0 %v806
      %824 = vmatprep.subr.bf16.mxu0 0
      %825 = vmatpush1.bf16.msra.mxu0 %v807
      %826 = vmatprep.subr.bf16.mxu0 0
      %827 = vmatpush1.bf16.msra.mxu0 %v808
      %828 = vmatprep.subr.bf16.mxu0 0
      %829 = vmatpush1.bf16.msra.mxu0 %v809
      %830 = vmatprep.subr.bf16.mxu0 0
      %831 = vmatpush1.bf16.msra.mxu0 %v810
      %832 = vmatprep.subr.bf16.mxu0 0
      %833 = vmatpush1.bf16.msra.mxu0 %v811
      %834 = vmatprep.subr.bf16.mxu0 0
      %835 = vmatpush1.bf16.msra.mxu0 %v812
      %836 = vmatprep.subr.bf16.mxu0 0
      %837 = vmatpush1.bf16.msra.mxu0 %v813
      %838 = vmatprep.subr.bf16.mxu0 0
      %839 = vmatpush1.bf16.msra.mxu0 0
      %840 = vmatprep.subr.bf16.mxu0 0
      %841 = vmatpush1.bf16.msra.mxu0 0
      %842 = vmatprep.subr.bf16.mxu0 0
      %843 = vmatpush1.bf16.msra.mxu0 0
      %844 = vmatprep.subr.bf16.mxu0 0
      %845 = vmatpush1.bf16.msra.mxu0 0
      %846 = vmatprep.subr.bf16.mxu0 0
      %847 = vmatpush1.bf16.msra.mxu0 0
      %848 = vmatprep.subr.bf16.mxu0 0
      %849 = vmatpush1.bf16.msra.mxu0 0
      %850 = vmatprep.subr.bf16.mxu0 0
      %851 = vmatpush1.bf16.msra.mxu0 0
      %852 = vmatprep.subr.bf16.mxu0 0
      %853 = vmatpush1.bf16.msra.mxu0 0
      %854 = vmatprep.mubr.bf16.mxu0 0
      %855 = vmatmul.mubr.bf16.gmra.mrb[0].mxu0 %v756
      %v856 = vpop.f32.mrb[0].mxu0
      %v857 = vadd.f32 0.0, %v856
      %v858 = vpop.f32.mrb[0].mxu0
      %v859 = vpop.f32.mrb[0].mxu0
      %v860 = vadd.f32 0.0, %v859
      %v861 = vpop.f32.mrb[0].mxu0
      %862 = vdwg.mxu0
      %v863 = vadd.f32 %v750, %v857
      %v864 = vadd.f32 %v751, %v860
      %s865 = scalar_lea.vmem %s752, 1 [#allocation2]
      %v866 = vld [vmem:[%s865] ss:$2 sm:$0xff]
      %s867 = scalar_lea.vmem %s752, 49 [#allocation2]
      %v868 = vld [vmem:[%s867] ss:$2 sm:$0xff]
      %v869 = vpack.c.bf16 %v868, %v866
      %s870 = scalar_lea.vmem %s3, 256
      %v871 = vld [vmem:[%s870] sm:$0xf]
      %v872 = vld [vmem:[%s870 + $0x4] sm:$0xf]
      %v873 = vld [vmem:[%s870 + $0x8] sm:$0xf]
      %v874 = vld [vmem:[%s870 + $0xc] sm:$0xf]
      %v875 = vld [vmem:[%s870 + $0x10] sm:$0xf]
      %v876 = vld [vmem:[%s870 + $0x14] sm:$0xf]
      %v877 = vld [vmem:[%s870 + $0x18] sm:$0xf]
      %v878 = vld [vmem:[%s870 + $0x1c] sm:$0xf]
      %v879 = vld [vmem:[%s870 + $0x20] sm:$0xf]
      %v880 = vld [vmem:[%s870 + $0x24] sm:$0xf]
      %v881 = vld [vmem:[%s870 + $0x28] sm:$0xf]
      %v882 = vld [vmem:[%s870 + $0x2c] sm:$0xf]
      %v883 = vld [vmem:[%s870 + $0x30] sm:$0xf]
      %v884 = vld [vmem:[%s870 + $0x34] sm:$0xf]
      %v885 = vld [vmem:[%s870 + $0x38] sm:$0xf]
      %v886 = vld [vmem:[%s870 + $0x3c] sm:$0xf]
      %v903 = vunpack.c.l.b16 %v871
      %v904 = vunpack.c.l.b16 %v872
      %v905 = vunpack.c.l.b16 %v873
      %v906 = vunpack.c.l.b16 %v874
      %v907 = vunpack.c.l.b16 %v875
      %v908 = vunpack.c.l.b16 %v876
      %v909 = vunpack.c.l.b16 %v877
      %v910 = vunpack.c.l.b16 %v878
      %v911 = vunpack.c.l.b16 %v879
      %v912 = vunpack.c.l.b16 %v880
      %v913 = vunpack.c.l.b16 %v881
      %v914 = vunpack.c.l.b16 %v882
      %v915 = vunpack.c.l.b16 %v883
      %v916 = vunpack.c.l.b16 %v884
      %v917 = vunpack.c.l.b16 %v885
      %v918 = vunpack.c.l.b16 %v886
      %v919 = vpack.c.b16 %v904, %v903
      %v920 = vpack.c.b16 %v906, %v905
      %v921 = vpack.c.b16 %v908, %v907
      %v922 = vpack.c.b16 %v910, %v909
      %v923 = vpack.c.b16 %v912, %v911
      %v924 = vpack.c.b16 %v914, %v913
      %v925 = vpack.c.b16 %v916, %v915
      %v926 = vpack.c.b16 %v918, %v917
      %935 = vmatprep.subr.bf16.mxu0 0
      %936 = vmatpush1.bf16.msra.mxu0 %v919
      %937 = vmatprep.subr.bf16.mxu0 0
      %938 = vmatpush1.bf16.msra.mxu0 %v920
      %939 = vmatprep.subr.bf16.mxu0 0
      %940 = vmatpush1.bf16.msra.mxu0 %v921
      %941 = vmatprep.subr.bf16.mxu0 0
      %942 = vmatpush1.bf16.msra.mxu0 %v922
      %943 = vmatprep.subr.bf16.mxu0 0
      %944 = vmatpush1.bf16.msra.mxu0 %v923
      %945 = vmatprep.subr.bf16.mxu0 0
      %946 = vmatpush1.bf16.msra.mxu0 %v924
      %947 = vmatprep.subr.bf16.mxu0 0
      %948 = vmatpush1.bf16.msra.mxu0 %v925
      %949 = vmatprep.subr.bf16.mxu0 0
      %950 = vmatpush1.bf16.msra.mxu0 %v926
      %951 = vmatprep.subr.bf16.mxu0 0
      %952 = vmatpush1.bf16.msra.mxu0 0
      %953 = vmatprep.subr.bf16.mxu0 0
      %954 = vmatpush1.bf16.msra.mxu0 0
      %955 = vmatprep.subr.bf16.mxu0 0
      %956 = vmatpush1.bf16.msra.mxu0 0
      %957 = vmatprep.subr.bf16.mxu0 0
      %958 = vmatpush1.bf16.msra.mxu0 0
      %959 = vmatprep.subr.bf16.mxu0 0
      %960 = vmatpush1.bf16.msra.mxu0 0
      %961 = vmatprep.subr.bf16.mxu0 0
      %962 = vmatpush1.bf16.msra.mxu0 0
      %963 = vmatprep.subr.bf16.mxu0 0
      %964 = vmatpush1.bf16.msra.mxu0 0
      %965 = vmatprep.subr.bf16.mxu0 0
      %966 = vmatpush1.bf16.msra.mxu0 0
      %967 = vmatprep.mubr.bf16.mxu0 0
      %968 = vmatmul.mubr.bf16.gmra.mrb[0].mxu0 %v869
      %v969 = vpop.f32.mrb[0].mxu0
      %v970 = vadd.f32 0.0, %v969
      %v971 = vpop.f32.mrb[0].mxu0
      %v972 = vpop.f32.mrb[0].mxu0
      %v973 = vadd.f32 0.0, %v972
      %v974 = vpop.f32.mrb[0].mxu0
      %975 = vdwg.mxu0
      %v976 = vadd.f32 %v863, %v970
      %v977 = vadd.f32 %v864, %v973
      %s978 = scalar_lea.vmem %s752, 2 [#allocation2]
      %v979 = vld [vmem:[%s978] ss:$2 sm:$0xff]
      %s980 = scalar_lea.vmem %s752, 50 [#allocation2]
      %v981 = vld [vmem:[%s980] ss:$2 sm:$0xff]
      %v982 = vpack.c.bf16 %v981, %v979
      %s983 = scalar_lea.vmem %s3, 320
      %v984 = vld [vmem:[%s983] sm:$0xf]
      %v985 = vld [vmem:[%s983 + $0x4] sm:$0xf]
      %v986 = vld [vmem:[%s983 + $0x8] sm:$0xf]
      %v987 = vld [vmem:[%s983 + $0xc] sm:$0xf]
      %v988 = vld [vmem:[%s983 + $0x10] sm:$0xf]
      %v989 = vld [vmem:[%s983 + $0x14] sm:$0xf]
      %v990 = vld [vmem:[%s983 + $0x18] sm:$0xf]
      %v991 = vld [vmem:[%s983 + $0x1c] sm:$0xf]
      %v992 = vld [vmem:[%s983 + $0x20] sm:$0xf]
      %v993 = vld [vmem:[%s983 + $0x24] sm:$0xf]
      %v994 = vld [vmem:[%s983 + $0x28] sm:$0xf]
      %v995 = vld [vmem:[%s983 + $0x2c] sm:$0xf]
      %v996 = vld [vmem:[%s983 + $0x30] sm:$0xf]
      %v997 = vld [vmem:[%s983 + $0x34] sm:$0xf]
      %v998 = vld [vmem:[%s983 + $0x38] sm:$0xf]
      %v999 = vld [vmem:[%s983 + $0x3c] sm:$0xf]
      %v1016 = vunpack.c.l.b16 %v984
      %v1017 = vunpack.c.l.b16 %v985
      %v1018 = vunpack.c.l.b16 %v986
      %v1019 = vunpack.c.l.b16 %v987
      %v1020 = vunpack.c.l.b16 %v988
      %v1021 = vunpack.c.l.b16 %v989
      %v1022 = vunpack.c.l.b16 %v990
      %v1023 = vunpack.c.l.b16 %v991
      %v1024 = vunpack.c.l.b16 %v992
      %v1025 = vunpack.c.l.b16 %v993
      %v1026 = vunpack.c.l.b16 %v994
      %v1027 = vunpack.c.l.b16 %v995
      %v1028 = vunpack.c.l.b16 %v996
      %v1029 = vunpack.c.l.b16 %v997
      %v1030 = vunpack.c.l.b16 %v998
      %v1031 = vunpack.c.l.b16 %v999
      %v1032 = vpack.c.b16 %v1017, %v1016
      %v1033 = vpack.c.b16 %v1019, %v1018
      %v1034 = vpack.c.b16 %v1021, %v1020
      %v1035 = vpack.c.b16 %v1023, %v1022
      %v1036 = vpack.c.b16 %v1025, %v1024
      %v1037 = vpack.c.b16 %v1027, %v1026
      %v1038 = vpack.c.b16 %v1029, %v1028
      %v1039 = vpack.c.b16 %v1031, %v1030
      %1048 = vmatprep.subr.bf16.mxu0 0
      %1049 = vmatpush1.bf16.msra.mxu0 %v1032
      %1050 = vmatprep.subr.bf16.mxu0 0
      %1051 = vmatpush1.bf16.msra.mxu0 %v1033
      %1052 = vmatprep.subr.bf16.mxu0 0
      %1053 = vmatpush1.bf16.msra.mxu0 %v1034
      %1054 = vmatprep.subr.bf16.mxu0 0
      %1055 = vmatpush1.bf16.msra.mxu0 %v1035
      %1056 = vmatprep.subr.bf16.mxu0 0
      %1057 = vmatpush1.bf16.msra.mxu0 %v1036
      %1058 = vmatprep.subr.bf16.mxu0 0
      %1059 = vmatpush1.bf16.msra.mxu0 %v1037
      %1060 = vmatprep.subr.bf16.mxu0 0
      %1061 = vmatpush1.bf16.msra.mxu0 %v1038
      %1062 = vmatprep.subr.bf16.mxu0 0
      %1063 = vmatpush1.bf16.msra.mxu0 %v1039
      %1064 = vmatprep.subr.bf16.mxu0 0
      %1065 = vmatpush1.bf16.msra.mxu0 0
      %1066 = vmatprep.subr.bf16.mxu0 0
      %1067 = vmatpush1.bf16.msra.mxu0 0
      %1068 = vmatprep.subr.bf16.mxu0 0
      %1069 = vmatpush1.bf16.msra.mxu0 0
      %1070 = vmatprep.subr.bf16.mxu0 0
      %1071 = vmatpush1.bf16.msra.mxu0 0
      %1072 = vmatprep.subr.bf16.mxu0 0
      %1073 = vmatpush1.bf16.msra.mxu0 0
      %1074 = vmatprep.subr.bf16.mxu0 0
      %1075 = vmatpush1.bf16.msra.mxu0 0
      %1076 = vmatprep.subr.bf16.mxu0 0
      %1077 = vmatpush1.bf16.msra.mxu0 0
      %1078 = vmatprep.subr.bf16.mxu0 0
      %1079 = vmatpush1.bf16.msra.mxu0 0
      %1080 = vmatprep.mubr.bf16.mxu0 0
      %1081 = vmatmul.mubr.bf16.gmra.mrb[0].mxu0 %v982
      %v1082 = vpop.f32.mrb[0].mxu0
      %v1083 = vadd.f32 0.0, %v1082
      %v1084 = vpop.f32.mrb[0].mxu0
      %v1085 = vpop.f32.mrb[0].mxu0
      %v1086 = vadd.f32 0.0, %v1085
      %v1087 = vpop.f32.mrb[0].mxu0
      %1088 = vdwg.mxu0
      %v1089 = vadd.f32 %v976, %v1083
      %v1090 = vadd.f32 %v977, %v1086
      %s1091 = scalar_lea.vmem [#allocation2], 48
      %v1092 = vld [vmem:[%s1091] ss:$2 sm:$0xff]
      %s1093 = scalar_lea.vmem %s1091, 48 [#allocation2]
      %v1094 = vld [vmem:[%s1093] ss:$2 sm:$0xff]
      %v1095 = vpack.c.bf16 %v1094, %v1092
      %s1096 = scalar_lea.vmem %s3, 384
      %v1097 = vld [vmem:[%s1096] sm:$0xf]
      %v1098 = vld [vmem:[%s1096 + $0x4] sm:$0xf]
      %v1099 = vld [vmem:[%s1096 + $0x8] sm:$0xf]
      %v1100 = vld [vmem:[%s1096 + $0xc] sm:$0xf]
      %v1101 = vld [vmem:[%s1096 + $0x10] sm:$0xf]
      %v1102 = vld [vmem:[%s1096 + $0x14] sm:$0xf]
      %v1103 = vld [vmem:[%s1096 + $0x18] sm:$0xf]
      %v1104 = vld [vmem:[%s1096 + $0x1c] sm:$0xf]
      %v1105 = vld [vmem:[%s1096 + $0x20] sm:$0xf]
      %v1106 = vld [vmem:[%s1096 + $0x24] sm:$0xf]
      %v1107 = vld [vmem:[%s1096 + $0x28] sm:$0xf]
      %v1108 = vld [vmem:[%s1096 + $0x2c] sm:$0xf]
      %v1109 = vld [vmem:[%s1096 + $0x30] sm:$0xf]
      %v1110 = vld [vmem:[%s1096 + $0x34] sm:$0xf]
      %v1111 = vld [vmem:[%s1096 + $0x38] sm:$0xf]
      %v1112 = vld [vmem:[%s1096 + $0x3c] sm:$0xf]
      %v1129 = vunpack.c.l.b16 %v1097
      %v1130 = vunpack.c.l.b16 %v1098
      %v1131 = vunpack.c.l.b16 %v1099
      %v1132 = vunpack.c.l.b16 %v1100
      %v1133 = vunpack.c.l.b16 %v1101
      %v1134 = vunpack.c.l.b16 %v1102
      %v1135 = vunpack.c.l.b16 %v1103
      %v1136 = vunpack.c.l.b16 %v1104
      %v1137 = vunpack.c.l.b16 %v1105
      %v1138 = vunpack.c.l.b16 %v1106
      %v1139 = vunpack.c.l.b16 %v1107
      %v1140 = vunpack.c.l.b16 %v1108
      %v1141 = vunpack.c.l.b16 %v1109
      %v1142 = vunpack.c.l.b16 %v1110
      %v1143 = vunpack.c.l.b16 %v1111
      %v1144 = vunpack.c.l.b16 %v1112
      %v1145 = vpack.c.b16 %v1130, %v1129
      %v1146 = vpack.c.b16 %v1132, %v1131
      %v1147 = vpack.c.b16 %v1134, %v1133
      %v1148 = vpack.c.b16 %v1136, %v1135
      %v1149 = vpack.c.b16 %v1138, %v1137
      %v1150 = vpack.c.b16 %v1140, %v1139
      %v1151 = vpack.c.b16 %v1142, %v1141
      %v1152 = vpack.c.b16 %v1144, %v1143
      %1161 = vmatprep.subr.bf16.mxu0 0
      %1162 = vmatpush1.bf16.msra.mxu0 %v1145
      %1163 = vmatprep.subr.bf16.mxu0 0
      %1164 = vmatpush1.bf16.msra.mxu0 %v1146
      %1165 = vmatprep.subr.bf16.mxu0 0
      %1166 = vmatpush1.bf16.msra.mxu0 %v1147
      %1167 = vmatprep.subr.bf16.mxu0 0
      %1168 = vmatpush1.bf16.msra.mxu0 %v1148
      %1169 = vmatprep.subr.bf16.mxu0 0
      %1170 = vmatpush1.bf16.msra.mxu0 %v1149
      %1171 = vmatprep.subr.bf16.mxu0 0
      %1172 = vmatpush1.bf16.msra.mxu0 %v1150
      %1173 = vmatprep.subr.bf16.mxu0 0
      %1174 = vmatpush1.bf16.msra.mxu0 %v1151
      %1175 = vmatprep.subr.bf16.mxu0 0
      %1176 = vmatpush1.bf16.msra.mxu0 %v1152
      %1177 = vmatprep.subr.bf16.mxu0 0
      %1178 = vmatpush1.bf16.msra.mxu0 0
      %1179 = vmatprep.subr.bf16.mxu0 0
      %1180 = vmatpush1.bf16.msra.mxu0 0
      %1181 = vmatprep.subr.bf16.mxu0 0
      %1182 = vmatpush1.bf16.msra.mxu0 0
      %1183 = vmatprep.subr.bf16.mxu0 0
      %1184 = vmatpush1.bf16.msra.mxu0 0
      %1185 = vmatprep.subr.bf16.mxu0 0
      %1186 = vmatpush1.bf16.msra.mxu0 0
      %1187 = vmatprep.subr.bf16.mxu0 0
      %1188 = vmatpush1.bf16.msra.mxu0 0
      %1189 = vmatprep.subr.bf16.mxu0 0
      %1190 = vmatpush1.bf16.msra.mxu0 0
      %1191 = vmatprep.subr.bf16.mxu0 0
      %1192 = vmatpush1.bf16.msra.mxu0 0
      %1193 = vmatprep.mubr.bf16.mxu0 0
      %1194 = vmatmul.mubr.bf16.gmra.mrb[0].mxu0 %v1095
      %v1195 = vpop.f32.mrb[0].mxu0
      %v1196 = vadd.f32 0.0, %v1195
      %v1197 = vpop.f32.mrb[0].mxu0
      %v1198 = vpop.f32.mrb[0].mxu0
      %v1199 = vadd.f32 0.0, %v1198
      %v1200 = vpop.f32.mrb[0].mxu0
      %1201 = vdwg.mxu0
      %v1202 = vadd.f32 %v1089, %v1196
      %v1203 = vadd.f32 %v1090, %v1199
      %s1204 = scalar_lea.vmem %s1091, 1 [#allocation2]
      %v1205 = vld [vmem:[%s1204] ss:$2 sm:$0xff]
      %s1206 = scalar_lea.vmem %s1091, 49 [#allocation2]
      %v1207 = vld [vmem:[%s1206] ss:$2 sm:$0xff]
      %v1208 = vpack.c.bf16 %v1207, %v1205
      %s1209 = scalar_lea.vmem %s3, 448
      %v1210 = vld [vmem:[%s1209] sm:$0xf]
      %v1211 = vld [vmem:[%s1209 + $0x4] sm:$0xf]
      %v1212 = vld [vmem:[%s1209 + $0x8] sm:$0xf]
      %v1213 = vld [vmem:[%s1209 + $0xc] sm:$0xf]
      %v1214 = vld [vmem:[%s1209 + $0x10] sm:$0xf]
      %v1215 = vld [vmem:[%s1209 + $0x14] sm:$0xf]
      %v1216 = vld [vmem:[%s1209 + $0x18] sm:$0xf]
      %v1217 = vld [vmem:[%s1209 + $0x1c] sm:$0xf]
      %v1218 = vld [vmem:[%s1209 + $0x20] sm:$0xf]
      %v1219 = vld [vmem:[%s1209 + $0x24] sm:$0xf]
      %v1220 = vld [vmem:[%s1209 + $0x28] sm:$0xf]
      %v1221 = vld [vmem:[%s1209 + $0x2c] sm:$0xf]
      %v1222 = vld [vmem:[%s1209 + $0x30] sm:$0xf]
      %v1223 = vld [vmem:[%s1209 + $0x34] sm:$0xf]
      %v1224 = vld [vmem:[%s1209 + $0x38] sm:$0xf]
      %v1225 = vld [vmem:[%s1209 + $0x3c] sm:$0xf]
      %v1242 = vunpack.c.l.b16 %v1210
      %v1243 = vunpack.c.l.b16 %v1211
      %v1244 = vunpack.c.l.b16 %v1212
      %v1245 = vunpack.c.l.b16 %v1213
      %v1246 = vunpack.c.l.b16 %v1214
      %v1247 = vunpack.c.l.b16 %v1215
      %v1248 = vunpack.c.l.b16 %v1216
      %v1249 = vunpack.c.l.b16 %v1217
      %v1250 = vunpack.c.l.b16 %v1218
      %v1251 = vunpack.c.l.b16 %v1219
      %v1252 = vunpack.c.l.b16 %v1220
      %v1253 = vunpack.c.l.b16 %v1221
      %v1254 = vunpack.c.l.b16 %v1222
      %v1255 = vunpack.c.l.b16 %v1223
      %v1256 = vunpack.c.l.b16 %v1224
      %v1257 = vunpack.c.l.b16 %v1225
      %v1258 = vpack.c.b16 %v1243, %v1242
      %v1259 = vpack.c.b16 %v1245, %v1244
      %v1260 = vpack.c.b16 %v1247, %v1246
      %v1261 = vpack.c.b16 %v1249, %v1248
      %v1262 = vpack.c.b16 %v1251, %v1250
      %v1263 = vpack.c.b16 %v1253, %v1252
      %v1264 = vpack.c.b16 %v1255, %v1254
      %v1265 = vpack.c.b16 %v1257, %v1256
      %1274 = vmatprep.subr.bf16.mxu0 0
      %1275 = vmatpush1.bf16.msra.mxu0 %v1258
      %1276 = vmatprep.subr.bf16.mxu0 0
      %1277 = vmatpush1.bf16.msra.mxu0 %v1259
      %1278 = vmatprep.subr.bf16.mxu0 0
      %1279 = vmatpush1.bf16.msra.mxu0 %v1260
      %1280 = vmatprep.subr.bf16.mxu0 0
      %1281 = vmatpush1.bf16.msra.mxu0 %v1261
      %1282 = vmatprep.subr.bf16.mxu0 0
      %1283 = vmatpush1.bf16.msra.mxu0 %v1262
      %1284 = vmatprep.subr.bf16.mxu0 0
      %1285 = vmatpush1.bf16.msra.mxu0 %v1263
      %1286 = vmatprep.subr.bf16.mxu0 0
      %1287 = vmatpush1.bf16.msra.mxu0 %v1264
      %1288 = vmatprep.subr.bf16.mxu0 0
      %1289 = vmatpush1.bf16.msra.mxu0 %v1265
      %1290 = vmatprep.subr.bf16.mxu0 0
      %1291 = vmatpush1.bf16.msra.mxu0 0
      %1292 = vmatprep.subr.bf16.mxu0 0
      %1293 = vmatpush1.bf16.msra.mxu0 0
      %1294 = vmatprep.subr.bf16.mxu0 0
      %1295 = vmatpush1.bf16.msra.mxu0 0
      %1296 = vmatprep.subr.bf16.mxu0 0
      %1297 = vmatpush1.bf16.msra.mxu0 0
      %1298 = vmatprep.subr.bf16.mxu0 0
      %1299 = vmatpush1.bf16.msra.mxu0 0
      %1300 = vmatprep.subr.bf16.mxu0 0
      %1301 = vmatpush1.bf16.msra.mxu0 0
      %1302 = vmatprep.subr.bf16.mxu0 0
      %1303 = vmatpush1.bf16.msra.mxu0 0
      %1304 = vmatprep.subr.bf16.mxu0 0
      %1305 = vmatpush1.bf16.msra.mxu0 0
      %1306 = vmatprep.mubr.bf16.mxu0 0
      %1307 = vmatmul.mubr.bf16.gmra.mrb[0].mxu0 %v1208
      %v1308 = vpop.f32.mrb[0].mxu0
      %v1309 = vadd.f32 0.0, %v1308
      %v1310 = vpop.f32.mrb[0].mxu0
      %v1311 = vpop.f32.mrb[0].mxu0
      %v1312 = vadd.f32 0.0, %v1311
      %v1313 = vpop.f32.mrb[0].mxu0
      %1314 = vdwg.mxu0
      %v1315 = vadd.f32 %v1202, %v1309
      %v1316 = vadd.f32 %v1203, %v1312
      %s1317 = scalar_lea.vmem %s1091, 2 [#allocation2]
      %v1318 = vld [vmem:[%s1317] ss:$2 sm:$0xff]
      %s1319 = scalar_lea.vmem %s1091, 50 [#allocation2]
      %v1320 = vld [vmem:[%s1319] ss:$2 sm:$0xff]
      %v1321 = vpack.c.bf16 %v1320, %v1318
      %s1322 = scalar_lea.vmem %s3, 512
      %v1323 = vld [vmem:[%s1322] sm:$0xf]
      %v1324 = vld [vmem:[%s1322 + $0x4] sm:$0xf]
      %v1325 = vld [vmem:[%s1322 + $0x8] sm:$0xf]
      %v1326 = vld [vmem:[%s1322 + $0xc] sm:$0xf]
      %v1327 = vld [vmem:[%s1322 + $0x10] sm:$0xf]
      %v1328 = vld [vmem:[%s1322 + $0x14] sm:$0xf]
      %v1329 = vld [vmem:[%s1322 + $0x18] sm:$0xf]
      %v1330 = vld [vmem:[%s1322 + $0x1c] sm:$0xf]
      %v1331 = vld [vmem:[%s1322 + $0x20] sm:$0xf]
      %v1332 = vld [vmem:[%s1322 + $0x24] sm:$0xf]
      %v1333 = vld [vmem:[%s1322 + $0x28] sm:$0xf]
      %v1334 = vld [vmem:[%s1322 + $0x2c] sm:$0xf]
      %v1335 = vld [vmem:[%s1322 + $0x30] sm:$0xf]
      %v1336 = vld [vmem:[%s1322 + $0x34] sm:$0xf]
      %v1337 = vld [vmem:[%s1322 + $0x38] sm:$0xf]
      %v1338 = vld [vmem:[%s1322 + $0x3c] sm:$0xf]
      %v1355 = vunpack.c.l.b16 %v1323
      %v1356 = vunpack.c.l.b16 %v1324
      %v1357 = vunpack.c.l.b16 %v1325
      %v1358 = vunpack.c.l.b16 %v1326
      %v1359 = vunpack.c.l.b16 %v1327
      %v1360 = vunpack.c.l.b16 %v1328
      %v1361 = vunpack.c.l.b16 %v1329
      %v1362 = vunpack.c.l.b16 %v1330
      %v1363 = vunpack.c.l.b16 %v1331
      %v1364 = vunpack.c.l.b16 %v1332
      %v1365 = vunpack.c.l.b16 %v1333
      %v1366 = vunpack.c.l.b16 %v1334
      %v1367 = vunpack.c.l.b16 %v1335
      %v1368 = vunpack.c.l.b16 %v1336
      %v1369 = vunpack.c.l.b16 %v1337
      %v1370 = vunpack.c.l.b16 %v1338
      %v1371 = vpack.c.b16 %v1356, %v1355
      %v1372 = vpack.c.b16 %v1358, %v1357
      %v1373 = vpack.c.b16 %v1360, %v1359
      %v1374 = vpack.c.b16 %v1362, %v1361
      %v1375 = vpack.c.b16 %v1364, %v1363
      %v1376 = vpack.c.b16 %v1366, %v1365
      %v1377 = vpack.c.b16 %v1368, %v1367
      %v1378 = vpack.c.b16 %v1370, %v1369
      %1387 = vmatprep.subr.bf16.mxu0 0
      %1388 = vmatpush1.bf16.msra.mxu0 %v1371
      %1389 = vmatprep.subr.bf16.mxu0 0
      %1390 = vmatpush1.bf16.msra.mxu0 %v1372
      %1391 = vmatprep.subr.bf16.mxu0 0
      %1392 = vmatpush1.bf16.msra.mxu0 %v1373
      %1393 = vmatprep.subr.bf16.mxu0 0
      %1394 = vmatpush1.bf16.msra.mxu0 %v1374
      %1395 = vmatprep.subr.bf16.mxu0 0
      %1396 = vmatpush1.bf16.msra.mxu0 %v1375
      %1397 = vmatprep.subr.bf16.mxu0 0
      %1398 = vmatpush1.bf16.msra.mxu0 %v1376
      %1399 = vmatprep.subr.bf16.mxu0 0
      %1400 = vmatpush1.bf16.msra.mxu0 %v1377
      %1401 = vmatprep.subr.bf16.mxu0 0
      %1402 = vmatpush1.bf16.msra.mxu0 %v1378
      %1403 = vmatprep.subr.bf16.mxu0 0
      %1404 = vmatpush1.bf16.msra.mxu0 0
      %1405 = vmatprep.subr.bf16.mxu0 0
      %1406 = vmatpush1.bf16.msra.mxu0 0
      %1407 = vmatprep.subr.bf16.mxu0 0
      %1408 = vmatpush1.bf16.msra.mxu0 0
      %1409 = vmatprep.subr.bf16.mxu0 0
      %1410 = vmatpush1.bf16.msra.mxu0 0
      %1411 = vmatprep.subr.bf16.mxu0 0
      %1412 = vmatpush1.bf16.msra.mxu0 0
      %1413 = vmatprep.subr.bf16.mxu0 0
      %1414 = vmatpush1.bf16.msra.mxu0 0
      %1415 = vmatprep.subr.bf16.mxu0 0
      %1416 = vmatpush1.bf16.msra.mxu0 0
      %1417 = vmatprep.subr.bf16.mxu0 0
      %1418 = vmatpush1.bf16.msra.mxu0 0
      %1419 = vmatprep.mubr.bf16.mxu0 0
      %1420 = vmatmul.mubr.bf16.gmra.mrb[0].mxu0 %v1321
      %v1421 = vpop.f32.mrb[0].mxu0
      %v1422 = vadd.f32 0.0, %v1421
      %v1423 = vpop.f32.mrb[0].mxu0
      %v1424 = vpop.f32.mrb[0].mxu0
      %v1425 = vadd.f32 0.0, %v1424
      %v1426 = vpop.f32.mrb[0].mxu0
      %1427 = vdwg.mxu0
      %v1428 = vadd.f32 %v1315, %v1422
      %v1429 = vadd.f32 %v1316, %v1425
      %v1430 = vpack.c.bf16 %v1428, %v1428
      %v1431 = vpack.c.bf16 %v1429, %v1429
      %1432 = vst [vmem:[%s219] sm:$0xf] %v1430
      %1433 = vst [vmem:[%s219 + $0x4] sm:$0xf] %v1431
      %s1434 = smul.u32 2, %s20
      %p1435 = scmp.lt.s32.totalorder %s19, 1
      %s1436 = scalar_select %p1435, %s19, 1
      %p1437 = scmp.lt.s32.totalorder %s1434, 7
      %s1438 = scalar_select %p1437, %s1434, 7
      %s1439 = smul.addr %s1436, 8
      %s1440 = sadd.s32 %s1438, %s1439
      %s1441 = smul.addr %s1440, 4
      %s1442 = scalar_lea.vmem %s4, %s1441
      // Predicated region
      $region37: #{basic_block_forward.2} parent=35 // pred_check
        %p1443 = pneg %p136
      $region38: #{basic_block_forward.2} parent=35 // pred_check_branch
        %1445 = sbr.rel (%p1443) target = $region40
      $region39: #{basic_block_forward.2} parent=35 // pred_region
        %s1446 = smul.u32 2, %s20
      $region40: #{basic_block_forward.2} parent=35 // pred_fallthru
        _
    $region36: #{basic_block_forward.2} parent=5 // pred_fallthru
      _
    %p1447 = scmp.le.s32.totalorder 2, %s10
    // Predicated region
    $region41: #{basic_block_forward.2} parent=5 // pred_check
      %p1448 = pneg %p1447
    $region42: #{basic_block_forward.2} parent=5 // pred_check_branch
      %1450 = sbr.rel (%p1448) target = $region44
    $region43: #{basic_block_forward.2} parent=5 // pred_region
      %s1451 = ssub.s32 %s10, 2
      // Predicated region
      $region45: #{basic_block_forward.2} parent=43 // pred_check
        %p1452 = pneg %p142
      $region46: #{basic_block_forward.2} parent=43 // pred_check_branch
        %1454 = sbr.rel (%p1452) target = $region48
      $region47: #{basic_block_forward.2} parent=43 // pred_region
        %s1455 = smul.u32 2, %s22
        %p1456 = scmp.lt.s32.totalorder %s21, 1
        %s1457 = scalar_select %p1456, %s21, 1
        %p1458 = scmp.lt.s32.totalorder %s1455, 7
        %s1459 = scalar_select %p1458, %s1455, 7
        %s1460 = smul.addr %s1457, 8
        %s1461 = sadd.s32 %s1459, %s1460
        %s1462 = smul.addr %s1461, 4
        %s1463 = scalar_lea.vmem %s4, %s1462
      $region48: #{basic_block_forward.2} parent=43 // pred_fallthru
        _
    $region44: #{basic_block_forward.2} parent=5 // pred_fallthru
      _
  $region6: #{basic_block_forward.2} parent=0 // loop_footer
    %s14 = sadd.s32 1, %s10
  $region7: #{basic_block_forward.2} parent=0 // loop_footer_branch
    %9 = sbr.rel target = $region3
  $region8: #{basic_block_forward.2} parent=0 // loop_exit
    _

// kernel: basic_block_forward.3
$region0: #{basic_block_forward.3}
  #allocation0 [shape = 'u32[]', space=smem, size = 0x4, offset = 0x4, fixed_abs, tag = 'smem constant byte address 0x4 - core index']
  #allocation1 [shape = 'u32[144,128]{1,0:T(1,128)}', space=vmem, size = 0x12000, scoped, tag = 'internal scratch']
  #allocation2 [shape = 'f32[4,10,128]{2,1,0:T(8,128)}', space=vmem, size = 0x8000, scoped, tag = 'scratch operand']
  %s0 = inlined_call_operand.vmem [shape: bf16[2,10,10,128], index: 0, kind: input, shape index: {}]
  %s1 = inlined_call_operand.vmem [shape: f32[2,16,16,128], index: 1, kind: input, shape index: {}]
  %s2 = inlined_call_operand.vmem [shape: f32[1,1,128], index: 2, kind: input, shape index: {}]
  %s3 = inlined_call_operand.vmem [shape: f32[1,1,128], index: 3, kind: input, shape index: {}]
  %s4 = inlined_call_operand.vmem [shape: f32[1,1,128], index: 4, kind: input, shape index: {}]
  %s5 = inlined_call_operand.vmem [shape: f32[1,1,128], index: 5, kind: input, shape index: {}]
  %s6 = inlined_call_operand.vmem [shape: bf16[9,128,128], index: 6, kind: input, shape index: {}]
  %s7 = inlined_call_operand.vmem [shape: bf16[128,128], index: 7, kind: input, shape index: {}]
  %s8 = inlined_call_operand.vmem [shape: f32[2,8,8,128], index: 8, kind: output, shape index: {}]
  %s9 = sld [smem:[#allocation0]]
  $region65: #{basic_block_forward.3} parent=0
    _
  %s11 = ssub.s32 1, %s9
  %s12 = scalar_select 0, %s11, %s9
  loop: start=0, step=1, limit=10
  $region2: #{basic_block_forward.3} parent=0 // loop_pre_header
    _
  $region3: #{basic_block_forward.3} parent=0 // loop_header
    %s14 = sphi 0, %s18
    %p15 = scmp.ge.s32.totalorder %s14, 10
    %s21 = sphi 0, %s33
    %s22 = sphi 0, %s29
    %s23 = sphi 0, %s21
    %s24 = sphi 0, %s22
    %s25 = sphi 0, %s23
    %s26 = sphi 0, %s24
    %s36 = sphi 0, %s38
    %s39 = sphi 0, %s36
    %s40 = sphi 0, %s39
    %s56 = sphi 0, %s40
    %s62 = sphi 0, %s64
    %s65 = sphi 0, %s62
    %s66 = sphi 0, %s65
    %s82 = sphi 0, %s66
    %s86 = sphi 0, %s86
    %s88 = sphi 0, %s86
    %s89 = sphi 0, %s88
    %s103 = sphi 0, %s89
    %s107 = sphi 0, %s107
    %s109 = sphi 0, %s107
    %s110 = sphi 0, %s109
    %s124 = sphi 0, %s110
    %s128 = sphi 0, %s128
    %s130 = sphi 0, %s128
    %s131 = sphi 0, %s130
    %s145 = sphi 0, %s131
    %s149 = sphi 0, %s149
    %s151 = sphi 0, %s149
    %s152 = sphi 0, %s151
    %s166 = sphi 0, %s152
    %s170 = sphi 0, %s170
    %s172 = sphi 0, %s170
    %s173 = sphi 0, %s172
    %s187 = sphi 0, %s173
    %s191 = sphi 0, %s191
    %s193 = sphi 0, %s191
    %s194 = sphi 0, %s193
    %s208 = sphi 0, %s194
    %s216 = sphi 0, %s218
    %s219 = sphi 0, %s216
    %s220 = sphi 0, %s219
    %s236 = sphi 0, %s220
  $region4: #{basic_block_forward.3} parent=0 // loop_header_branch
    %17 = sbr.rel (%p15) target = $region8
  $region5: #{basic_block_forward.3} parent=0 // loop_body
    %s19 = ssub.s32 %s14, 1
    %s20 = ssub.s32 %s14, 2
    %s27 = sadd.s32 1, %s22
    %p28 = scmp.ge.s32.totalorder %s27, 4
    %s29 = scalar_select %p28, 0, %s27
    %s30 = sadd.s32 1, %s21
    %s31 = scalar_select %p28, %s30, %s21
    %p32 = scmp.ge.s32.totalorder %s31, 2
    %s33 = scalar_select %p32, 0, %s31
    %s34 = ssub.s32 %s21, %s33
    %p35 = scmp.eq.s32.totalorder %s34, 0
    %s37 = sadd.s32 %s36, 1
    %s38 = scalar_select %p35, %s36, %s37
    %p41 = pneg %p35
    %p42 = scmp.eq.s32.totalorder %s14, 7
    %p43 = por %p41, %p42
    %p44 = scmp.ne.s32.totalorder %s36, %s39
    %p45 = scmp.eq.s32.totalorder %s14, 0
    %p46 = por %p44, %p45
    %p47 = scmp.ne.s32.totalorder %s36, %s39
    %p48 = scmp.eq.s32.totalorder %s19, 7
    %p49 = por %p47, %p48
    %p50 = scmp.ne.s32.totalorder %s39, %s40
    %p51 = scmp.eq.s32.totalorder %s19, 0
    %p52 = por %p50, %p51
    %p53 = scmp.ne.s32.totalorder %s39, %s40
    %p54 = scmp.eq.s32.totalorder %s20, 7
    %p55 = por %p53, %p54
    %p57 = scmp.ne.s32.totalorder %s40, %s56
    %p58 = scmp.eq.s32.totalorder %s20, 0
    %p59 = por %p57, %p58
    %s60 = ssub.s32 %s21, %s33
    %p61 = scmp.eq.s32.totalorder %s60, 0
    %s63 = sadd.s32 %s62, 1
    %s64 = scalar_select %p61, %s62, %s63
    %p67 = pneg %p61
    %p68 = scmp.eq.s32.totalorder %s14, 7
    %p69 = por %p67, %p68
    %p70 = scmp.ne.s32.totalorder %s62, %s65
    %p71 = scmp.eq.s32.totalorder %s14, 0
    %p72 = por %p70, %p71
    %p73 = scmp.ne.s32.totalorder %s62, %s65
    %p74 = scmp.eq.s32.totalorder %s19, 7
    %p75 = por %p73, %p74
    %p76 = scmp.ne.s32.totalorder %s65, %s66
    %p77 = scmp.eq.s32.totalorder %s19, 0
    %p78 = por %p76, %p77
    %p79 = scmp.ne.s32.totalorder %s65, %s66
    %p80 = scmp.eq.s32.totalorder %s20, 7
    %p81 = por %p79, %p80
    %p83 = scmp.ne.s32.totalorder %s66, %s82
    %p84 = scmp.eq.s32.totalorder %s20, 0
    %p85 = por %p83, %p84
    %s87 = sadd.s32 %s86, 1
    %p90 = scmp.eq.s32.totalorder %s14, 7
    %p91 = scmp.ne.s32.totalorder %s86, %s88
    %p92 = scmp.eq.s32.totalorder %s14, 0
    %p93 = por %p91, %p92
    %p94 = scmp.ne.s32.totalorder %s86, %s88
    %p95 = scmp.eq.s32.totalorder %s19, 7
    %p96 = por %p94, %p95
    %p97 = scmp.ne.s32.totalorder %s88, %s89
    %p98 = scmp.eq.s32.totalorder %s19, 0
    %p99 = por %p97, %p98
    %p100 = scmp.ne.s32.totalorder %s88, %s89
    %p101 = scmp.eq.s32.totalorder %s20, 7
    %p102 = por %p100, %p101
    %p104 = scmp.ne.s32.totalorder %s89, %s103
    %p105 = scmp.eq.s32.totalorder %s20, 0
    %p106 = por %p104, %p105
    %s108 = sadd.s32 %s107, 1
    %p111 = scmp.eq.s32.totalorder %s14, 7
    %p112 = scmp.ne.s32.totalorder %s107, %s109
    %p113 = scmp.eq.s32.totalorder %s14, 0
    %p114 = por %p112, %p113
    %p115 = scmp.ne.s32.totalorder %s107, %s109
    %p116 = scmp.eq.s32.totalorder %s19, 7
    %p117 = por %p115, %p116
    %p118 = scmp.ne.s32.totalorder %s109, %s110
    %p119 = scmp.eq.s32.totalorder %s19, 0
    %p120 = por %p118, %p119
    %p121 = scmp.ne.s32.totalorder %s109, %s110
    %p122 = scmp.eq.s32.totalorder %s20, 7
    %p123 = por %p121, %p122
    %p125 = scmp.ne.s32.totalorder %s110, %s124
    %p126 = scmp.eq.s32.totalorder %s20, 0
    %p127 = por %p125, %p126
    %s129 = sadd.s32 %s128, 1
    %p132 = scmp.eq.s32.totalorder %s14, 7
    %p133 = scmp.ne.s32.totalorder %s128, %s130
    %p134 = scmp.eq.s32.totalorder %s14, 0
    %p135 = por %p133, %p134
    %p136 = scmp.ne.s32.totalorder %s128, %s130
    %p137 = scmp.eq.s32.totalorder %s19, 7
    %p138 = por %p136, %p137
    %p139 = scmp.ne.s32.totalorder %s130, %s131
    %p140 = scmp.eq.s32.totalorder %s19, 0
    %p141 = por %p139, %p140
    %p142 = scmp.ne.s32.totalorder %s130, %s131
    %p143 = scmp.eq.s32.totalorder %s20, 7
    %p144 = por %p142, %p143
    %p146 = scmp.ne.s32.totalorder %s131, %s145
    %p147 = scmp.eq.s32.totalorder %s20, 0
    %p148 = por %p146, %p147
    %s150 = sadd.s32 %s149, 1
    %p153 = scmp.eq.s32.totalorder %s14, 7
    %p154 = scmp.ne.s32.totalorder %s149, %s151
    %p155 = scmp.eq.s32.totalorder %s14, 0
    %p156 = por %p154, %p155
    %p157 = scmp.ne.s32.totalorder %s149, %s151
    %p158 = scmp.eq.s32.totalorder %s19, 7
    %p159 = por %p157, %p158
    %p160 = scmp.ne.s32.totalorder %s151, %s152
    %p161 = scmp.eq.s32.totalorder %s19, 0
    %p162 = por %p160, %p161
    %p163 = scmp.ne.s32.totalorder %s151, %s152
    %p164 = scmp.eq.s32.totalorder %s20, 7
    %p165 = por %p163, %p164
    %p167 = scmp.ne.s32.totalorder %s152, %s166
    %p168 = scmp.eq.s32.totalorder %s20, 0
    %p169 = por %p167, %p168
    %s171 = sadd.s32 %s170, 1
    %p174 = scmp.eq.s32.totalorder %s14, 7
    %p175 = scmp.ne.s32.totalorder %s170, %s172
    %p176 = scmp.eq.s32.totalorder %s14, 0
    %p177 = por %p175, %p176
    %p178 = scmp.ne.s32.totalorder %s170, %s172
    %p179 = scmp.eq.s32.totalorder %s19, 7
    %p180 = por %p178, %p179
    %p181 = scmp.ne.s32.totalorder %s172, %s173
    %p182 = scmp.eq.s32.totalorder %s19, 0
    %p183 = por %p181, %p182
    %p184 = scmp.ne.s32.totalorder %s172, %s173
    %p185 = scmp.eq.s32.totalorder %s20, 7
    %p186 = por %p184, %p185
    %p188 = scmp.ne.s32.totalorder %s173, %s187
    %p189 = scmp.eq.s32.totalorder %s20, 0
    %p190 = por %p188, %p189
    %s192 = sadd.s32 %s191, 1
    %p195 = scmp.eq.s32.totalorder %s14, 7
    %p196 = scmp.ne.s32.totalorder %s191, %s193
    %p197 = scmp.eq.s32.totalorder %s14, 0
    %p198 = por %p196, %p197
    %p199 = scmp.ne.s32.totalorder %s191, %s193
    %p200 = scmp.eq.s32.totalorder %s19, 7
    %p201 = por %p199, %p200
    %p202 = scmp.ne.s32.totalorder %s193, %s194
    %p203 = scmp.eq.s32.totalorder %s19, 0
    %p204 = por %p202, %p203
    %p205 = scmp.ne.s32.totalorder %s193, %s194
    %p206 = scmp.eq.s32.totalorder %s20, 7
    %p207 = por %p205, %p206
    %p209 = scmp.ne.s32.totalorder %s194, %s208
    %p210 = scmp.eq.s32.totalorder %s20, 0
    %p211 = por %p209, %p210
    %s212 = ssub.s32 %s21, %s33
    %s213 = ssub.s32 %s22, %s29
    %s214 = sor.u32 %s212, %s213
    %p215 = scmp.eq.s32.totalorder %s214, 0
    %s217 = sadd.s32 %s216, 1
    %s218 = scalar_select %p215, %s216, %s217
    %p221 = pneg %p215
    %p222 = scmp.eq.s32.totalorder %s14, 7
    %p223 = por %p221, %p222
    %p224 = scmp.ne.s32.totalorder %s216, %s219
    %p225 = scmp.eq.s32.totalorder %s14, 0
    %p226 = por %p224, %p225
    %p227 = scmp.ne.s32.totalorder %s216, %s219
    %p228 = scmp.eq.s32.totalorder %s19, 7
    %p229 = por %p227, %p228
    %p230 = scmp.ne.s32.totalorder %s219, %s220
    %p231 = scmp.eq.s32.totalorder %s19, 0
    %p232 = por %p230, %p231
    %p233 = scmp.ne.s32.totalorder %s219, %s220
    %p234 = scmp.eq.s32.totalorder %s20, 7
    %p235 = por %p233, %p234
    %p237 = scmp.ne.s32.totalorder %s220, %s236
    %p238 = scmp.eq.s32.totalorder %s20, 0
    %p239 = por %p237, %p238
    %p240 = scmp.le.s32.totalorder 1, %s14
    %p241 = scmp.lt.s32.totalorder %s14, 9
    %p242 = pnand %p240, %p241
    %p243 = pneg %p242
    // Predicated region
    $region9: #{basic_block_forward.3} parent=5 // pred_check
      _
    $region10: #{basic_block_forward.3} parent=5 // pred_check_branch
      %245 = sbr.rel (%p242) target = $region12
    $region11: #{basic_block_forward.3} parent=5 // pred_region
      %s246 = ssub.s32 %s14, 1
      // Predicated region
      $region13: #{basic_block_forward.3} parent=11 // pred_check
        %p247 = pneg %p99
      $region14: #{basic_block_forward.3} parent=11 // pred_check_branch
        %249 = sbr.rel (%p247) target = $region16
      $region15: #{basic_block_forward.3} parent=11 // pred_region
        _
      $region16: #{basic_block_forward.3} parent=11 // pred_fallthru
        _
      // Predicated region
      $region17: #{basic_block_forward.3} parent=11 // pred_check
        %p250 = pneg %p120
      $region18: #{basic_block_forward.3} parent=11 // pred_check_branch
        %252 = sbr.rel (%p250) target = $region20
      $region19: #{basic_block_forward.3} parent=11 // pred_region
        _
      $region20: #{basic_block_forward.3} parent=11 // pred_fallthru
        _
      // Predicated region
      $region21: #{basic_block_forward.3} parent=11 // pred_check
        %p253 = pneg %p141
      $region22: #{basic_block_forward.3} parent=11 // pred_check_branch
        %255 = sbr.rel (%p253) target = $region24
      $region23: #{basic_block_forward.3} parent=11 // pred_region
        _
      $region24: #{basic_block_forward.3} parent=11 // pred_fallthru
        _
      // Predicated region
      $region25: #{basic_block_forward.3} parent=11 // pred_check
        %p256 = pneg %p162
      $region26: #{basic_block_forward.3} parent=11 // pred_check_branch
        %258 = sbr.rel (%p256) target = $region28
      $region27: #{basic_block_forward.3} parent=11 // pred_region
        _
      $region28: #{basic_block_forward.3} parent=11 // pred_fallthru
        _
      // Predicated region
      $region29: #{basic_block_forward.3} parent=11 // pred_check
        %p259 = pneg %p183
      $region30: #{basic_block_forward.3} parent=11 // pred_check_branch
        %261 = sbr.rel (%p259) target = $region32
      $region31: #{basic_block_forward.3} parent=11 // pred_region
        _
      $region32: #{basic_block_forward.3} parent=11 // pred_fallthru
        _
      // Predicated region
      $region33: #{basic_block_forward.3} parent=11 // pred_check
        %p262 = pneg %p204
      $region34: #{basic_block_forward.3} parent=11 // pred_check_branch
        %264 = sbr.rel (%p262) target = $region36
      $region35: #{basic_block_forward.3} parent=11 // pred_region
        _
      $region36: #{basic_block_forward.3} parent=11 // pred_fallthru
        _
    $region12: #{basic_block_forward.3} parent=5 // pred_fallthru
      _
    %p265 = scmp.lt.s32.totalorder %s14, 8
    // Predicated region
    $region37: #{basic_block_forward.3} parent=5 // pred_check
      %p266 = pneg %p265
    $region38: #{basic_block_forward.3} parent=5 // pred_check_branch
      %268 = sbr.rel (%p266) target = $region40
    $region39: #{basic_block_forward.3} parent=5 // pred_region
      // Predicated region
      $region41: #{basic_block_forward.3} parent=39 // pred_check
        %p269 = pneg %p46
      $region42: #{basic_block_forward.3} parent=39 // pred_check_branch
        %271 = sbr.rel (%p269) target = $region44
      $region43: #{basic_block_forward.3} parent=39 // pred_region
        %p272 = scmp.lt.s32.totalorder %s21, 1
        %s273 = scalar_select %p272, %s21, 1
        %s274 = smul.addr %s273, 20
        %s275 = smul.addr %s274, 4
        %s276 = scalar_lea.vmem %s0, %s275
      $region44: #{basic_block_forward.3} parent=39 // pred_fallthru
        _
      // Predicated region
      $region45: #{basic_block_forward.3} parent=39 // pred_check
        %p277 = pneg %p72
      $region46: #{basic_block_forward.3} parent=39 // pred_check_branch
        %279 = sbr.rel (%p277) target = $region48
      $region47: #{basic_block_forward.3} parent=39 // pred_region
        %p280 = scmp.lt.s32.totalorder %s21, 1
        %s281 = scalar_select %p280, %s21, 1
        %s282 = smul.addr %s281, 32
        %s283 = smul.addr %s282, 8
        %s284 = scalar_lea.vmem %s1, %s283
      $region48: #{basic_block_forward.3} parent=39 // pred_fallthru
        _
    $region40: #{basic_block_forward.3} parent=5 // pred_fallthru
      _
    %p285 = scmp.le.s32.totalorder 1, %s14
    %p286 = scmp.lt.s32.totalorder %s14, 9
    %p287 = pnand %p285, %p286
    %p288 = pneg %p287
    // Predicated region
    $region49: #{basic_block_forward.3} parent=5 // pred_check
      _
    $region50: #{basic_block_forward.3} parent=5 // pred_check_branch
      %290 = sbr.rel (%p287) target = $region52
    $region51: #{basic_block_forward.3} parent=5 // pred_region
      %s291 = ssub.s32 %s14, 1
      %p292 = scmp.lt.s32.totalorder %s23, 1
      %s293 = scalar_select %p292, %s23, 1
      %s294 = smul.addr %s293, 20
      %s295 = smul.addr %s294, 4
      %s296 = scalar_lea.vmem %s0, %s295
      %p297 = pneg %p52
      %p298 = pneg %p49
      %p299 = scmp.lt.s32.totalorder %s23, 1
      %s300 = scalar_select %p299, %s23, 1
      %s301 = smul.addr %s300, 32
      %s302 = smul.addr %s301, 8
      %s303 = scalar_lea.vmem %s1, %s302
      %p304 = pneg %p78
      %p305 = pneg %p75
      %p306 = pneg %p99
      %p307 = pneg %p96
      %p308 = pneg %p120
      %p309 = pneg %p117
      %p310 = pneg %p141
      %p311 = pneg %p138
      %p312 = pneg %p162
      %p313 = pneg %p159
      %p314 = pneg %p183
      %p315 = pneg %p180
      %p316 = pneg %p204
      %p317 = pneg %p201
      %p318 = pneg %p232
      %p319 = pneg %p229
      %s320 = smul.u32 2, %s24
      %p321 = scmp.lt.s32.totalorder %s23, 1
      %s322 = scalar_select %p321, %s23, 1
      %p323 = scmp.lt.s32.totalorder %s320, 7
      %s324 = scalar_select %p323, %s320, 7
      %s325 = smul.addr %s322, 8
      %s326 = sadd.s32 %s324, %s325
      %s327 = smul.addr %s326, 8
      %s328 = scalar_lea.vmem %s8, %s327
      %p329 = scmp.lt.s32.totalorder %s23, 1
      %s330 = scalar_select %p329, %s23, 1
      %s331 = smul.addr %s330, 20
      %s332 = smul.addr %s331, 4
      %s333 = scalar_lea.vmem %s0, %s332
      %p334 = scmp.lt.s32.totalorder %s23, 1
      %s335 = scalar_select %p334, %s23, 1
      %s336 = smul.addr %s335, 32
      %s337 = smul.addr %s336, 8
      %s338 = scalar_lea.vmem %s1, %s337
      %s339 = smul.u32 2, %s24
      %p340 = scmp.lt.s32.totalorder %s23, 1
      %s341 = scalar_select %p340, %s23, 1
      %p342 = scmp.lt.s32.totalorder %s339, 7
      %s343 = scalar_select %p342, %s339, 7
      %s344 = smul.addr %s341, 8
      %s345 = sadd.s32 %s343, %s344
      %s346 = smul.addr %s345, 8
      %s347 = scalar_lea.vmem %s8, %s346
      %s348 = smul.u32 2, %s24
      %s350 = smul.u32 %s24, 2
      %s351 = smul.u32 %s350, 2
      %s352 = smul.addr %s351, 4
      %s353 = scalar_lea.vmem %s333, %s352
      %v354 = vld [vmem:[%s353] sm:$0xf]
      %v355 = vld [vmem:[%s353 + $0x4] sm:$0x1]
      %v356 = vld [vmem:[%s353 + $0x8] sm:$0xf]
      %v357 = vld [vmem:[%s353 + $0xc] sm:$0x1]
      %v358 = vld [vmem:[%s353 + $0x10] sm:$0xf]
      %v359 = vld [vmem:[%s353 + $0x14] sm:$0x1]
      %v360 = vld [vmem:[%s353 + $0x18] sm:$0xf]
      %v361 = vld [vmem:[%s353 + $0x1c] sm:$0x1]
      %v362 = vld [vmem:[%s2] sm:$0x1]
      %v363 = vld [vmem:[%s3] sm:$0x1]
      %v364 = vunpack.c.l.bf16 %v354
      %v365 = vunpack.c.l.bf16 %v355
      %v366 = vunpack.c.l.bf16 %v356
      %v367 = vunpack.c.l.bf16 %v357
      %v368 = vunpack.c.l.bf16 %v358
      %v369 = vunpack.c.l.bf16 %v359
      %v370 = vunpack.c.l.bf16 %v360
      %v371 = vunpack.c.l.bf16 %v361
      %v373 = vlaneseq
      %v374 = vshrl.u32 %v373, 7
      %v375 = vsub.s32 0, %v374
      %v376 = vrot.slane %v362, %v375
      %v378 = vmul.f32 %v364, %v376
      %v379 = vmul.f32 %v365, %v376
      %v380 = vmul.f32 %v366, %v376
      %v381 = vmul.f32 %v367, %v376
      %v382 = vmul.f32 %v368, %v376
      %v383 = vmul.f32 %v369, %v376
      %v384 = vmul.f32 %v370, %v376
      %v385 = vmul.f32 %v371, %v376
      %v387 = vlaneseq
      %v388 = vshrl.u32 %v387, 7
      %v389 = vsub.s32 0, %v388
      %v390 = vrot.slane %v363, %v389
      %v392 = vadd.f32 %v378, %v390
      %v393 = vadd.f32 %v379, %v390
      %v394 = vadd.f32 %v380, %v390
      %v395 = vadd.f32 %v381, %v390
      %v396 = vadd.f32 %v382, %v390
      %v397 = vadd.f32 %v383, %v390
      %v398 = vadd.f32 %v384, %v390
      %v399 = vadd.f32 %v385, %v390
      %v400 = vmax.f32 %v392, 0.0
      %v401 = vmax.f32 %v393, 0.0
      %v402 = vmax.f32 %v394, 0.0
      %v403 = vmax.f32 %v395, 0.0
      %v404 = vmax.f32 %v396, 0.0
      %v405 = vmax.f32 %v397, 0.0
      %v406 = vmax.f32 %v398, 0.0
      %v407 = vmax.f32 %v399, 0.0
      %v408 = vstv %s350
      %v409 = vadd.s32 %v408, 1
      %v410 = vadd.s32 %v408, 2
      %v411 = vadd.s32 %v408, 3
      %v412 = vlaneseq
      %v413 = vshrl.u32 %v412, 7
      %v414 = vadd.s32 %v413, 8
      %vm415 = vcmp.ge.s32.totalorder %v408, 1
      %vm416 = vcmp.ge.s32.totalorder %v409, 1
      %vm417 = vcmp.ge.s32.totalorder %v410, 1
      %vm418 = vcmp.ge.s32.totalorder %v411, 1
      %vm419 = vcmp.le.s32.totalorder %v408, 8
      %vm420 = vcmp.le.s32.totalorder %v409, 8
      %vm421 = vcmp.le.s32.totalorder %v410, 8
      %vm422 = vcmp.le.s32.totalorder %v411, 8
      %vm423 = vmand %vm415, %vm419
      %vm424 = vmand %vm416, %vm420
      %vm425 = vmand %vm417, %vm421
      %vm426 = vmand %vm418, %vm422
      %vm427 = vcmp.ge.s32.totalorder %v413, 1
      %vm428 = vcmp.ge.s32.totalorder %v414, 1
      %vm429 = vmand %vm423, %vm427
      %vm430 = vmand %vm423, %vm428
      %vm431 = vmand %vm424, %vm427
      %vm432 = vmand %vm424, %vm428
      %vm433 = vmand %vm425, %vm427
      %vm434 = vmand %vm425, %vm428
      %vm435 = vmand %vm426, %vm427
      %vm436 = vmand %vm426, %vm428
      %vm437 = vcmp.le.s32.totalorder %v413, 8
      %vm438 = vcmp.le.s32.totalorder %v414, 8
      %vm439 = vmand %vm429, %vm437
      %vm440 = vmand %vm430, %vm438
      %vm441 = vmand %vm431, %vm437
      %vm442 = vmand %vm432, %vm438
      %vm443 = vmand %vm433, %vm437
      %vm444 = vmand %vm434, %vm438
      %vm445 = vmand %vm435, %vm437
      %vm446 = vmand %vm436, %vm438
      %v447 = vsel %vm439, 1, 0
      %v448 = vsel %vm440, 1, 0
      %v449 = vsel %vm441, 1, 0
      %v450 = vsel %vm442, 1, 0
      %v451 = vsel %vm443, 1, 0
      %v452 = vsel %vm444, 1, 0
      %v453 = vsel %vm445, 1, 0
      %v454 = vsel %vm446, 1, 0
      %vm455 = vcmp.eq.s32.totalorder %v447, 1
      %vm456 = vcmp.eq.s32.totalorder %v448, 1
      %vm457 = vcmp.eq.s32.totalorder %v449, 1
      %vm458 = vcmp.eq.s32.totalorder %v450, 1
      %vm459 = vcmp.eq.s32.totalorder %v451, 1
      %vm460 = vcmp.eq.s32.totalorder %v452, 1
      %vm461 = vcmp.eq.s32.totalorder %v453, 1
      %vm462 = vcmp.eq.s32.totalorder %v454, 1
      %v463 = vsel %vm455, %v400, 0.0
      %v464 = vsel %vm456, %v401, 0.0
      %v465 = vsel %vm457, %v402, 0.0
      %v466 = vsel %vm458, %v403, 0.0
      %v467 = vsel %vm459, %v404, 0.0
      %v468 = vsel %vm460, %v405, 0.0
      %v469 = vsel %vm461, %v406, 0.0
      %v470 = vsel %vm462, %v407, 0.0
      %471 = vst [vmem:[#allocation2] sm:$0xff] %v463
      %472 = vst [vmem:[#allocation2 + $0x8] sm:$0x3] %v464
      %473 = vst [vmem:[#allocation2 + $0x10] sm:$0xff] %v465
      %474 = vst [vmem:[#allocation2 + $0x18] sm:$0x3] %v466
      %475 = vst [vmem:[#allocation2 + $0x20] sm:$0xff] %v467
      %476 = vst [vmem:[#allocation2 + $0x28] sm:$0x3] %v468
      %477 = vst [vmem:[#allocation2 + $0x30] sm:$0xff] %v469
      %478 = vst [vmem:[#allocation2 + $0x38] sm:$0x3] %v470
      %s479 = smul.u32 %s24, 4
      %s480 = smul.u32 %s479, 16
      %s481 = scalar_lea.vmem %s338, %s480
      %v482 = vld [vmem:[%s481] ss:$2 sm:$0xff]
      %s483 = scalar_lea.vmem %s481, 32
      %v484 = vld [vmem:[%s483] ss:$2 sm:$0xff]
      %v485 = vld [vmem:[%s4] sm:$0x1]
      %v487 = vlaneseq
      %v488 = vshrl.u32 %v487, 7
      %v489 = vsub.s32 0, %v488
      %v490 = vrot.slane %v485, %v489
      %v492 = vmul.f32 %v482, %v490
      %v493 = vmul.f32 %v484, %v490
      %v494 = vld [vmem:[%s5] sm:$0x1]
      %v496 = vlaneseq
      %v497 = vshrl.u32 %v496, 7
      %v498 = vsub.s32 0, %v497
      %v499 = vrot.slane %v494, %v498
      %v501 = vadd.f32 %v492, %v499
      %v502 = vadd.f32 %v493, %v499
      %v503 = vmax.f32 %v501, 0.0
      %v504 = vmax.f32 %v502, 0.0
      %v505 = vpack.c.bf16 %v504, %v503
      %v506 = vld [vmem:[%s7] sm:$0xf]
      %v507 = vld [vmem:[%s7 + $0x4] sm:$0xf]
      %v508 = vld [vmem:[%s7 + $0x8] sm:$0xf]
      %v509 = vld [vmem:[%s7 + $0xc] sm:$0xf]
      %v510 = vld [vmem:[%s7 + $0x10] sm:$0xf]
      %v511 = vld [vmem:[%s7 + $0x14] sm:$0xf]
      %v512 = vld [vmem:[%s7 + $0x18] sm:$0xf]
      %v513 = vld [vmem:[%s7 + $0x1c] sm:$0xf]
      %v514 = vld [vmem:[%s7 + $0x20] sm:$0xf]
      %v515 = vld [vmem:[%s7 + $0x24] sm:$0xf]
      %v516 = vld [vmem:[%s7 + $0x28] sm:$0xf]
      %v517 = vld [vmem:[%s7 + $0x2c] sm:$0xf]
      %v518 = vld [vmem:[%s7 + $0x30] sm:$0xf]
      %v519 = vld [vmem:[%s7 + $0x34] sm:$0xf]
      %v520 = vld [vmem:[%s7 + $0x38] sm:$0xf]
      %v521 = vld [vmem:[%s7 + $0x3c] sm:$0xf]
      %v522 = vld [vmem:[#allocation2] sm:$0xff]
      %v523 = vld [vmem:[#allocation2 + $0x10] sm:$0xff]
      %v524 = vpack.c.bf16 %v523, %v522
      %v525 = vld [vmem:[%s6] sm:$0xf]
      %v526 = vld [vmem:[%s6 + $0x4] sm:$0xf]
      %v527 = vld [vmem:[%s6 + $0x8] sm:$0xf]
      %v528 = vld [vmem:[%s6 + $0xc] sm:$0xf]
      %v529 = vld [vmem:[%s6 + $0x10] sm:$0xf]
      %v530 = vld [vmem:[%s6 + $0x14] sm:$0xf]
      %v531 = vld [vmem:[%s6 + $0x18] sm:$0xf]
      %v532 = vld [vmem:[%s6 + $0x1c] sm:$0xf]
      %v533 = vld [vmem:[%s6 + $0x20] sm:$0xf]
      %v534 = vld [vmem:[%s6 + $0x24] sm:$0xf]
      %v535 = vld [vmem:[%s6 + $0x28] sm:$0xf]
      %v536 = vld [vmem:[%s6 + $0x2c] sm:$0xf]
      %v537 = vld [vmem:[%s6 + $0x30] sm:$0xf]
      %v538 = vld [vmem:[%s6 + $0x34] sm:$0xf]
      %v539 = vld [vmem:[%s6 + $0x38] sm:$0xf]
      %v540 = vld [vmem:[%s6 + $0x3c] sm:$0xf]
      %v557 = vunpack.c.l.b16 %v525
      %v558 = vunpack.c.l.b16 %v526
      %v559 = vunpack.c.l.b16 %v527
      %v560 = vunpack.c.l.b16 %v528
      %v561 = vunpack.c.l.b16 %v529
      %v562 = vunpack.c.l.b16 %v530
      %v563 = vunpack.c.l.b16 %v531
      %v564 = vunpack.c.l.b16 %v532
      %v565 = vunpack.c.l.b16 %v533
      %v566 = vunpack.c.l.b16 %v534
      %v567 = vunpack.c.l.b16 %v535
      %v568 = vunpack.c.l.b16 %v536
      %v569 = vunpack.c.l.b16 %v537
      %v570 = vunpack.c.l.b16 %v538
      %v571 = vunpack.c.l.b16 %v539
      %v572 = vunpack.c.l.b16 %v540
      %v573 = vpack.c.b16 %v558, %v557
      %v574 = vpack.c.b16 %v560, %v559
      %v575 = vpack.c.b16 %v562, %v561
      %v576 = vpack.c.b16 %v564, %v563
      %v577 = vpack.c.b16 %v566, %v565
      %v578 = vpack.c.b16 %v568, %v567
      %v579 = vpack.c.b16 %v570, %v569
      %v580 = vpack.c.b16 %v572, %v571
      %589 = vmatprep.subr.bf16.mxu0 0
      %590 = vmatpush1.bf16.msra.mxu0 %v573
      %591 = vmatprep.subr.bf16.mxu0 0
      %592 = vmatpush1.bf16.msra.mxu0 %v574
      %593 = vmatprep.subr.bf16.mxu0 0
      %594 = vmatpush1.bf16.msra.mxu0 %v575
      %595 = vmatprep.subr.bf16.mxu0 0
      %596 = vmatpush1.bf16.msra.mxu0 %v576
      %597 = vmatprep.subr.bf16.mxu0 0
      %598 = vmatpush1.bf16.msra.mxu0 %v577
      %599 = vmatprep.subr.bf16.mxu0 0
      %600 = vmatpush1.bf16.msra.mxu0 %v578
      %601 = vmatprep.subr.bf16.mxu0 0
      %602 = vmatpush1.bf16.msra.mxu0 %v579
      %603 = vmatprep.subr.bf16.mxu0 0
      %604 = vmatpush1.bf16.msra.mxu0 %v580
      %605 = vmatprep.subr.bf16.mxu0 0
      %606 = vmatpush1.bf16.msra.mxu0 0
      %607 = vmatprep.subr.bf16.mxu0 0
      %608 = vmatpush1.bf16.msra.mxu0 0
      %609 = vmatprep.subr.bf16.mxu0 0
      %610 = vmatpush1.bf16.msra.mxu0 0
      %611 = vmatprep.subr.bf16.mxu0 0
      %612 = vmatpush1.bf16.msra.mxu0 0
      %613 = vmatprep.subr.bf16.mxu0 0
      %614 = vmatpush1.bf16.msra.mxu0 0
      %615 = vmatprep.subr.bf16.mxu0 0
      %616 = vmatpush1.bf16.msra.mxu0 0
      %617 = vmatprep.subr.bf16.mxu0 0
      %618 = vmatpush1.bf16.msra.mxu0 0
      %619 = vmatprep.subr.bf16.mxu0 0
      %620 = vmatpush1.bf16.msra.mxu0 0
      %621 = vmatprep.mubr.bf16.mxu0 0
      %622 = vmatmul.mubr.bf16.gmra.mrb[0].mxu0 %v524
      %v623 = vpop.f32.mrb[0].mxu0
      %v624 = vadd.f32 0.0, %v623
      %v625 = vpop.f32.mrb[0].mxu0
      %v626 = vpop.f32.mrb[0].mxu0
      %v627 = vadd.f32 0.0, %v626
      %v628 = vpop.f32.mrb[0].mxu0
      %629 = vdwg.mxu0
      %v646 = vunpack.c.l.b16 %v506
      %v647 = vunpack.c.l.b16 %v507
      %v648 = vunpack.c.l.b16 %v508
      %v649 = vunpack.c.l.b16 %v509
      %v650 = vunpack.c.l.b16 %v510
      %v651 = vunpack.c.l.b16 %v511
      %v652 = vunpack.c.l.b16 %v512
      %v653 = vunpack.c.l.b16 %v513
      %v654 = vunpack.c.l.b16 %v514
      %v655 = vunpack.c.l.b16 %v515
      %v656 = vunpack.c.l.b16 %v516
      %v657 = vunpack.c.l.b16 %v517
      %v658 = vunpack.c.l.b16 %v518
      %v659 = vunpack.c.l.b16 %v519
      %v660 = vunpack.c.l.b16 %v520
      %v661 = vunpack.c.l.b16 %v521
      %v662 = vpack.c.b16 %v647, %v646
      %v663 = vpack.c.b16 %v649, %v648
      %v664 = vpack.c.b16 %v651, %v650
      %v665 = vpack.c.b16 %v653, %v652
      %v666 = vpack.c.b16 %v655, %v654
      %v667 = vpack.c.b16 %v657, %v656
      %v668 = vpack.c.b16 %v659, %v658
      %v669 = vpack.c.b16 %v661, %v660
      %678 = vmatprep.subr.bf16.mxu0 0
      %679 = vmatpush1.bf16.msra.mxu0 %v662
      %680 = vmatprep.subr.bf16.mxu0 0
      %681 = vmatpush1.bf16.msra.mxu0 %v663
      %682 = vmatprep.subr.bf16.mxu0 0
      %683 = vmatpush1.bf16.msra.mxu0 %v664
      %684 = vmatprep.subr.bf16.mxu0 0
      %685 = vmatpush1.bf16.msra.mxu0 %v665
      %686 = vmatprep.subr.bf16.mxu0 0
      %687 = vmatpush1.bf16.msra.mxu0 %v666
      %688 = vmatprep.subr.bf16.mxu0 0
      %689 = vmatpush1.bf16.msra.mxu0 %v667
      %690 = vmatprep.subr.bf16.mxu0 0
      %691 = vmatpush1.bf16.msra.mxu0 %v668
      %692 = vmatprep.subr.bf16.mxu0 0
      %693 = vmatpush1.bf16.msra.mxu0 %v669
      %694 = vmatprep.subr.bf16.mxu0 0
      %695 = vmatpush1.bf16.msra.mxu0 0
      %696 = vmatprep.subr.bf16.mxu0 0
      %697 = vmatpush1.bf16.msra.mxu0 0
      %698 = vmatprep.subr.bf16.mxu0 0
      %699 = vmatpush1.bf16.msra.mxu0 0
      %700 = vmatprep.subr.bf16.mxu0 0
      %701 = vmatpush1.bf16.msra.mxu0 0
      %702 = vmatprep.subr.bf16.mxu0 0
      %703 = vmatpush1.bf16.msra.mxu0 0
      %704 = vmatprep.subr.bf16.mxu0 0
      %705 = vmatpush1.bf16.msra.mxu0 0
      %706 = vmatprep.subr.bf16.mxu0 0
      %707 = vmatpush1.bf16.msra.mxu0 0
      %708 = vmatprep.subr.bf16.mxu0 0
      %709 = vmatpush1.bf16.msra.mxu0 0
      %710 = vmatprep.mubr.bf16.mxu0 0
      %711 = vmatmul.mubr.bf16.gmra.mrb[0].mxu0 %v505
      %v712 = vpop.f32.mrb[0].mxu0
      %v713 = vadd.f32 %v624, %v712
      %v714 = vpop.f32.mrb[0].mxu0
      %v715 = vpop.f32.mrb[0].mxu0
      %v716 = vadd.f32 %v627, %v715
      %v717 = vpop.f32.mrb[0].mxu0
      %718 = vdwg.mxu0
      %v719 = vld [vmem:[#allocation2 + $0x1] sm:$0xff]
      %v720 = vld [vmem:[#allocation2 + $0x11] sm:$0xff]
      %v721 = vpack.c.bf16 %v720, %v719
      %s722 = scalar_lea.vmem %s6, 64
      %v723 = vld [vmem:[%s722] sm:$0xf]
      %v724 = vld [vmem:[%s722 + $0x4] sm:$0xf]
      %v725 = vld [vmem:[%s722 + $0x8] sm:$0xf]
      %v726 = vld [vmem:[%s722 + $0xc] sm:$0xf]
      %v727 = vld [vmem:[%s722 + $0x10] sm:$0xf]
      %v728 = vld [vmem:[%s722 + $0x14] sm:$0xf]
      %v729 = vld [vmem:[%s722 + $0x18] sm:$0xf]
      %v730 = vld [vmem:[%s722 + $0x1c] sm:$0xf]
      %v731 = vld [vmem:[%s722 + $0x20] sm:$0xf]
      %v732 = vld [vmem:[%s722 + $0x24] sm:$0xf]
      %v733 = vld [vmem:[%s722 + $0x28] sm:$0xf]
      %v734 = vld [vmem:[%s722 + $0x2c] sm:$0xf]
      %v735 = vld [vmem:[%s722 + $0x30] sm:$0xf]
      %v736 = vld [vmem:[%s722 + $0x34] sm:$0xf]
      %v737 = vld [vmem:[%s722 + $0x38] sm:$0xf]
      %v738 = vld [vmem:[%s722 + $0x3c] sm:$0xf]
      %v755 = vunpack.c.l.b16 %v723
      %v756 = vunpack.c.l.b16 %v724
      %v757 = vunpack.c.l.b16 %v725
      %v758 = vunpack.c.l.b16 %v726
      %v759 = vunpack.c.l.b16 %v727
      %v760 = vunpack.c.l.b16 %v728
      %v761 = vunpack.c.l.b16 %v729
      %v762 = vunpack.c.l.b16 %v730
      %v763 = vunpack.c.l.b16 %v731
      %v764 = vunpack.c.l.b16 %v732
      %v765 = vunpack.c.l.b16 %v733
      %v766 = vunpack.c.l.b16 %v734
      %v767 = vunpack.c.l.b16 %v735
      %v768 = vunpack.c.l.b16 %v736
      %v769 = vunpack.c.l.b16 %v737
      %v770 = vunpack.c.l.b16 %v738
      %v771 = vpack.c.b16 %v756, %v755
      %v772 = vpack.c.b16 %v758, %v757
      %v773 = vpack.c.b16 %v760, %v759
      %v774 = vpack.c.b16 %v762, %v761
      %v775 = vpack.c.b16 %v764, %v763
      %v776 = vpack.c.b16 %v766, %v765
      %v777 = vpack.c.b16 %v768, %v767
      %v778 = vpack.c.b16 %v770, %v769
      %787 = vmatprep.subr.bf16.mxu0 0
      %788 = vmatpush1.bf16.msra.mxu0 %v771
      %789 = vmatprep.subr.bf16.mxu0 0
      %790 = vmatpush1.bf16.msra.mxu0 %v772
      %791 = vmatprep.subr.bf16.mxu0 0
      %792 = vmatpush1.bf16.msra.mxu0 %v773
      %793 = vmatprep.subr.bf16.mxu0 0
      %794 = vmatpush1.bf16.msra.mxu0 %v774
      %795 = vmatprep.subr.bf16.mxu0 0
      %796 = vmatpush1.bf16.msra.mxu0 %v775
      %797 = vmatprep.subr.bf16.mxu0 0
      %798 = vmatpush1.bf16.msra.mxu0 %v776
      %799 = vmatprep.subr.bf16.mxu0 0
      %800 = vmatpush1.bf16.msra.mxu0 %v777
      %801 = vmatprep.subr.bf16.mxu0 0
      %802 = vmatpush1.bf16.msra.mxu0 %v778
      %803 = vmatprep.subr.bf16.mxu0 0
      %804 = vmatpush1.bf16.msra.mxu0 0
      %805 = vmatprep.subr.bf16.mxu0 0
      %806 = vmatpush1.bf16.msra.mxu0 0
      %807 = vmatprep.subr.bf16.mxu0 0
      %808 = vmatpush1.bf16.msra.mxu0 0
      %809 = vmatprep.subr.bf16.mxu0 0
      %810 = vmatpush1.bf16.msra.mxu0 0
      %811 = vmatprep.subr.bf16.mxu0 0
      %812 = vmatpush1.bf16.msra.mxu0 0
      %813 = vmatprep.subr.bf16.mxu0 0
      %814 = vmatpush1.bf16.msra.mxu0 0
      %815 = vmatprep.subr.bf16.mxu0 0
      %816 = vmatpush1.bf16.msra.mxu0 0
      %817 = vmatprep.subr.bf16.mxu0 0
      %818 = vmatpush1.bf16.msra.mxu0 0
      %819 = vmatprep.mubr.bf16.mxu0 0
      %820 = vmatmul.mubr.bf16.gmra.mrb[0].mxu0 %v721
      %v821 = vpop.f32.mrb[0].mxu0
      %v822 = vadd.f32 0.0, %v821
      %v823 = vpop.f32.mrb[0].mxu0
      %v824 = vpop.f32.mrb[0].mxu0
      %v825 = vadd.f32 0.0, %v824
      %v826 = vpop.f32.mrb[0].mxu0
      %827 = vdwg.mxu0
      %v828 = vadd.f32 %v713, %v822
      %v829 = vadd.f32 %v716, %v825
      %v830 = vld [vmem:[#allocation2 + $0x2] sm:$0xff]
      %v831 = vld [vmem:[#allocation2 + $0x12] sm:$0xff]
      %v832 = vpack.c.bf16 %v831, %v830
      %s833 = scalar_lea.vmem %s6, 128
      %v834 = vld [vmem:[%s833] sm:$0xf]
      %v835 = vld [vmem:[%s833 + $0x4] sm:$0xf]
      %v836 = vld [vmem:[%s833 + $0x8] sm:$0xf]
      %v837 = vld [vmem:[%s833 + $0xc] sm:$0xf]
      %v838 = vld [vmem:[%s833 + $0x10] sm:$0xf]
      %v839 = vld [vmem:[%s833 + $0x14] sm:$0xf]
      %v840 = vld [vmem:[%s833 + $0x18] sm:$0xf]
      %v841 = vld [vmem:[%s833 + $0x1c] sm:$0xf]
      %v842 = vld [vmem:[%s833 + $0x20] sm:$0xf]
      %v843 = vld [vmem:[%s833 + $0x24] sm:$0xf]
      %v844 = vld [vmem:[%s833 + $0x28] sm:$0xf]
      %v845 = vld [vmem:[%s833 + $0x2c] sm:$0xf]
      %v846 = vld [vmem:[%s833 + $0x30] sm:$0xf]
      %v847 = vld [vmem:[%s833 + $0x34] sm:$0xf]
      %v848 = vld [vmem:[%s833 + $0x38] sm:$0xf]
      %v849 = vld [vmem:[%s833 + $0x3c] sm:$0xf]
      %v866 = vunpack.c.l.b16 %v834
      %v867 = vunpack.c.l.b16 %v835
      %v868 = vunpack.c.l.b16 %v836
      %v869 = vunpack.c.l.b16 %v837
      %v870 = vunpack.c.l.b16 %v838
      %v871 = vunpack.c.l.b16 %v839
      %v872 = vunpack.c.l.b16 %v840
      %v873 = vunpack.c.l.b16 %v841
      %v874 = vunpack.c.l.b16 %v842
      %v875 = vunpack.c.l.b16 %v843
      %v876 = vunpack.c.l.b16 %v844
      %v877 = vunpack.c.l.b16 %v845
      %v878 = vunpack.c.l.b16 %v846
      %v879 = vunpack.c.l.b16 %v847
      %v880 = vunpack.c.l.b16 %v848
      %v881 = vunpack.c.l.b16 %v849
      %v882 = vpack.c.b16 %v867, %v866
      %v883 = vpack.c.b16 %v869, %v868
      %v884 = vpack.c.b16 %v871, %v870
      %v885 = vpack.c.b16 %v873, %v872
      %v886 = vpack.c.b16 %v875, %v874
      %v887 = vpack.c.b16 %v877, %v876
      %v888 = vpack.c.b16 %v879, %v878
      %v889 = vpack.c.b16 %v881, %v880
      %898 = vmatprep.subr.bf16.mxu0 0
      %899 = vmatpush1.bf16.msra.mxu0 %v882
      %900 = vmatprep.subr.bf16.mxu0 0
      %901 = vmatpush1.bf16.msra.mxu0 %v883
      %902 = vmatprep.subr.bf16.mxu0 0
      %903 = vmatpush1.bf16.msra.mxu0 %v884
      %904 = vmatprep.subr.bf16.mxu0 0
      %905 = vmatpush1.bf16.msra.mxu0 %v885
      %906 = vmatprep.subr.bf16.mxu0 0
      %907 = vmatpush1.bf16.msra.mxu0 %v886
      %908 = vmatprep.subr.bf16.mxu0 0
      %909 = vmatpush1.bf16.msra.mxu0 %v887
      %910 = vmatprep.subr.bf16.mxu0 0
      %911 = vmatpush1.bf16.msra.mxu0 %v888
      %912 = vmatprep.subr.bf16.mxu0 0
      %913 = vmatpush1.bf16.msra.mxu0 %v889
      %914 = vmatprep.subr.bf16.mxu0 0
      %915 = vmatpush1.bf16.msra.mxu0 0
      %916 = vmatprep.subr.bf16.mxu0 0
      %917 = vmatpush1.bf16.msra.mxu0 0
      %918 = vmatprep.subr.bf16.mxu0 0
      %919 = vmatpush1.bf16.msra.mxu0 0
      %920 = vmatprep.subr.bf16.mxu0 0
      %921 = vmatpush1.bf16.msra.mxu0 0
      %922 = vmatprep.subr.bf16.mxu0 0
      %923 = vmatpush1.bf16.msra.mxu0 0
      %924 = vmatprep.subr.bf16.mxu0 0
      %925 = vmatpush1.bf16.msra.mxu0 0
      %926 = vmatprep.subr.bf16.mxu0 0
      %927 = vmatpush1.bf16.msra.mxu0 0
      %928 = vmatprep.subr.bf16.mxu0 0
      %929 = vmatpush1.bf16.msra.mxu0 0
      %930 = vmatprep.mubr.bf16.mxu0 0
      %931 = vmatmul.mubr.bf16.gmra.mrb[0].mxu0 %v832
      %v932 = vpop.f32.mrb[0].mxu0
      %v933 = vadd.f32 0.0, %v932
      %v934 = vpop.f32.mrb[0].mxu0
      %v935 = vpop.f32.mrb[0].mxu0
      %v936 = vadd.f32 0.0, %v935
      %v937 = vpop.f32.mrb[0].mxu0
      %938 = vdwg.mxu0
      %v939 = vadd.f32 %v828, %v933
      %v940 = vadd.f32 %v829, %v936
      %s941 = scalar_lea.vmem [#allocation2], 16
      %v942 = vld [vmem:[%s941] sm:$0xff]
      %v943 = vld [vmem:[%s941 + $0x10] sm:$0xff]
      %v944 = vpack.c.bf16 %v943, %v942
      %s945 = scalar_lea.vmem %s6, 192
      %v946 = vld [vmem:[%s945] sm:$0xf]
      %v947 = vld [vmem:[%s945 + $0x4] sm:$0xf]
      %v948 = vld [vmem:[%s945 + $0x8] sm:$0xf]
      %v949 = vld [vmem:[%s945 + $0xc] sm:$0xf]
      %v950 = vld [vmem:[%s945 + $0x10] sm:$0xf]
      %v951 = vld [vmem:[%s945 + $0x14] sm:$0xf]
      %v952 = vld [vmem:[%s945 + $0x18] sm:$0xf]
      %v953 = vld [vmem:[%s945 + $0x1c] sm:$0xf]
      %v954 = vld [vmem:[%s945 + $0x20] sm:$0xf]
      %v955 = vld [vmem:[%s945 + $0x24] sm:$0xf]
      %v956 = vld [vmem:[%s945 + $0x28] sm:$0xf]
      %v957 = vld [vmem:[%s945 + $0x2c] sm:$0xf]
      %v958 = vld [vmem:[%s945 + $0x30] sm:$0xf]
      %v959 = vld [vmem:[%s945 + $0x34] sm:$0xf]
      %v960 = vld [vmem:[%s945 + $0x38] sm:$0xf]
      %v961 = vld [vmem:[%s945 + $0x3c] sm:$0xf]
      %v978 = vunpack.c.l.b16 %v946
      %v979 = vunpack.c.l.b16 %v947
      %v980 = vunpack.c.l.b16 %v948
      %v981 = vunpack.c.l.b16 %v949
      %v982 = vunpack.c.l.b16 %v950
      %v983 = vunpack.c.l.b16 %v951
      %v984 = vunpack.c.l.b16 %v952
      %v985 = vunpack.c.l.b16 %v953
      %v986 = vunpack.c.l.b16 %v954
      %v987 = vunpack.c.l.b16 %v955
      %v988 = vunpack.c.l.b16 %v956
      %v989 = vunpack.c.l.b16 %v957
      %v990 = vunpack.c.l.b16 %v958
      %v991 = vunpack.c.l.b16 %v959
      %v992 = vunpack.c.l.b16 %v960
      %v993 = vunpack.c.l.b16 %v961
      %v994 = vpack.c.b16 %v979, %v978
      %v995 = vpack.c.b16 %v981, %v980
      %v996 = vpack.c.b16 %v983, %v982
      %v997 = vpack.c.b16 %v985, %v984
      %v998 = vpack.c.b16 %v987, %v986
      %v999 = vpack.c.b16 %v989, %v988
      %v1000 = vpack.c.b16 %v991, %v990
      %v1001 = vpack.c.b16 %v993, %v992
      %1010 = vmatprep.subr.bf16.mxu0 0
      %1011 = vmatpush1.bf16.msra.mxu0 %v994
      %1012 = vmatprep.subr.bf16.mxu0 0
      %1013 = vmatpush1.bf16.msra.mxu0 %v995
      %1014 = vmatprep.subr.bf16.mxu0 0
      %1015 = vmatpush1.bf16.msra.mxu0 %v996
      %1016 = vmatprep.subr.bf16.mxu0 0
      %1017 = vmatpush1.bf16.msra.mxu0 %v997
      %1018 = vmatprep.subr.bf16.mxu0 0
      %1019 = vmatpush1.bf16.msra.mxu0 %v998
      %1020 = vmatprep.subr.bf16.mxu0 0
      %1021 = vmatpush1.bf16.msra.mxu0 %v999
      %1022 = vmatprep.subr.bf16.mxu0 0
      %1023 = vmatpush1.bf16.msra.mxu0 %v1000
      %1024 = vmatprep.subr.bf16.mxu0 0
      %1025 = vmatpush1.bf16.msra.mxu0 %v1001
      %1026 = vmatprep.subr.bf16.mxu0 0
      %1027 = vmatpush1.bf16.msra.mxu0 0
      %1028 = vmatprep.subr.bf16.mxu0 0
      %1029 = vmatpush1.bf16.msra.mxu0 0
      %1030 = vmatprep.subr.bf16.mxu0 0
      %1031 = vmatpush1.bf16.msra.mxu0 0
      %1032 = vmatprep.subr.bf16.mxu0 0
      %1033 = vmatpush1.bf16.msra.mxu0 0
      %1034 = vmatprep.subr.bf16.mxu0 0
      %1035 = vmatpush1.bf16.msra.mxu0 0
      %1036 = vmatprep.subr.bf16.mxu0 0
      %1037 = vmatpush1.bf16.msra.mxu0 0
      %1038 = vmatprep.subr.bf16.mxu0 0
      %1039 = vmatpush1.bf16.msra.mxu0 0
      %1040 = vmatprep.subr.bf16.mxu0 0
      %1041 = vmatpush1.bf16.msra.mxu0 0
      %1042 = vmatprep.mubr.bf16.mxu0 0
      %1043 = vmatmul.mubr.bf16.gmra.mrb[0].mxu0 %v944
      %v1044 = vpop.f32.mrb[0].mxu0
      %v1045 = vadd.f32 0.0, %v1044
      %v1046 = vpop.f32.mrb[0].mxu0
      %v1047 = vpop.f32.mrb[0].mxu0
      %v1048 = vadd.f32 0.0, %v1047
      %v1049 = vpop.f32.mrb[0].mxu0
      %1050 = vdwg.mxu0
      %v1051 = vadd.f32 %v939, %v1045
      %v1052 = vadd.f32 %v940, %v1048
      %v1053 = vld [vmem:[%s941 + $0x1] sm:$0xff]
      %v1054 = vld [vmem:[%s941 + $0x11] sm:$0xff]
      %v1055 = vpack.c.bf16 %v1054, %v1053
      %s1056 = scalar_lea.vmem %s6, 256
      %v1057 = vld [vmem:[%s1056] sm:$0xf]
      %v1058 = vld [vmem:[%s1056 + $0x4] sm:$0xf]
      %v1059 = vld [vmem:[%s1056 + $0x8] sm:$0xf]
      %v1060 = vld [vmem:[%s1056 + $0xc] sm:$0xf]
      %v1061 = vld [vmem:[%s1056 + $0x10] sm:$0xf]
      %v1062 = vld [vmem:[%s1056 + $0x14] sm:$0xf]
      %v1063 = vld [vmem:[%s1056 + $0x18] sm:$0xf]
      %v1064 = vld [vmem:[%s1056 + $0x1c] sm:$0xf]
      %v1065 = vld [vmem:[%s1056 + $0x20] sm:$0xf]
      %v1066 = vld [vmem:[%s1056 + $0x24] sm:$0xf]
      %v1067 = vld [vmem:[%s1056 + $0x28] sm:$0xf]
      %v1068 = vld [vmem:[%s1056 + $0x2c] sm:$0xf]
      %v1069 = vld [vmem:[%s1056 + $0x30] sm:$0xf]
      %v1070 = vld [vmem:[%s1056 + $0x34] sm:$0xf]
      %v1071 = vld [vmem:[%s1056 + $0x38] sm:$0xf]
      %v1072 = vld [vmem:[%s1056 + $0x3c] sm:$0xf]
      %v1089 = vunpack.c.l.b16 %v1057
      %v1090 = vunpack.c.l.b16 %v1058
      %v1091 = vunpack.c.l.b16 %v1059
      %v1092 = vunpack.c.l.b16 %v1060
      %v1093 = vunpack.c.l.b16 %v1061
      %v1094 = vunpack.c.l.b16 %v1062
      %v1095 = vunpack.c.l.b16 %v1063
      %v1096 = vunpack.c.l.b16 %v1064
      %v1097 = vunpack.c.l.b16 %v1065
      %v1098 = vunpack.c.l.b16 %v1066
      %v1099 = vunpack.c.l.b16 %v1067
      %v1100 = vunpack.c.l.b16 %v1068
      %v1101 = vunpack.c.l.b16 %v1069
      %v1102 = vunpack.c.l.b16 %v1070
      %v1103 = vunpack.c.l.b16 %v1071
      %v1104 = vunpack.c.l.b16 %v1072
      %v1105 = vpack.c.b16 %v1090, %v1089
      %v1106 = vpack.c.b16 %v1092, %v1091
      %v1107 = vpack.c.b16 %v1094, %v1093
      %v1108 = vpack.c.b16 %v1096, %v1095
      %v1109 = vpack.c.b16 %v1098, %v1097
      %v1110 = vpack.c.b16 %v1100, %v1099
      %v1111 = vpack.c.b16 %v1102, %v1101
      %v1112 = vpack.c.b16 %v1104, %v1103
      %1121 = vmatprep.subr.bf16.mxu0 0
      %1122 = vmatpush1.bf16.msra.mxu0 %v1105
      %1123 = vmatprep.subr.bf16.mxu0 0
      %1124 = vmatpush1.bf16.msra.mxu0 %v1106
      %1125 = vmatprep.subr.bf16.mxu0 0
      %1126 = vmatpush1.bf16.msra.mxu0 %v1107
      %1127 = vmatprep.subr.bf16.mxu0 0
      %1128 = vmatpush1.bf16.msra.mxu0 %v1108
      %1129 = vmatprep.subr.bf16.mxu0 0
      %1130 = vmatpush1.bf16.msra.mxu0 %v1109
      %1131 = vmatprep.subr.bf16.mxu0 0
      %1132 = vmatpush1.bf16.msra.mxu0 %v1110
      %1133 = vmatprep.subr.bf16.mxu0 0
      %1134 = vmatpush1.bf16.msra.mxu0 %v1111
      %1135 = vmatprep.subr.bf16.mxu0 0
      %1136 = vmatpush1.bf16.msra.mxu0 %v1112
      %1137 = vmatprep.subr.bf16.mxu0 0
      %1138 = vmatpush1.bf16.msra.mxu0 0
      %1139 = vmatprep.subr.bf16.mxu0 0
      %1140 = vmatpush1.bf16.msra.mxu0 0
      %1141 = vmatprep.subr.bf16.mxu0 0
      %1142 = vmatpush1.bf16.msra.mxu0 0
      %1143 = vmatprep.subr.bf16.mxu0 0
      %1144 = vmatpush1.bf16.msra.mxu0 0
      %1145 = vmatprep.subr.bf16.mxu0 0
      %1146 = vmatpush1.bf16.msra.mxu0 0
      %1147 = vmatprep.subr.bf16.mxu0 0
      %1148 = vmatpush1.bf16.msra.mxu0 0
      %1149 = vmatprep.subr.bf16.mxu0 0
      %1150 = vmatpush1.bf16.msra.mxu0 0
      %1151 = vmatprep.subr.bf16.mxu0 0
      %1152 = vmatpush1.bf16.msra.mxu0 0
      %1153 = vmatprep.mubr.bf16.mxu0 0
      %1154 = vmatmul.mubr.bf16.gmra.mrb[0].mxu0 %v1055
      %v1155 = vpop.f32.mrb[0].mxu0
      %v1156 = vadd.f32 0.0, %v1155
      %v1157 = vpop.f32.mrb[0].mxu0
      %v1158 = vpop.f32.mrb[0].mxu0
      %v1159 = vadd.f32 0.0, %v1158
      %v1160 = vpop.f32.mrb[0].mxu0
      %1161 = vdwg.mxu0
      %v1162 = vadd.f32 %v1051, %v1156
      %v1163 = vadd.f32 %v1052, %v1159
      %v1164 = vld [vmem:[%s941 + $0x2] sm:$0xff]
      %v1165 = vld [vmem:[%s941 + $0x12] sm:$0xff]
      %v1166 = vpack.c.bf16 %v1165, %v1164
      %s1167 = scalar_lea.vmem %s6, 320
      %v1168 = vld [vmem:[%s1167] sm:$0xf]
      %v1169 = vld [vmem:[%s1167 + $0x4] sm:$0xf]
      %v1170 = vld [vmem:[%s1167 + $0x8] sm:$0xf]
      %v1171 = vld [vmem:[%s1167 + $0xc] sm:$0xf]
      %v1172 = vld [vmem:[%s1167 + $0x10] sm:$0xf]
      %v1173 = vld [vmem:[%s1167 + $0x14] sm:$0xf]
      %v1174 = vld [vmem:[%s1167 + $0x18] sm:$0xf]
      %v1175 = vld [vmem:[%s1167 + $0x1c] sm:$0xf]
      %v1176 = vld [vmem:[%s1167 + $0x20] sm:$0xf]
      %v1177 = vld [vmem:[%s1167 + $0x24] sm:$0xf]
      %v1178 = vld [vmem:[%s1167 + $0x28] sm:$0xf]
      %v1179 = vld [vmem:[%s1167 + $0x2c] sm:$0xf]
      %v1180 = vld [vmem:[%s1167 + $0x30] sm:$0xf]
      %v1181 = vld [vmem:[%s1167 + $0x34] sm:$0xf]
      %v1182 = vld [vmem:[%s1167 + $0x38] sm:$0xf]
      %v1183 = vld [vmem:[%s1167 + $0x3c] sm:$0xf]
      %v1200 = vunpack.c.l.b16 %v1168
      %v1201 = vunpack.c.l.b16 %v1169
      %v1202 = vunpack.c.l.b16 %v1170
      %v1203 = vunpack.c.l.b16 %v1171
      %v1204 = vunpack.c.l.b16 %v1172
      %v1205 = vunpack.c.l.b16 %v1173
      %v1206 = vunpack.c.l.b16 %v1174
      %v1207 = vunpack.c.l.b16 %v1175
      %v1208 = vunpack.c.l.b16 %v1176
      %v1209 = vunpack.c.l.b16 %v1177
      %v1210 = vunpack.c.l.b16 %v1178
      %v1211 = vunpack.c.l.b16 %v1179
      %v1212 = vunpack.c.l.b16 %v1180
      %v1213 = vunpack.c.l.b16 %v1181
      %v1214 = vunpack.c.l.b16 %v1182
      %v1215 = vunpack.c.l.b16 %v1183
      %v1216 = vpack.c.b16 %v1201, %v1200
      %v1217 = vpack.c.b16 %v1203, %v1202
      %v1218 = vpack.c.b16 %v1205, %v1204
      %v1219 = vpack.c.b16 %v1207, %v1206
      %v1220 = vpack.c.b16 %v1209, %v1208
      %v1221 = vpack.c.b16 %v1211, %v1210
      %v1222 = vpack.c.b16 %v1213, %v1212
      %v1223 = vpack.c.b16 %v1215, %v1214
      %1232 = vmatprep.subr.bf16.mxu0 0
      %1233 = vmatpush1.bf16.msra.mxu0 %v1216
      %1234 = vmatprep.subr.bf16.mxu0 0
      %1235 = vmatpush1.bf16.msra.mxu0 %v1217
      %1236 = vmatprep.subr.bf16.mxu0 0
      %1237 = vmatpush1.bf16.msra.mxu0 %v1218
      %1238 = vmatprep.subr.bf16.mxu0 0
      %1239 = vmatpush1.bf16.msra.mxu0 %v1219
      %1240 = vmatprep.subr.bf16.mxu0 0
      %1241 = vmatpush1.bf16.msra.mxu0 %v1220
      %1242 = vmatprep.subr.bf16.mxu0 0
      %1243 = vmatpush1.bf16.msra.mxu0 %v1221
      %1244 = vmatprep.subr.bf16.mxu0 0
      %1245 = vmatpush1.bf16.msra.mxu0 %v1222
      %1246 = vmatprep.subr.bf16.mxu0 0
      %1247 = vmatpush1.bf16.msra.mxu0 %v1223
      %1248 = vmatprep.subr.bf16.mxu0 0
      %1249 = vmatpush1.bf16.msra.mxu0 0
      %1250 = vmatprep.subr.bf16.mxu0 0
      %1251 = vmatpush1.bf16.msra.mxu0 0
      %1252 = vmatprep.subr.bf16.mxu0 0
      %1253 = vmatpush1.bf16.msra.mxu0 0
      %1254 = vmatprep.subr.bf16.mxu0 0
      %1255 = vmatpush1.bf16.msra.mxu0 0
      %1256 = vmatprep.subr.bf16.mxu0 0
      %1257 = vmatpush1.bf16.msra.mxu0 0
      %1258 = vmatprep.subr.bf16.mxu0 0
      %1259 = vmatpush1.bf16.msra.mxu0 0
      %1260 = vmatprep.subr.bf16.mxu0 0
      %1261 = vmatpush1.bf16.msra.mxu0 0
      %1262 = vmatprep.subr.bf16.mxu0 0
      %1263 = vmatpush1.bf16.msra.mxu0 0
      %1264 = vmatprep.mubr.bf16.mxu0 0
      %1265 = vmatmul.mubr.bf16.gmra.mrb[0].mxu0 %v1166
      %v1266 = vpop.f32.mrb[0].mxu0
      %v1267 = vadd.f32 0.0, %v1266
      %v1268 = vpop.f32.mrb[0].mxu0
      %v1269 = vpop.f32.mrb[0].mxu0
      %v1270 = vadd.f32 0.0, %v1269
      %v1271 = vpop.f32.mrb[0].mxu0
      %1272 = vdwg.mxu0
      %v1273 = vadd.f32 %v1162, %v1267
      %v1274 = vadd.f32 %v1163, %v1270
      %s1275 = scalar_lea.vmem [#allocation2], 32
      %v1276 = vld [vmem:[%s1275] sm:$0xff]
      %v1277 = vld [vmem:[%s1275 + $0x10] sm:$0xff]
      %v1278 = vpack.c.bf16 %v1277, %v1276
      %s1279 = scalar_lea.vmem %s6, 384
      %v1280 = vld [vmem:[%s1279] sm:$0xf]
      %v1281 = vld [vmem:[%s1279 + $0x4] sm:$0xf]
      %v1282 = vld [vmem:[%s1279 + $0x8] sm:$0xf]
      %v1283 = vld [vmem:[%s1279 + $0xc] sm:$0xf]
      %v1284 = vld [vmem:[%s1279 + $0x10] sm:$0xf]
      %v1285 = vld [vmem:[%s1279 + $0x14] sm:$0xf]
      %v1286 = vld [vmem:[%s1279 + $0x18] sm:$0xf]
      %v1287 = vld [vmem:[%s1279 + $0x1c] sm:$0xf]
      %v1288 = vld [vmem:[%s1279 + $0x20] sm:$0xf]
      %v1289 = vld [vmem:[%s1279 + $0x24] sm:$0xf]
      %v1290 = vld [vmem:[%s1279 + $0x28] sm:$0xf]
      %v1291 = vld [vmem:[%s1279 + $0x2c] sm:$0xf]
      %v1292 = vld [vmem:[%s1279 + $0x30] sm:$0xf]
      %v1293 = vld [vmem:[%s1279 + $0x34] sm:$0xf]
      %v1294 = vld [vmem:[%s1279 + $0x38] sm:$0xf]
      %v1295 = vld [vmem:[%s1279 + $0x3c] sm:$0xf]
      %v1312 = vunpack.c.l.b16 %v1280
      %v1313 = vunpack.c.l.b16 %v1281
      %v1314 = vunpack.c.l.b16 %v1282
      %v1315 = vunpack.c.l.b16 %v1283
      %v1316 = vunpack.c.l.b16 %v1284
      %v1317 = vunpack.c.l.b16 %v1285
      %v1318 = vunpack.c.l.b16 %v1286
      %v1319 = vunpack.c.l.b16 %v1287
      %v1320 = vunpack.c.l.b16 %v1288
      %v1321 = vunpack.c.l.b16 %v1289
      %v1322 = vunpack.c.l.b16 %v1290
      %v1323 = vunpack.c.l.b16 %v1291
      %v1324 = vunpack.c.l.b16 %v1292
      %v1325 = vunpack.c.l.b16 %v1293
      %v1326 = vunpack.c.l.b16 %v1294
      %v1327 = vunpack.c.l.b16 %v1295
      %v1328 = vpack.c.b16 %v1313, %v1312
      %v1329 = vpack.c.b16 %v1315, %v1314
      %v1330 = vpack.c.b16 %v1317, %v1316
      %v1331 = vpack.c.b16 %v1319, %v1318
      %v1332 = vpack.c.b16 %v1321, %v1320
      %v1333 = vpack.c.b16 %v1323, %v1322
      %v1334 = vpack.c.b16 %v1325, %v1324
      %v1335 = vpack.c.b16 %v1327, %v1326
      %1344 = vmatprep.subr.bf16.mxu0 0
      %1345 = vmatpush1.bf16.msra.mxu0 %v1328
      %1346 = vmatprep.subr.bf16.mxu0 0
      %1347 = vmatpush1.bf16.msra.mxu0 %v1329
      %1348 = vmatprep.subr.bf16.mxu0 0
      %1349 = vmatpush1.bf16.msra.mxu0 %v1330
      %1350 = vmatprep.subr.bf16.mxu0 0
      %1351 = vmatpush1.bf16.msra.mxu0 %v1331
      %1352 = vmatprep.subr.bf16.mxu0 0
      %1353 = vmatpush1.bf16.msra.mxu0 %v1332
      %1354 = vmatprep.subr.bf16.mxu0 0
      %1355 = vmatpush1.bf16.msra.mxu0 %v1333
      %1356 = vmatprep.subr.bf16.mxu0 0
      %1357 = vmatpush1.bf16.msra.mxu0 %v1334
      %1358 = vmatprep.subr.bf16.mxu0 0
      %1359 = vmatpush1.bf16.msra.mxu0 %v1335
      %1360 = vmatprep.subr.bf16.mxu0 0
      %1361 = vmatpush1.bf16.msra.mxu0 0
      %1362 = vmatprep.subr.bf16.mxu0 0
      %1363 = vmatpush1.bf16.msra.mxu0 0
      %1364 = vmatprep.subr.bf16.mxu0 0
      %1365 = vmatpush1.bf16.msra.mxu0 0
      %1366 = vmatprep.subr.bf16.mxu0 0
      %1367 = vmatpush1.bf16.msra.mxu0 0
      %1368 = vmatprep.subr.bf16.mxu0 0
      %1369 = vmatpush1.bf16.msra.mxu0 0
      %1370 = vmatprep.subr.bf16.mxu0 0
      %1371 = vmatpush1.bf16.msra.mxu0 0
      %1372 = vmatprep.subr.bf16.mxu0 0
      %1373 = vmatpush1.bf16.msra.mxu0 0
      %1374 = vmatprep.subr.bf16.mxu0 0
      %1375 = vmatpush1.bf16.msra.mxu0 0
      %1376 = vmatprep.mubr.bf16.mxu0 0
      %1377 = vmatmul.mubr.bf16.gmra.mrb[0].mxu0 %v1278
      %v1378 = vpop.f32.mrb[0].mxu0
      %v1379 = vadd.f32 0.0, %v1378
      %v1380 = vpop.f32.mrb[0].mxu0
      %v1381 = vpop.f32.mrb[0].mxu0
      %v1382 = vadd.f32 0.0, %v1381
      %v1383 = vpop.f32.mrb[0].mxu0
      %1384 = vdwg.mxu0
      %v1385 = vadd.f32 %v1273, %v1379
      %v1386 = vadd.f32 %v1274, %v1382
      %v1387 = vld [vmem:[%s1275 + $0x1] sm:$0xff]
      %v1388 = vld [vmem:[%s1275 + $0x11] sm:$0xff]
      %v1389 = vpack.c.bf16 %v1388, %v1387
      %s1390 = scalar_lea.vmem %s6, 448
      %v1391 = vld [vmem:[%s1390] sm:$0xf]
      %v1392 = vld [vmem:[%s1390 + $0x4] sm:$0xf]
      %v1393 = vld [vmem:[%s1390 + $0x8] sm:$0xf]
      %v1394 = vld [vmem:[%s1390 + $0xc] sm:$0xf]
      %v1395 = vld [vmem:[%s1390 + $0x10] sm:$0xf]
      %v1396 = vld [vmem:[%s1390 + $0x14] sm:$0xf]
      %v1397 = vld [vmem:[%s1390 + $0x18] sm:$0xf]
      %v1398 = vld [vmem:[%s1390 + $0x1c] sm:$0xf]
      %v1399 = vld [vmem:[%s1390 + $0x20] sm:$0xf]
      %v1400 = vld [vmem:[%s1390 + $0x24] sm:$0xf]
      %v1401 = vld [vmem:[%s1390 + $0x28] sm:$0xf]
      %v1402 = vld [vmem:[%s1390 + $0x2c] sm:$0xf]
      %v1403 = vld [vmem:[%s1390 + $0x30] sm:$0xf]
      %v1404 = vld [vmem:[%s1390 + $0x34] sm:$0xf]
      %v1405 = vld [vmem:[%s1390 + $0x38] sm:$0xf]
      %v1406 = vld [vmem:[%s1390 + $0x3c] sm:$0xf]
      %v1423 = vunpack.c.l.b16 %v1391
      %v1424 = vunpack.c.l.b16 %v1392
      %v1425 = vunpack.c.l.b16 %v1393
      %v1426 = vunpack.c.l.b16 %v1394
      %v1427 = vunpack.c.l.b16 %v1395
      %v1428 = vunpack.c.l.b16 %v1396
      %v1429 = vunpack.c.l.b16 %v1397
      %v1430 = vunpack.c.l.b16 %v1398
      %v1431 = vunpack.c.l.b16 %v1399
      %v1432 = vunpack.c.l.b16 %v1400
      %v1433 = vunpack.c.l.b16 %v1401
      %v1434 = vunpack.c.l.b16 %v1402
      %v1435 = vunpack.c.l.b16 %v1403
      %v1436 = vunpack.c.l.b16 %v1404
      %v1437 = vunpack.c.l.b16 %v1405
      %v1438 = vunpack.c.l.b16 %v1406
      %v1439 = vpack.c.b16 %v1424, %v1423
      %v1440 = vpack.c.b16 %v1426, %v1425
      %v1441 = vpack.c.b16 %v1428, %v1427
      %v1442 = vpack.c.b16 %v1430, %v1429
      %v1443 = vpack.c.b16 %v1432, %v1431
      %v1444 = vpack.c.b16 %v1434, %v1433
      %v1445 = vpack.c.b16 %v1436, %v1435
      %v1446 = vpack.c.b16 %v1438, %v1437
      %1455 = vmatprep.subr.bf16.mxu0 0
      %1456 = vmatpush1.bf16.msra.mxu0 %v1439
      %1457 = vmatprep.subr.bf16.mxu0 0
      %1458 = vmatpush1.bf16.msra.mxu0 %v1440
      %1459 = vmatprep.subr.bf16.mxu0 0
      %1460 = vmatpush1.bf16.msra.mxu0 %v1441
      %1461 = vmatprep.subr.bf16.mxu0 0
      %1462 = vmatpush1.bf16.msra.mxu0 %v1442
      %1463 = vmatprep.subr.bf16.mxu0 0
      %1464 = vmatpush1.bf16.msra.mxu0 %v1443
      %1465 = vmatprep.subr.bf16.mxu0 0
      %1466 = vmatpush1.bf16.msra.mxu0 %v1444
      %1467 = vmatprep.subr.bf16.mxu0 0
      %1468 = vmatpush1.bf16.msra.mxu0 %v1445
      %1469 = vmatprep.subr.bf16.mxu0 0
      %1470 = vmatpush1.bf16.msra.mxu0 %v1446
      %1471 = vmatprep.subr.bf16.mxu0 0
      %1472 = vmatpush1.bf16.msra.mxu0 0
      %1473 = vmatprep.subr.bf16.mxu0 0
      %1474 = vmatpush1.bf16.msra.mxu0 0
      %1475 = vmatprep.subr.bf16.mxu0 0
      %1476 = vmatpush1.bf16.msra.mxu0 0
      %1477 = vmatprep.subr.bf16.mxu0 0
      %1478 = vmatpush1.bf16.msra.mxu0 0
      %1479 = vmatprep.subr.bf16.mxu0 0
      %1480 = vmatpush1.bf16.msra.mxu0 0
      %1481 = vmatprep.subr.bf16.mxu0 0
      %1482 = vmatpush1.bf16.msra.mxu0 0
      %1483 = vmatprep.subr.bf16.mxu0 0
      %1484 = vmatpush1.bf16.msra.mxu0 0
      %1485 = vmatprep.subr.bf16.mxu0 0
      %1486 = vmatpush1.bf16.msra.mxu0 0
      %1487 = vmatprep.mubr.bf16.mxu0 0
      %1488 = vmatmul.mubr.bf16.gmra.mrb[0].mxu0 %v1389
      %v1489 = vpop.f32.mrb[0].mxu0
      %v1490 = vadd.f32 0.0, %v1489
      %v1491 = vpop.f32.mrb[0].mxu0
      %v1492 = vpop.f32.mrb[0].mxu0
      %v1493 = vadd.f32 0.0, %v1492
      %v1494 = vpop.f32.mrb[0].mxu0
      %1495 = vdwg.mxu0
      %v1496 = vadd.f32 %v1385, %v1490
      %v1497 = vadd.f32 %v1386, %v1493
      %v1498 = vld [vmem:[%s1275 + $0x2] sm:$0xff]
      %v1499 = vld [vmem:[%s1275 + $0x12] sm:$0xff]
      %v1500 = vpack.c.bf16 %v1499, %v1498
      %s1501 = scalar_lea.vmem %s6, 512
      %v1502 = vld [vmem:[%s1501] sm:$0xf]
      %v1503 = vld [vmem:[%s1501 + $0x4] sm:$0xf]
      %v1504 = vld [vmem:[%s1501 + $0x8] sm:$0xf]
      %v1505 = vld [vmem:[%s1501 + $0xc] sm:$0xf]
      %v1506 = vld [vmem:[%s1501 + $0x10] sm:$0xf]
      %v1507 = vld [vmem:[%s1501 + $0x14] sm:$0xf]
      %v1508 = vld [vmem:[%s1501 + $0x18] sm:$0xf]
      %v1509 = vld [vmem:[%s1501 + $0x1c] sm:$0xf]
      %v1510 = vld [vmem:[%s1501 + $0x20] sm:$0xf]
      %v1511 = vld [vmem:[%s1501 + $0x24] sm:$0xf]
      %v1512 = vld [vmem:[%s1501 + $0x28] sm:$0xf]
      %v1513 = vld [vmem:[%s1501 + $0x2c] sm:$0xf]
      %v1514 = vld [vmem:[%s1501 + $0x30] sm:$0xf]
      %v1515 = vld [vmem:[%s1501 + $0x34] sm:$0xf]
      %v1516 = vld [vmem:[%s1501 + $0x38] sm:$0xf]
      %v1517 = vld [vmem:[%s1501 + $0x3c] sm:$0xf]
      %v1534 = vunpack.c.l.b16 %v1502
      %v1535 = vunpack.c.l.b16 %v1503
      %v1536 = vunpack.c.l.b16 %v1504
      %v1537 = vunpack.c.l.b16 %v1505
      %v1538 = vunpack.c.l.b16 %v1506
      %v1539 = vunpack.c.l.b16 %v1507
      %v1540 = vunpack.c.l.b16 %v1508
      %v1541 = vunpack.c.l.b16 %v1509
      %v1542 = vunpack.c.l.b16 %v1510
      %v1543 = vunpack.c.l.b16 %v1511
      %v1544 = vunpack.c.l.b16 %v1512
      %v1545 = vunpack.c.l.b16 %v1513
      %v1546 = vunpack.c.l.b16 %v1514
      %v1547 = vunpack.c.l.b16 %v1515
      %v1548 = vunpack.c.l.b16 %v1516
      %v1549 = vunpack.c.l.b16 %v1517
      %v1550 = vpack.c.b16 %v1535, %v1534
      %v1551 = vpack.c.b16 %v1537, %v1536
      %v1552 = vpack.c.b16 %v1539, %v1538
      %v1553 = vpack.c.b16 %v1541, %v1540
      %v1554 = vpack.c.b16 %v1543, %v1542
      %v1555 = vpack.c.b16 %v1545, %v1544
      %v1556 = vpack.c.b16 %v1547, %v1546
      %v1557 = vpack.c.b16 %v1549, %v1548
      %1566 = vmatprep.subr.bf16.mxu0 0
      %1567 = vmatpush1.bf16.msra.mxu0 %v1550
      %1568 = vmatprep.subr.bf16.mxu0 0
      %1569 = vmatpush1.bf16.msra.mxu0 %v1551
      %1570 = vmatprep.subr.bf16.mxu0 0
      %1571 = vmatpush1.bf16.msra.mxu0 %v1552
      %1572 = vmatprep.subr.bf16.mxu0 0
      %1573 = vmatpush1.bf16.msra.mxu0 %v1553
      %1574 = vmatprep.subr.bf16.mxu0 0
      %1575 = vmatpush1.bf16.msra.mxu0 %v1554
      %1576 = vmatprep.subr.bf16.mxu0 0
      %1577 = vmatpush1.bf16.msra.mxu0 %v1555
      %1578 = vmatprep.subr.bf16.mxu0 0
      %1579 = vmatpush1.bf16.msra.mxu0 %v1556
      %1580 = vmatprep.subr.bf16.mxu0 0
      %1581 = vmatpush1.bf16.msra.mxu0 %v1557
      %1582 = vmatprep.subr.bf16.mxu0 0
      %1583 = vmatpush1.bf16.msra.mxu0 0
      %1584 = vmatprep.subr.bf16.mxu0 0
      %1585 = vmatpush1.bf16.msra.mxu0 0
      %1586 = vmatprep.subr.bf16.mxu0 0
      %1587 = vmatpush1.bf16.msra.mxu0 0
      %1588 = vmatprep.subr.bf16.mxu0 0
      %1589 = vmatpush1.bf16.msra.mxu0 0
      %1590 = vmatprep.subr.bf16.mxu0 0
      %1591 = vmatpush1.bf16.msra.mxu0 0
      %1592 = vmatprep.subr.bf16.mxu0 0
      %1593 = vmatpush1.bf16.msra.mxu0 0
      %1594 = vmatprep.subr.bf16.mxu0 0
      %1595 = vmatpush1.bf16.msra.mxu0 0
      %1596 = vmatprep.subr.bf16.mxu0 0
      %1597 = vmatpush1.bf16.msra.mxu0 0
      %1598 = vmatprep.mubr.bf16.mxu0 0
      %1599 = vmatmul.mubr.bf16.gmra.mrb[0].mxu0 %v1500
      %v1600 = vpop.f32.mrb[0].mxu0
      %v1601 = vadd.f32 0.0, %v1600
      %v1602 = vpop.f32.mrb[0].mxu0
      %v1603 = vpop.f32.mrb[0].mxu0
      %v1604 = vadd.f32 0.0, %v1603
      %v1605 = vpop.f32.mrb[0].mxu0
      %1606 = vdwg.mxu0
      %v1607 = vadd.f32 %v1496, %v1601
      %v1608 = vadd.f32 %v1497, %v1604
      %1609 = vst [vmem:[%s347] sm:$0xff] %v1607
      %1610 = vst [vmem:[%s347 + $0x8] sm:$0xff] %v1608
      %s1611 = smul.u32 2, %s24
      %p1612 = scmp.lt.s32.totalorder %s23, 1
      %s1613 = scalar_select %p1612, %s23, 1
      %p1614 = scmp.lt.s32.totalorder %s1611, 7
      %s1615 = scalar_select %p1614, %s1611, 7
      %s1616 = smul.addr %s1613, 8
      %s1617 = sadd.s32 %s1615, %s1616
      %s1618 = smul.addr %s1617, 8
      %s1619 = scalar_lea.vmem %s8, %s1618
      // Predicated region
      $region53: #{basic_block_forward.3} parent=51 // pred_check
        %p1620 = pneg %p229
      $region54: #{basic_block_forward.3} parent=51 // pred_check_branch
        %1622 = sbr.rel (%p1620) target = $region56
      $region55: #{basic_block_forward.3} parent=51 // pred_region
        %s1623 = smul.u32 2, %s24
      $region56: #{basic_block_forward.3} parent=51 // pred_fallthru
        _
    $region52: #{basic_block_forward.3} parent=5 // pred_fallthru
      _
    %p1624 = scmp.le.s32.totalorder 2, %s14
    // Predicated region
    $region57: #{basic_block_forward.3} parent=5 // pred_check
      %p1625 = pneg %p1624
    $region58: #{basic_block_forward.3} parent=5 // pred_check_branch
      %1627 = sbr.rel (%p1625) target = $region60
    $region59: #{basic_block_forward.3} parent=5 // pred_region
      %s1628 = ssub.s32 %s14, 2
      // Predicated region
      $region61: #{basic_block_forward.3} parent=59 // pred_check
        %p1629 = pneg %p235
      $region62: #{basic_block_forward.3} parent=59 // pred_check_branch
        %1631 = sbr.rel (%p1629) target = $region64
      $region63: #{basic_block_forward.3} parent=59 // pred_region
        %s1632 = smul.u32 2, %s26
        %p1633 = scmp.lt.s32.totalorder %s25, 1
        %s1634 = scalar_select %p1633, %s25, 1
        %p1635 = scmp.lt.s32.totalorder %s1632, 7
        %s1636 = scalar_select %p1635, %s1632, 7
        %s1637 = smul.addr %s1634, 8
        %s1638 = sadd.s32 %s1636, %s1637
        %s1639 = smul.addr %s1638, 8
        %s1640 = scalar_lea.vmem %s8, %s1639
      $region64: #{basic_block_forward.3} parent=59 // pred_fallthru
        _
    $region60: #{basic_block_forward.3} parent=5 // pred_fallthru
      _
  $region6: #{basic_block_forward.3} parent=0 // loop_footer
    %s18 = sadd.s32 1, %s14
  $region7: #{basic_block_forward.3} parent=0 // loop_footer_branch
    %13 = sbr.rel target = $region3
  $region8: #{basic_block_forward.3} parent=0 // loop_exit
    _

</llo_original>
